<compile_context>
chip_gen: v5e
topology: v5e:2x2
jax: 0.10.0
libtpu: 0.0.40
codegen_flags: <defaults>
</compile_context>

<pallas_src>
import functools

import jax
import jax.numpy as jnp
from jax.experimental import pallas as pl
from jax.experimental.pallas import tpu as pltpu

# Hyper-parameter choices (from the lists in the original script).
N_EMBD = 32       # C
BLOCK_SIZE = 8    # T (max sequence length; also the seq len used here)
HEAD_SIZE = 16    # H


def _cdiv(a, b):
    return (a + b - 1) // b


def _round_up(x, m):
    return _cdiv(x, m) * m


def head_kernel(x_ref, w_ref, o_ref):
    """Single causal attention head on one batch tile (batch on the lane axis).

    x_ref: (T, C, Bt)   transposed input tile
    w_ref: (3H, C)      fused [Wk; Wq; Wv] in (out_features, in_features) orientation
    o_ref: (T, H, Bt)   transposed output tile
    """
    T, C, Bt = x_ref.shape
    H = w_ref.shape[0] // 3
    scale = C ** -0.5   # original module scales by n_embd**-0.5 (not head_size**-0.5)

    w = w_ref[...]      # (3H, C), loaded once (kept resident across the grid)

    # ---- fused K/Q/V projection ------------------------------------------
    # One small MXU matmul per timestep: (3H, C) @ (C, Bt) -> (3H, Bt).
    # Batch sits on the MXU N / vreg lane dimension; k/q/v are sublane-aligned
    # row slices (offsets 0, 16, 32), so no relayouts are needed downstream.
    k, q, v = [], [], []
    for t in range(T):
        kqv_t = jnp.dot(w, x_ref[t], preferred_element_type=jnp.float32)  # (3H, Bt)
        k.append(kqv_t[0 * H:1 * H])   # (H, Bt)
        q.append(kqv_t[1 * H:2 * H])   # (H, Bt)
        v.append(kqv_t[2 * H:3 * H])   # (H, Bt)

    # ---- causal attention, entirely on the VPU (lanes = batch) ------------
    # T is tiny (8); all loops unroll at trace time.  Future (tk > tq) terms
    # are never computed, which equals masked_fill(-inf) + softmax exactly.
    for tq in range(T):
        # scores s[tk] for tk <= tq, each (1, Bt)
        s = [jnp.sum(q[tq] * k[tk], axis=0, keepdims=True) * scale
             for tk in range(tq + 1)]
        m = functools.reduce(jnp.maximum, s)                      # (1, Bt) row max
        e = [jnp.exp(si - m) for si in s]                         # EUP
        denom = functools.reduce(jnp.add, e)                      # (1, Bt)
        # un-normalized weighted sum of values; normalize once at the end
        acc = functools.reduce(jnp.add,
                               [e[tk] * v[tk] for tk in range(tq + 1)])  # (H, Bt)
        out_t = acc * (1.0 / denom)                               # exact softmax
        # dropout == identity (eval mode)
        o_ref[tq] = out_t.astype(o_ref.dtype)                     # lane-dense store


def _choose_batch_tiling(B, batch_tile):
    """Pick (Bt, Bpad): lane-legal tiles with minimal padding; >=2 tiles when large."""
    if B % 128 != 0 and B <= 384:
        # Small / awkward batch: a single block equal to the full batch is always
        # legal (block dim == array dim) and has zero padding.
        return B, B
    Bmin = _round_up(B, 128)
    min_tiles = 2 if Bmin >= 256 else 1          # feed both TensorCores on v7x
    lo = max(min_tiles, _cdiv(Bmin, batch_tile))
    best_bt, best_bpad = None, None
    for n in range(lo, lo + 4):                  # small search to minimize padding
        bt = max(128, _round_up(_cdiv(Bmin, n), 128))
        bpad = _round_up(B, bt)
        if best_bpad is None or bpad < best_bpad:
            best_bt, best_bpad = bt, bpad
    return best_bt, best_bpad


def head_forward(x, w_key, w_query, w_value, *, batch_tile=512):
    """x: (B, T, C) float32; w_*: (C, H) float32 (transposed nn.Linear weights)."""
    B, T, C = x.shape
    H = w_key.shape[1]

    # Fused, re-transposed projection weights: (3H, C) = [Wk; Wq; Wv] rows.
    w_kqv = jnp.concatenate([w_key.T, w_query.T, w_value.T], axis=0)

    # Batch-on-lanes layout (wrapper-side layout plumbing is cheap).
    x_t = jnp.transpose(x, (1, 2, 0))            # (T, C, B)

    Bt, Bpad = _choose_batch_tiling(B, batch_tile)
    if Bpad != B:
        x_t = jnp.pad(x_t, ((0, 0), (0, 0), (0, Bpad - B)))

    out_t = pl.pallas_call(
        head_kernel,
        out_shape=jax.ShapeDtypeStruct((T, H, Bpad), x.dtype),
        grid_spec=pltpu.PrefetchScalarGridSpec(
            num_scalar_prefetch=0,
            grid=(Bpad // Bt,),
            in_specs=[
                pl.BlockSpec((T, C, Bt), lambda b: (0, 0, b)),
                pl.BlockSpec((3 * H, C), lambda b: (0, 0)),   # weights stay resident
            ],
            out_specs=pl.BlockSpec((T, H, Bt), lambda b: (0, 0, b)),
        ),
        compiler_params=pltpu.CompilerParams(
            dimension_semantics=("parallel",),   # batch tiles are independent
        ),
    )(x_t, w_kqv)

    # (T, H, Bpad) -> (B, T, H)
    return jnp.transpose(out_t, (2, 0, 1))[:B]


def head_reference(x, w_key, w_query, w_value):
    """Pure-JAX reference matching the PyTorch forward exactly."""
    B, T, C = x.shape
    k = x @ w_key
    q = x @ w_query
    v = x @ w_value
    wei = (q @ jnp.swapaxes(k, -2, -1)) * (C ** -0.5)
    tril = jnp.tril(jnp.ones((T, T), dtype=bool))
    wei = jnp.where(tril, wei, -jnp.inf)
    wei = jax.nn.softmax(wei, axis=-1)
    return wei @ v


if __name__ == "__main__":
    key = jax.random.PRNGKey(0)
    kx, kk, kq, kv = jax.random.split(key, 4)

    T, C, H = BLOCK_SIZE, N_EMBD, HEAD_SIZE
    B = 64

    x = jax.random.normal(kx, (B, T, C), dtype=jnp.float32)
    scale = 1.0 / (C ** 0.5)
    w_key = jax.random.uniform(kk, (C, H), minval=-scale, maxval=scale, dtype=jnp.float32)
    w_query = jax.random.uniform(kq, (C, H), minval=-scale, maxval=scale, dtype=jnp.float32)
    w_value = jax.random.uniform(kv, (C, H), minval=-scale, maxval=scale, dtype=jnp.float32)

    with jax.default_matmul_precision("float32"):
        # Primary case.
        out = jax.block_until_ready(head_forward(x, w_key, w_query, w_value))
        ref = head_reference(x, w_key, w_query, w_value)
        assert out.shape == (B, T, H), out.shape
        assert jnp.allclose(out, ref, atol=2e-3, rtol=2e-3), "mismatch vs reference (B=64)"

        # Tiny batch (single full-batch block, lane-masked path).
        out2 = jax.block_until_ready(head_forward(x[:2], w_key, w_query, w_value))
        ref2 = head_reference(x[:2], w_key, w_query, w_value)
        assert out2.shape == (2, T, H), out2.shape
        assert jnp.allclose(out2, ref2, atol=2e-3, rtol=2e-3), "mismatch vs reference (B=2)"

        # Larger, awkward batch (multi-tile grid + batch padding path).
        B3 = 389
        x3 = jax.random.normal(jax.random.PRNGKey(1), (B3, T, C), dtype=jnp.float32)
        out3 = jax.block_until_ready(head_forward(x3, w_key, w_query, w_value))
        ref3 = head_reference(x3, w_key, w_query, w_value)
        assert out3.shape == (B3, T, H), out3.shape
        assert jnp.allclose(out3, ref3, atol=2e-3, rtol=2e-3), "mismatch vs reference (B=389)"

    print("KERNEL_OK")
</pallas_src>

<mosaic_0001>
module attributes {stable_mosaic.version = 11 : i64} {
  func.func @head_kernel(%arg0: i32, %arg1: memref<8x32x64xf32, #tpu.memory_space<vmem>>, %arg2: memref<48x32xf32, #tpu.memory_space<vmem>>, %arg3: memref<8x16x64xf32, #tpu.memory_space<vmem>>) attributes {dimension_semantics = [#tpu.dimension_semantics<parallel>], iteration_bounds = array<i64: 1>, scalar_prefetch = 0 : i64, scratch_operands = 0 : i64, tpu.core_type = #tpu.core_type<tc>, window_params = [{transform_indices = @transform_0, window_bounds = array<i64: 8, 32, 64>}, {pipeline_mode = #tpu.pipeline_mode<synchronous>, transform_indices = @transform_1, window_bounds = array<i64: 48, 32>}, {transform_indices = @transform_2, window_bounds = array<i64: 8, 16, 64>}]} {
    %c0 = arith.constant 0 : index
    %c0_0 = arith.constant 0 : index
    %0 = vector.load %arg2[%c0, %c0_0] : memref<48x32xf32, #tpu.memory_space<vmem>>, vector<48x32xf32>
    %c0_1 = arith.constant 0 : index
    %c0_2 = arith.constant 0 : index
    %c0_3 = arith.constant 0 : index
    %1 = vector.load %arg1[%c0_1, %c0_2, %c0_3] : memref<8x32x64xf32, #tpu.memory_space<vmem>>, vector<1x32x64xf32>
    %2 = vector.shape_cast %1 : vector<1x32x64xf32> to vector<32x64xf32>
    %cst = arith.constant dense<0.000000e+00> : vector<48x64xf32>
    %3 = tpu.matmul %0, %2, %cst {dimension_numbers = #tpu.dot_dimension_numbers<[1], [0], [0], [1], [0, 0, 1, 1], [], []>, precision = #tpu.contract_precision<fp32>} : vector<48x32xf32>, vector<32x64xf32>, vector<48x64xf32> -> vector<48x64xf32>
    %4 = vector.extract_strided_slice %3 {offsets = [0, 0], sizes = [16, 64], strides = [1, 1]} : vector<48x64xf32> to vector<16x64xf32>
    %5 = vector.extract_strided_slice %3 {offsets = [16, 0], sizes = [16, 64], strides = [1, 1]} : vector<48x64xf32> to vector<16x64xf32>
    %6 = vector.extract_strided_slice %3 {offsets = [32, 0], sizes = [16, 64], strides = [1, 1]} : vector<48x64xf32> to vector<16x64xf32>
    %c1 = arith.constant 1 : index
    %c0_4 = arith.constant 0 : index
    %c0_5 = arith.constant 0 : index
    %7 = vector.load %arg1[%c1, %c0_4, %c0_5] : memref<8x32x64xf32, #tpu.memory_space<vmem>>, vector<1x32x64xf32>
    %8 = vector.shape_cast %7 : vector<1x32x64xf32> to vector<32x64xf32>
    %cst_6 = arith.constant dense<0.000000e+00> : vector<48x64xf32>
    %9 = tpu.matmul %0, %8, %cst_6 {dimension_numbers = #tpu.dot_dimension_numbers<[1], [0], [0], [1], [0, 0, 1, 1], [], []>, precision = #tpu.contract_precision<fp32>} : vector<48x32xf32>, vector<32x64xf32>, vector<48x64xf32> -> vector<48x64xf32>
    %10 = vector.extract_strided_slice %9 {offsets = [0, 0], sizes = [16, 64], strides = [1, 1]} : vector<48x64xf32> to vector<16x64xf32>
    %11 = vector.extract_strided_slice %9 {offsets = [16, 0], sizes = [16, 64], strides = [1, 1]} : vector<48x64xf32> to vector<16x64xf32>
    %12 = vector.extract_strided_slice %9 {offsets = [32, 0], sizes = [16, 64], strides = [1, 1]} : vector<48x64xf32> to vector<16x64xf32>
    %c2 = arith.constant 2 : index
    %c0_7 = arith.constant 0 : index
    %c0_8 = arith.constant 0 : index
    %13 = vector.load %arg1[%c2, %c0_7, %c0_8] : memref<8x32x64xf32, #tpu.memory_space<vmem>>, vector<1x32x64xf32>
    %14 = vector.shape_cast %13 : vector<1x32x64xf32> to vector<32x64xf32>
    %cst_9 = arith.constant dense<0.000000e+00> : vector<48x64xf32>
    %15 = tpu.matmul %0, %14, %cst_9 {dimension_numbers = #tpu.dot_dimension_numbers<[1], [0], [0], [1], [0, 0, 1, 1], [], []>, precision = #tpu.contract_precision<fp32>} : vector<48x32xf32>, vector<32x64xf32>, vector<48x64xf32> -> vector<48x64xf32>
    %16 = vector.extract_strided_slice %15 {offsets = [0, 0], sizes = [16, 64], strides = [1, 1]} : vector<48x64xf32> to vector<16x64xf32>
    %17 = vector.extract_strided_slice %15 {offsets = [16, 0], sizes = [16, 64], strides = [1, 1]} : vector<48x64xf32> to vector<16x64xf32>
    %18 = vector.extract_strided_slice %15 {offsets = [32, 0], sizes = [16, 64], strides = [1, 1]} : vector<48x64xf32> to vector<16x64xf32>
    %c3 = arith.constant 3 : index
    %c0_10 = arith.constant 0 : index
    %c0_11 = arith.constant 0 : index
    %19 = vector.load %arg1[%c3, %c0_10, %c0_11] : memref<8x32x64xf32, #tpu.memory_space<vmem>>, vector<1x32x64xf32>
    %20 = vector.shape_cast %19 : vector<1x32x64xf32> to vector<32x64xf32>
    %cst_12 = arith.constant dense<0.000000e+00> : vector<48x64xf32>
    %21 = tpu.matmul %0, %20, %cst_12 {dimension_numbers = #tpu.dot_dimension_numbers<[1], [0], [0], [1], [0, 0, 1, 1], [], []>, precision = #tpu.contract_precision<fp32>} : vector<48x32xf32>, vector<32x64xf32>, vector<48x64xf32> -> vector<48x64xf32>
    %22 = vector.extract_strided_slice %21 {offsets = [0, 0], sizes = [16, 64], strides = [1, 1]} : vector<48x64xf32> to vector<16x64xf32>
    %23 = vector.extract_strided_slice %21 {offsets = [16, 0], sizes = [16, 64], strides = [1, 1]} : vector<48x64xf32> to vector<16x64xf32>
    %24 = vector.extract_strided_slice %21 {offsets = [32, 0], sizes = [16, 64], strides = [1, 1]} : vector<48x64xf32> to vector<16x64xf32>
    %c4 = arith.constant 4 : index
    %c0_13 = arith.constant 0 : index
    %c0_14 = arith.constant 0 : index
    %25 = vector.load %arg1[%c4, %c0_13, %c0_14] : memref<8x32x64xf32, #tpu.memory_space<vmem>>, vector<1x32x64xf32>
    %26 = vector.shape_cast %25 : vector<1x32x64xf32> to vector<32x64xf32>
    %cst_15 = arith.constant dense<0.000000e+00> : vector<48x64xf32>
    %27 = tpu.matmul %0, %26, %cst_15 {dimension_numbers = #tpu.dot_dimension_numbers<[1], [0], [0], [1], [0, 0, 1, 1], [], []>, precision = #tpu.contract_precision<fp32>} : vector<48x32xf32>, vector<32x64xf32>, vector<48x64xf32> -> vector<48x64xf32>
    %28 = vector.extract_strided_slice %27 {offsets = [0, 0], sizes = [16, 64], strides = [1, 1]} : vector<48x64xf32> to vector<16x64xf32>
    %29 = vector.extract_strided_slice %27 {offsets = [16, 0], sizes = [16, 64], strides = [1, 1]} : vector<48x64xf32> to vector<16x64xf32>
    %30 = vector.extract_strided_slice %27 {offsets = [32, 0], sizes = [16, 64], strides = [1, 1]} : vector<48x64xf32> to vector<16x64xf32>
    %c5 = arith.constant 5 : index
    %c0_16 = arith.constant 0 : index
    %c0_17 = arith.constant 0 : index
    %31 = vector.load %arg1[%c5, %c0_16, %c0_17] : memref<8x32x64xf32, #tpu.memory_space<vmem>>, vector<1x32x64xf32>
    %32 = vector.shape_cast %31 : vector<1x32x64xf32> to vector<32x64xf32>
    %cst_18 = arith.constant dense<0.000000e+00> : vector<48x64xf32>
    %33 = tpu.matmul %0, %32, %cst_18 {dimension_numbers = #tpu.dot_dimension_numbers<[1], [0], [0], [1], [0, 0, 1, 1], [], []>, precision = #tpu.contract_precision<fp32>} : vector<48x32xf32>, vector<32x64xf32>, vector<48x64xf32> -> vector<48x64xf32>
    %34 = vector.extract_strided_slice %33 {offsets = [0, 0], sizes = [16, 64], strides = [1, 1]} : vector<48x64xf32> to vector<16x64xf32>
    %35 = vector.extract_strided_slice %33 {offsets = [16, 0], sizes = [16, 64], strides = [1, 1]} : vector<48x64xf32> to vector<16x64xf32>
    %36 = vector.extract_strided_slice %33 {offsets = [32, 0], sizes = [16, 64], strides = [1, 1]} : vector<48x64xf32> to vector<16x64xf32>
    %c6 = arith.constant 6 : index
    %c0_19 = arith.constant 0 : index
    %c0_20 = arith.constant 0 : index
    %37 = vector.load %arg1[%c6, %c0_19, %c0_20] : memref<8x32x64xf32, #tpu.memory_space<vmem>>, vector<1x32x64xf32>
    %38 = vector.shape_cast %37 : vector<1x32x64xf32> to vector<32x64xf32>
    %cst_21 = arith.constant dense<0.000000e+00> : vector<48x64xf32>
    %39 = tpu.matmul %0, %38, %cst_21 {dimension_numbers = #tpu.dot_dimension_numbers<[1], [0], [0], [1], [0, 0, 1, 1], [], []>, precision = #tpu.contract_precision<fp32>} : vector<48x32xf32>, vector<32x64xf32>, vector<48x64xf32> -> vector<48x64xf32>
    %40 = vector.extract_strided_slice %39 {offsets = [0, 0], sizes = [16, 64], strides = [1, 1]} : vector<48x64xf32> to vector<16x64xf32>
    %41 = vector.extract_strided_slice %39 {offsets = [16, 0], sizes = [16, 64], strides = [1, 1]} : vector<48x64xf32> to vector<16x64xf32>
    %42 = vector.extract_strided_slice %39 {offsets = [32, 0], sizes = [16, 64], strides = [1, 1]} : vector<48x64xf32> to vector<16x64xf32>
    %c7 = arith.constant 7 : index
    %c0_22 = arith.constant 0 : index
    %c0_23 = arith.constant 0 : index
    %43 = vector.load %arg1[%c7, %c0_22, %c0_23] : memref<8x32x64xf32, #tpu.memory_space<vmem>>, vector<1x32x64xf32>
    %44 = vector.shape_cast %43 : vector<1x32x64xf32> to vector<32x64xf32>
    %cst_24 = arith.constant dense<0.000000e+00> : vector<48x64xf32>
    %45 = tpu.matmul %0, %44, %cst_24 {dimension_numbers = #tpu.dot_dimension_numbers<[1], [0], [0], [1], [0, 0, 1, 1], [], []>, precision = #tpu.contract_precision<fp32>} : vector<48x32xf32>, vector<32x64xf32>, vector<48x64xf32> -> vector<48x64xf32>
    %46 = vector.extract_strided_slice %45 {offsets = [0, 0], sizes = [16, 64], strides = [1, 1]} : vector<48x64xf32> to vector<16x64xf32>
    %47 = vector.extract_strided_slice %45 {offsets = [16, 0], sizes = [16, 64], strides = [1, 1]} : vector<48x64xf32> to vector<16x64xf32>
    %48 = vector.extract_strided_slice %45 {offsets = [32, 0], sizes = [16, 64], strides = [1, 1]} : vector<48x64xf32> to vector<16x64xf32>
    %49 = arith.mulf %5, %4 : vector<16x64xf32>
    %cst_25 = arith.constant dense<0.000000e+00> : vector<64xf32>
    %50 = vector.multi_reduction <add>, %49, %cst_25 [0] : vector<16x64xf32> to vector<64xf32>
    %51 = vector.shape_cast %50 : vector<64xf32> to vector<1x64xf32>
    %cst_26 = arith.constant 0.176776692 : f32
    %52 = vector.broadcast %cst_26 : f32 to vector<1x64xf32>
    %53 = arith.mulf %51, %52 : vector<1x64xf32>
    %54 = arith.subf %53, %53 : vector<1x64xf32>
    %55 = math.exp %54 : vector<1x64xf32>
    %56 = vector.broadcast %55 : vector<1x64xf32> to vector<16x64xf32>
    %57 = arith.mulf %56, %6 : vector<16x64xf32>
    %cst_27 = arith.constant 1.000000e+00 : f32
    %58 = vector.broadcast %cst_27 : f32 to vector<1x64xf32>
    %59 = arith.divf %58, %55 : vector<1x64xf32>
    %60 = vector.broadcast %59 : vector<1x64xf32> to vector<16x64xf32>
    %61 = arith.mulf %57, %60 : vector<16x64xf32>
    %c0_28 = arith.constant 0 : index
    %c0_29 = arith.constant 0 : index
    %c0_30 = arith.constant 0 : index
    %62 = vector.load %arg3[%c0_28, %c0_29, %c0_30] : memref<8x16x64xf32, #tpu.memory_space<vmem>>, vector<1x16x64xf32>
    %63 = vector.shape_cast %62 : vector<1x16x64xf32> to vector<16x64xf32>
    %64 = vector.shape_cast %61 : vector<16x64xf32> to vector<1x16x64xf32>
    tpu.vector_store %arg3[%c0_28, %c0_29, %c0_30], %64 {strides = array<i32>} : memref<8x16x64xf32, #tpu.memory_space<vmem>>, vector<1x16x64xf32>,
    %65 = arith.mulf %11, %4 : vector<16x64xf32>
    %cst_31 = arith.constant dense<0.000000e+00> : vector<64xf32>
    %66 = vector.multi_reduction <add>, %65, %cst_31 [0] : vector<16x64xf32> to vector<64xf32>
    %67 = vector.shape_cast %66 : vector<64xf32> to vector<1x64xf32>
    %cst_32 = arith.constant 0.176776692 : f32
    %68 = vector.broadcast %cst_32 : f32 to vector<1x64xf32>
    %69 = arith.mulf %67, %68 : vector<1x64xf32>
    %70 = arith.mulf %11, %10 : vector<16x64xf32>
    %cst_33 = arith.constant dense<0.000000e+00> : vector<64xf32>
    %71 = vector.multi_reduction <add>, %70, %cst_33 [0] : vector<16x64xf32> to vector<64xf32>
    %72 = vector.shape_cast %71 : vector<64xf32> to vector<1x64xf32>
    %cst_34 = arith.constant 0.176776692 : f32
    %73 = vector.broadcast %cst_34 : f32 to vector<1x64xf32>
    %74 = arith.mulf %72, %73 : vector<1x64xf32>
    %75 = arith.maximumf %69, %74 : vector<1x64xf32>
    %76 = arith.subf %69, %75 : vector<1x64xf32>
    %77 = math.exp %76 : vector<1x64xf32>
    %78 = arith.subf %74, %75 : vector<1x64xf32>
    %79 = math.exp %78 : vector<1x64xf32>
    %80 = arith.addf %77, %79 : vector<1x64xf32>
    %81 = vector.broadcast %77 : vector<1x64xf32> to vector<16x64xf32>
    %82 = arith.mulf %81, %6 : vector<16x64xf32>
    %83 = vector.broadcast %79 : vector<1x64xf32> to vector<16x64xf32>
    %84 = arith.mulf %83, %12 : vector<16x64xf32>
    %85 = arith.addf %82, %84 : vector<16x64xf32>
    %cst_35 = arith.constant 1.000000e+00 : f32
    %86 = vector.broadcast %cst_35 : f32 to vector<1x64xf32>
    %87 = arith.divf %86, %80 : vector<1x64xf32>
    %88 = vector.broadcast %87 : vector<1x64xf32> to vector<16x64xf32>
    %89 = arith.mulf %85, %88 : vector<16x64xf32>
    %c1_36 = arith.constant 1 : index
    %c0_37 = arith.constant 0 : index
    %c0_38 = arith.constant 0 : index
    %90 = vector.load %arg3[%c1_36, %c0_37, %c0_38] : memref<8x16x64xf32, #tpu.memory_space<vmem>>, vector<1x16x64xf32>
    %91 = vector.shape_cast %90 : vector<1x16x64xf32> to vector<16x64xf32>
    %92 = vector.shape_cast %89 : vector<16x64xf32> to vector<1x16x64xf32>
    tpu.vector_store %arg3[%c1_36, %c0_37, %c0_38], %92 {strides = array<i32>} : memref<8x16x64xf32, #tpu.memory_space<vmem>>, vector<1x16x64xf32>,
    %93 = arith.mulf %17, %4 : vector<16x64xf32>
    %cst_39 = arith.constant dense<0.000000e+00> : vector<64xf32>
    %94 = vector.multi_reduction <add>, %93, %cst_39 [0] : vector<16x64xf32> to vector<64xf32>
    %95 = vector.shape_cast %94 : vector<64xf32> to vector<1x64xf32>
    %cst_40 = arith.constant 0.176776692 : f32
    %96 = vector.broadcast %cst_40 : f32 to vector<1x64xf32>
    %97 = arith.mulf %95, %96 : vector<1x64xf32>
    %98 = arith.mulf %17, %10 : vector<16x64xf32>
    %cst_41 = arith.constant dense<0.000000e+00> : vector<64xf32>
    %99 = vector.multi_reduction <add>, %98, %cst_41 [0] : vector<16x64xf32> to vector<64xf32>
    %100 = vector.shape_cast %99 : vector<64xf32> to vector<1x64xf32>
    %cst_42 = arith.constant 0.176776692 : f32
    %101 = vector.broadcast %cst_42 : f32 to vector<1x64xf32>
    %102 = arith.mulf %100, %101 : vector<1x64xf32>
    %103 = arith.mulf %17, %16 : vector<16x64xf32>
    %cst_43 = arith.constant dense<0.000000e+00> : vector<64xf32>
    %104 = vector.multi_reduction <add>, %103, %cst_43 [0] : vector<16x64xf32> to vector<64xf32>
    %105 = vector.shape_cast %104 : vector<64xf32> to vector<1x64xf32>
    %cst_44 = arith.constant 0.176776692 : f32
    %106 = vector.broadcast %cst_44 : f32 to vector<1x64xf32>
    %107 = arith.mulf %105, %106 : vector<1x64xf32>
    %108 = arith.maximumf %97, %102 : vector<1x64xf32>
    %109 = arith.maximumf %108, %107 : vector<1x64xf32>
    %110 = arith.subf %97, %109 : vector<1x64xf32>
    %111 = math.exp %110 : vector<1x64xf32>
    %112 = arith.subf %102, %109 : vector<1x64xf32>
    %113 = math.exp %112 : vector<1x64xf32>
    %114 = arith.subf %107, %109 : vector<1x64xf32>
    %115 = math.exp %114 : vector<1x64xf32>
    %116 = arith.addf %111, %113 : vector<1x64xf32>
    %117 = arith.addf %116, %115 : vector<1x64xf32>
    %118 = vector.broadcast %111 : vector<1x64xf32> to vector<16x64xf32>
    %119 = arith.mulf %118, %6 : vector<16x64xf32>
    %120 = vector.broadcast %113 : vector<1x64xf32> to vector<16x64xf32>
    %121 = arith.mulf %120, %12 : vector<16x64xf32>
    %122 = vector.broadcast %115 : vector<1x64xf32> to vector<16x64xf32>
    %123 = arith.mulf %122, %18 : vector<16x64xf32>
    %124 = arith.addf %119, %121 : vector<16x64xf32>
    %125 = arith.addf %124, %123 : vector<16x64xf32>
    %cst_45 = arith.constant 1.000000e+00 : f32
    %126 = vector.broadcast %cst_45 : f32 to vector<1x64xf32>
    %127 = arith.divf %126, %117 : vector<1x64xf32>
    %128 = vector.broadcast %127 : vector<1x64xf32> to vector<16x64xf32>
    %129 = arith.mulf %125, %128 : vector<16x64xf32>
    %c2_46 = arith.constant 2 : index
    %c0_47 = arith.constant 0 : index
    %c0_48 = arith.constant 0 : index
    %130 = vector.load %arg3[%c2_46, %c0_47, %c0_48] : memref<8x16x64xf32, #tpu.memory_space<vmem>>, vector<1x16x64xf32>
    %131 = vector.shape_cast %130 : vector<1x16x64xf32> to vector<16x64xf32>
    %132 = vector.shape_cast %129 : vector<16x64xf32> to vector<1x16x64xf32>
    tpu.vector_store %arg3[%c2_46, %c0_47, %c0_48], %132 {strides = array<i32>} : memref<8x16x64xf32, #tpu.memory_space<vmem>>, vector<1x16x64xf32>,
    %133 = arith.mulf %23, %4 : vector<16x64xf32>
    %cst_49 = arith.constant dense<0.000000e+00> : vector<64xf32>
    %134 = vector.multi_reduction <add>, %133, %cst_49 [0] : vector<16x64xf32> to vector<64xf32>
    %135 = vector.shape_cast %134 : vector<64xf32> to vector<1x64xf32>
    %cst_50 = arith.constant 0.176776692 : f32
    %136 = vector.broadcast %cst_50 : f32 to vector<1x64xf32>
    %137 = arith.mulf %135, %136 : vector<1x64xf32>
    %138 = arith.mulf %23, %10 : vector<16x64xf32>
    %cst_51 = arith.constant dense<0.000000e+00> : vector<64xf32>
    %139 = vector.multi_reduction <add>, %138, %cst_51 [0] : vector<16x64xf32> to vector<64xf32>
    %140 = vector.shape_cast %139 : vector<64xf32> to vector<1x64xf32>
    %cst_52 = arith.constant 0.176776692 : f32
    %141 = vector.broadcast %cst_52 : f32 to vector<1x64xf32>
    %142 = arith.mulf %140, %141 : vector<1x64xf32>
    %143 = arith.mulf %23, %16 : vector<16x64xf32>
    %cst_53 = arith.constant dense<0.000000e+00> : vector<64xf32>
    %144 = vector.multi_reduction <add>, %143, %cst_53 [0] : vector<16x64xf32> to vector<64xf32>
    %145 = vector.shape_cast %144 : vector<64xf32> to vector<1x64xf32>
    %cst_54 = arith.constant 0.176776692 : f32
    %146 = vector.broadcast %cst_54 : f32 to vector<1x64xf32>
    %147 = arith.mulf %145, %146 : vector<1x64xf32>
    %148 = arith.mulf %23, %22 : vector<16x64xf32>
    %cst_55 = arith.constant dense<0.000000e+00> : vector<64xf32>
    %149 = vector.multi_reduction <add>, %148, %cst_55 [0] : vector<16x64xf32> to vector<64xf32>
    %150 = vector.shape_cast %149 : vector<64xf32> to vector<1x64xf32>
    %cst_56 = arith.constant 0.176776692 : f32
    %151 = vector.broadcast %cst_56 : f32 to vector<1x64xf32>
    %152 = arith.mulf %150, %151 : vector<1x64xf32>
    %153 = arith.maximumf %137, %142 : vector<1x64xf32>
    %154 = arith.maximumf %153, %147 : vector<1x64xf32>
    %155 = arith.maximumf %154, %152 : vector<1x64xf32>
    %156 = arith.subf %137, %155 : vector<1x64xf32>
    %157 = math.exp %156 : vector<1x64xf32>
    %158 = arith.subf %142, %155 : vector<1x64xf32>
    %159 = math.exp %158 : vector<1x64xf32>
    %160 = arith.subf %147, %155 : vector<1x64xf32>
    %161 = math.exp %160 : vector<1x64xf32>
    %162 = arith.subf %152, %155 : vector<1x64xf32>
    %163 = math.exp %162 : vector<1x64xf32>
    %164 = arith.addf %157, %159 : vector<1x64xf32>
    %165 = arith.addf %164, %161 : vector<1x64xf32>
    %166 = arith.addf %165, %163 : vector<1x64xf32>
    %167 = vector.broadcast %157 : vector<1x64xf32> to vector<16x64xf32>
    %168 = arith.mulf %167, %6 : vector<16x64xf32>
    %169 = vector.broadcast %159 : vector<1x64xf32> to vector<16x64xf32>
    %170 = arith.mulf %169, %12 : vector<16x64xf32>
    %171 = vector.broadcast %161 : vector<1x64xf32> to vector<16x64xf32>
    %172 = arith.mulf %171, %18 : vector<16x64xf32>
    %173 = vector.broadcast %163 : vector<1x64xf32> to vector<16x64xf32>
    %174 = arith.mulf %173, %24 : vector<16x64xf32>
    %175 = arith.addf %168, %170 : vector<16x64xf32>
    %176 = arith.addf %175, %172 : vector<16x64xf32>
    %177 = arith.addf %176, %174 : vector<16x64xf32>
    %cst_57 = arith.constant 1.000000e+00 : f32
    %178 = vector.broadcast %cst_57 : f32 to vector<1x64xf32>
    %179 = arith.divf %178, %166 : vector<1x64xf32>
    %180 = vector.broadcast %179 : vector<1x64xf32> to vector<16x64xf32>
    %181 = arith.mulf %177, %180 : vector<16x64xf32>
    %c3_58 = arith.constant 3 : index
    %c0_59 = arith.constant 0 : index
    %c0_60 = arith.constant 0 : index
    %182 = vector.load %arg3[%c3_58, %c0_59, %c0_60] : memref<8x16x64xf32, #tpu.memory_space<vmem>>, vector<1x16x64xf32>
    %183 = vector.shape_cast %182 : vector<1x16x64xf32> to vector<16x64xf32>
    %184 = vector.shape_cast %181 : vector<16x64xf32> to vector<1x16x64xf32>
    tpu.vector_store %arg3[%c3_58, %c0_59, %c0_60], %184 {strides = array<i32>} : memref<8x16x64xf32, #tpu.memory_space<vmem>>, vector<1x16x64xf32>,
    %185 = arith.mulf %29, %4 : vector<16x64xf32>
    %cst_61 = arith.constant dense<0.000000e+00> : vector<64xf32>
    %186 = vector.multi_reduction <add>, %185, %cst_61 [0] : vector<16x64xf32> to vector<64xf32>
    %187 = vector.shape_cast %186 : vector<64xf32> to vector<1x64xf32>
    %cst_62 = arith.constant 0.176776692 : f32
    %188 = vector.broadcast %cst_62 : f32 to vector<1x64xf32>
    %189 = arith.mulf %187, %188 : vector<1x64xf32>
    %190 = arith.mulf %29, %10 : vector<16x64xf32>
    %cst_63 = arith.constant dense<0.000000e+00> : vector<64xf32>
    %191 = vector.multi_reduction <add>, %190, %cst_63 [0] : vector<16x64xf32> to vector<64xf32>
    %192 = vector.shape_cast %191 : vector<64xf32> to vector<1x64xf32>
    %cst_64 = arith.constant 0.176776692 : f32
    %193 = vector.broadcast %cst_64 : f32 to vector<1x64xf32>
    %194 = arith.mulf %192, %193 : vector<1x64xf32>
    %195 = arith.mulf %29, %16 : vector<16x64xf32>
    %cst_65 = arith.constant dense<0.000000e+00> : vector<64xf32>
    %196 = vector.multi_reduction <add>, %195, %cst_65 [0] : vector<16x64xf32> to vector<64xf32>
    %197 = vector.shape_cast %196 : vector<64xf32> to vector<1x64xf32>
    %cst_66 = arith.constant 0.176776692 : f32
    %198 = vector.broadcast %cst_66 : f32 to vector<1x64xf32>
    %199 = arith.mulf %197, %198 : vector<1x64xf32>
    %200 = arith.mulf %29, %22 : vector<16x64xf32>
    %cst_67 = arith.constant dense<0.000000e+00> : vector<64xf32>
    %201 = vector.multi_reduction <add>, %200, %cst_67 [0] : vector<16x64xf32> to vector<64xf32>
    %202 = vector.shape_cast %201 : vector<64xf32> to vector<1x64xf32>
    %cst_68 = arith.constant 0.176776692 : f32
    %203 = vector.broadcast %cst_68 : f32 to vector<1x64xf32>
    %204 = arith.mulf %202, %203 : vector<1x64xf32>
    %205 = arith.mulf %29, %28 : vector<16x64xf32>
    %cst_69 = arith.constant dense<0.000000e+00> : vector<64xf32>
    %206 = vector.multi_reduction <add>, %205, %cst_69 [0] : vector<16x64xf32> to vector<64xf32>
    %207 = vector.shape_cast %206 : vector<64xf32> to vector<1x64xf32>
    %cst_70 = arith.constant 0.176776692 : f32
    %208 = vector.broadcast %cst_70 : f32 to vector<1x64xf32>
    %209 = arith.mulf %207, %208 : vector<1x64xf32>
    %210 = arith.maximumf %189, %194 : vector<1x64xf32>
    %211 = arith.maximumf %210, %199 : vector<1x64xf32>
    %212 = arith.maximumf %211, %204 : vector<1x64xf32>
    %213 = arith.maximumf %212, %209 : vector<1x64xf32>
    %214 = arith.subf %189, %213 : vector<1x64xf32>
    %215 = math.exp %214 : vector<1x64xf32>
    %216 = arith.subf %194, %213 : vector<1x64xf32>
    %217 = math.exp %216 : vector<1x64xf32>
    %218 = arith.subf %199, %213 : vector<1x64xf32>
    %219 = math.exp %218 : vector<1x64xf32>
    %220 = arith.subf %204, %213 : vector<1x64xf32>
    %221 = math.exp %220 : vector<1x64xf32>
    %222 = arith.subf %209, %213 : vector<1x64xf32>
    %223 = math.exp %222 : vector<1x64xf32>
    %224 = arith.addf %215, %217 : vector<1x64xf32>
    %225 = arith.addf %224, %219 : vector<1x64xf32>
    %226 = arith.addf %225, %221 : vector<1x64xf32>
    %227 = arith.addf %226, %223 : vector<1x64xf32>
    %228 = vector.broadcast %215 : vector<1x64xf32> to vector<16x64xf32>
    %229 = arith.mulf %228, %6 : vector<16x64xf32>
    %230 = vector.broadcast %217 : vector<1x64xf32> to vector<16x64xf32>
    %231 = arith.mulf %230, %12 : vector<16x64xf32>
    %232 = vector.broadcast %219 : vector<1x64xf32> to vector<16x64xf32>
    %233 = arith.mulf %232, %18 : vector<16x64xf32>
    %234 = vector.broadcast %221 : vector<1x64xf32> to vector<16x64xf32>
    %235 = arith.mulf %234, %24 : vector<16x64xf32>
    %236 = vector.broadcast %223 : vector<1x64xf32> to vector<16x64xf32>
    %237 = arith.mulf %236, %30 : vector<16x64xf32>
    %238 = arith.addf %229, %231 : vector<16x64xf32>
    %239 = arith.addf %238, %233 : vector<16x64xf32>
    %240 = arith.addf %239, %235 : vector<16x64xf32>
    %241 = arith.addf %240, %237 : vector<16x64xf32>
    %cst_71 = arith.constant 1.000000e+00 : f32
    %242 = vector.broadcast %cst_71 : f32 to vector<1x64xf32>
    %243 = arith.divf %242, %227 : vector<1x64xf32>
    %244 = vector.broadcast %243 : vector<1x64xf32> to vector<16x64xf32>
    %245 = arith.mulf %241, %244 : vector<16x64xf32>
    %c4_72 = arith.constant 4 : index
    %c0_73 = arith.constant 0 : index
    %c0_74 = arith.constant 0 : index
    %246 = vector.load %arg3[%c4_72, %c0_73, %c0_74] : memref<8x16x64xf32, #tpu.memory_space<vmem>>, vector<1x16x64xf32>
    %247 = vector.shape_cast %246 : vector<1x16x64xf32> to vector<16x64xf32>
    %248 = vector.shape_cast %245 : vector<16x64xf32> to vector<1x16x64xf32>
    tpu.vector_store %arg3[%c4_72, %c0_73, %c0_74], %248 {strides = array<i32>} : memref<8x16x64xf32, #tpu.memory_space<vmem>>, vector<1x16x64xf32>,
    %249 = arith.mulf %35, %4 : vector<16x64xf32>
    %cst_75 = arith.constant dense<0.000000e+00> : vector<64xf32>
    %250 = vector.multi_reduction <add>, %249, %cst_75 [0] : vector<16x64xf32> to vector<64xf32>
    %251 = vector.shape_cast %250 : vector<64xf32> to vector<1x64xf32>
    %cst_76 = arith.constant 0.176776692 : f32
    %252 = vector.broadcast %cst_76 : f32 to vector<1x64xf32>
    %253 = arith.mulf %251, %252 : vector<1x64xf32>
    %254 = arith.mulf %35, %10 : vector<16x64xf32>
    %cst_77 = arith.constant dense<0.000000e+00> : vector<64xf32>
    %255 = vector.multi_reduction <add>, %254, %cst_77 [0] : vector<16x64xf32> to vector<64xf32>
    %256 = vector.shape_cast %255 : vector<64xf32> to vector<1x64xf32>
    %cst_78 = arith.constant 0.176776692 : f32
    %257 = vector.broadcast %cst_78 : f32 to vector<1x64xf32>
    %258 = arith.mulf %256, %257 : vector<1x64xf32>
    %259 = arith.mulf %35, %16 : vector<16x64xf32>
    %cst_79 = arith.constant dense<0.000000e+00> : vector<64xf32>
    %260 = vector.multi_reduction <add>, %259, %cst_79 [0] : vector<16x64xf32> to vector<64xf32>
    %261 = vector.shape_cast %260 : vector<64xf32> to vector<1x64xf32>
    %cst_80 = arith.constant 0.176776692 : f32
    %262 = vector.broadcast %cst_80 : f32 to vector<1x64xf32>
    %263 = arith.mulf %261, %262 : vector<1x64xf32>
    %264 = arith.mulf %35, %22 : vector<16x64xf32>
    %cst_81 = arith.constant dense<0.000000e+00> : vector<64xf32>
    %265 = vector.multi_reduction <add>, %264, %cst_81 [0] : vector<16x64xf32> to vector<64xf32>
    %266 = vector.shape_cast %265 : vector<64xf32> to vector<1x64xf32>
    %cst_82 = arith.constant 0.176776692 : f32
    %267 = vector.broadcast %cst_82 : f32 to vector<1x64xf32>
    %268 = arith.mulf %266, %267 : vector<1x64xf32>
    %269 = arith.mulf %35, %28 : vector<16x64xf32>
    %cst_83 = arith.constant dense<0.000000e+00> : vector<64xf32>
    %270 = vector.multi_reduction <add>, %269, %cst_83 [0] : vector<16x64xf32> to vector<64xf32>
    %271 = vector.shape_cast %270 : vector<64xf32> to vector<1x64xf32>
    %cst_84 = arith.constant 0.176776692 : f32
    %272 = vector.broadcast %cst_84 : f32 to vector<1x64xf32>
    %273 = arith.mulf %271, %272 : vector<1x64xf32>
    %274 = arith.mulf %35, %34 : vector<16x64xf32>
    %cst_85 = arith.constant dense<0.000000e+00> : vector<64xf32>
    %275 = vector.multi_reduction <add>, %274, %cst_85 [0] : vector<16x64xf32> to vector<64xf32>
    %276 = vector.shape_cast %275 : vector<64xf32> to vector<1x64xf32>
    %cst_86 = arith.constant 0.176776692 : f32
    %277 = vector.broadcast %cst_86 : f32 to vector<1x64xf32>
    %278 = arith.mulf %276, %277 : vector<1x64xf32>
    %279 = arith.maximumf %253, %258 : vector<1x64xf32>
    %280 = arith.maximumf %279, %263 : vector<1x64xf32>
    %281 = arith.maximumf %280, %268 : vector<1x64xf32>
    %282 = arith.maximumf %281, %273 : vector<1x64xf32>
    %283 = arith.maximumf %282, %278 : vector<1x64xf32>
    %284 = arith.subf %253, %283 : vector<1x64xf32>
    %285 = math.exp %284 : vector<1x64xf32>
    %286 = arith.subf %258, %283 : vector<1x64xf32>
    %287 = math.exp %286 : vector<1x64xf32>
    %288 = arith.subf %263, %283 : vector<1x64xf32>
    %289 = math.exp %288 : vector<1x64xf32>
    %290 = arith.subf %268, %283 : vector<1x64xf32>
    %291 = math.exp %290 : vector<1x64xf32>
    %292 = arith.subf %273, %283 : vector<1x64xf32>
    %293 = math.exp %292 : vector<1x64xf32>
    %294 = arith.subf %278, %283 : vector<1x64xf32>
    %295 = math.exp %294 : vector<1x64xf32>
    %296 = arith.addf %285, %287 : vector<1x64xf32>
    %297 = arith.addf %296, %289 : vector<1x64xf32>
    %298 = arith.addf %297, %291 : vector<1x64xf32>
    %299 = arith.addf %298, %293 : vector<1x64xf32>
    %300 = arith.addf %299, %295 : vector<1x64xf32>
    %301 = vector.broadcast %285 : vector<1x64xf32> to vector<16x64xf32>
    %302 = arith.mulf %301, %6 : vector<16x64xf32>
    %303 = vector.broadcast %287 : vector<1x64xf32> to vector<16x64xf32>
    %304 = arith.mulf %303, %12 : vector<16x64xf32>
    %305 = vector.broadcast %289 : vector<1x64xf32> to vector<16x64xf32>
    %306 = arith.mulf %305, %18 : vector<16x64xf32>
    %307 = vector.broadcast %291 : vector<1x64xf32> to vector<16x64xf32>
    %308 = arith.mulf %307, %24 : vector<16x64xf32>
    %309 = vector.broadcast %293 : vector<1x64xf32> to vector<16x64xf32>
    %310 = arith.mulf %309, %30 : vector<16x64xf32>
    %311 = vector.broadcast %295 : vector<1x64xf32> to vector<16x64xf32>
    %312 = arith.mulf %311, %36 : vector<16x64xf32>
    %313 = arith.addf %302, %304 : vector<16x64xf32>
    %314 = arith.addf %313, %306 : vector<16x64xf32>
    %315 = arith.addf %314, %308 : vector<16x64xf32>
    %316 = arith.addf %315, %310 : vector<16x64xf32>
    %317 = arith.addf %316, %312 : vector<16x64xf32>
    %cst_87 = arith.constant 1.000000e+00 : f32
    %318 = vector.broadcast %cst_87 : f32 to vector<1x64xf32>
    %319 = arith.divf %318, %300 : vector<1x64xf32>
    %320 = vector.broadcast %319 : vector<1x64xf32> to vector<16x64xf32>
    %321 = arith.mulf %317, %320 : vector<16x64xf32>
    %c5_88 = arith.constant 5 : index
    %c0_89 = arith.constant 0 : index
    %c0_90 = arith.constant 0 : index
    %322 = vector.load %arg3[%c5_88, %c0_89, %c0_90] : memref<8x16x64xf32, #tpu.memory_space<vmem>>, vector<1x16x64xf32>
    %323 = vector.shape_cast %322 : vector<1x16x64xf32> to vector<16x64xf32>
    %324 = vector.shape_cast %321 : vector<16x64xf32> to vector<1x16x64xf32>
    tpu.vector_store %arg3[%c5_88, %c0_89, %c0_90], %324 {strides = array<i32>} : memref<8x16x64xf32, #tpu.memory_space<vmem>>, vector<1x16x64xf32>,
    %325 = arith.mulf %41, %4 : vector<16x64xf32>
    %cst_91 = arith.constant dense<0.000000e+00> : vector<64xf32>
    %326 = vector.multi_reduction <add>, %325, %cst_91 [0] : vector<16x64xf32> to vector<64xf32>
    %327 = vector.shape_cast %326 : vector<64xf32> to vector<1x64xf32>
    %cst_92 = arith.constant 0.176776692 : f32
    %328 = vector.broadcast %cst_92 : f32 to vector<1x64xf32>
    %329 = arith.mulf %327, %328 : vector<1x64xf32>
    %330 = arith.mulf %41, %10 : vector<16x64xf32>
    %cst_93 = arith.constant dense<0.000000e+00> : vector<64xf32>
    %331 = vector.multi_reduction <add>, %330, %cst_93 [0] : vector<16x64xf32> to vector<64xf32>
    %332 = vector.shape_cast %331 : vector<64xf32> to vector<1x64xf32>
    %cst_94 = arith.constant 0.176776692 : f32
    %333 = vector.broadcast %cst_94 : f32 to vector<1x64xf32>
    %334 = arith.mulf %332, %333 : vector<1x64xf32>
    %335 = arith.mulf %41, %16 : vector<16x64xf32>
    %cst_95 = arith.constant dense<0.000000e+00> : vector<64xf32>
    %336 = vector.multi_reduction <add>, %335, %cst_95 [0] : vector<16x64xf32> to vector<64xf32>
    %337 = vector.shape_cast %336 : vector<64xf32> to vector<1x64xf32>
    %cst_96 = arith.constant 0.176776692 : f32
    %338 = vector.broadcast %cst_96 : f32 to vector<1x64xf32>
    %339 = arith.mulf %337, %338 : vector<1x64xf32>
    %340 = arith.mulf %41, %22 : vector<16x64xf32>
    %cst_97 = arith.constant dense<0.000000e+00> : vector<64xf32>
    %341 = vector.multi_reduction <add>, %340, %cst_97 [0] : vector<16x64xf32> to vector<64xf32>
    %342 = vector.shape_cast %341 : vector<64xf32> to vector<1x64xf32>
    %cst_98 = arith.constant 0.176776692 : f32
    %343 = vector.broadcast %cst_98 : f32 to vector<1x64xf32>
    %344 = arith.mulf %342, %343 : vector<1x64xf32>
    %345 = arith.mulf %41, %28 : vector<16x64xf32>
    %cst_99 = arith.constant dense<0.000000e+00> : vector<64xf32>
    %346 = vector.multi_reduction <add>, %345, %cst_99 [0] : vector<16x64xf32> to vector<64xf32>
    %347 = vector.shape_cast %346 : vector<64xf32> to vector<1x64xf32>
    %cst_100 = arith.constant 0.176776692 : f32
    %348 = vector.broadcast %cst_100 : f32 to vector<1x64xf32>
    %349 = arith.mulf %347, %348 : vector<1x64xf32>
    %350 = arith.mulf %41, %34 : vector<16x64xf32>
    %cst_101 = arith.constant dense<0.000000e+00> : vector<64xf32>
    %351 = vector.multi_reduction <add>, %350, %cst_101 [0] : vector<16x64xf32> to vector<64xf32>
    %352 = vector.shape_cast %351 : vector<64xf32> to vector<1x64xf32>
    %cst_102 = arith.constant 0.176776692 : f32
    %353 = vector.broadcast %cst_102 : f32 to vector<1x64xf32>
    %354 = arith.mulf %352, %353 : vector<1x64xf32>
    %355 = arith.mulf %41, %40 : vector<16x64xf32>
    %cst_103 = arith.constant dense<0.000000e+00> : vector<64xf32>
    %356 = vector.multi_reduction <add>, %355, %cst_103 [0] : vector<16x64xf32> to vector<64xf32>
    %357 = vector.shape_cast %356 : vector<64xf32> to vector<1x64xf32>
    %cst_104 = arith.constant 0.176776692 : f32
    %358 = vector.broadcast %cst_104 : f32 to vector<1x64xf32>
    %359 = arith.mulf %357, %358 : vector<1x64xf32>
    %360 = arith.maximumf %329, %334 : vector<1x64xf32>
    %361 = arith.maximumf %360, %339 : vector<1x64xf32>
    %362 = arith.maximumf %361, %344 : vector<1x64xf32>
    %363 = arith.maximumf %362, %349 : vector<1x64xf32>
    %364 = arith.maximumf %363, %354 : vector<1x64xf32>
    %365 = arith.maximumf %364, %359 : vector<1x64xf32>
    %366 = arith.subf %329, %365 : vector<1x64xf32>
    %367 = math.exp %366 : vector<1x64xf32>
    %368 = arith.subf %334, %365 : vector<1x64xf32>
    %369 = math.exp %368 : vector<1x64xf32>
    %370 = arith.subf %339, %365 : vector<1x64xf32>
    %371 = math.exp %370 : vector<1x64xf32>
    %372 = arith.subf %344, %365 : vector<1x64xf32>
    %373 = math.exp %372 : vector<1x64xf32>
    %374 = arith.subf %349, %365 : vector<1x64xf32>
    %375 = math.exp %374 : vector<1x64xf32>
    %376 = arith.subf %354, %365 : vector<1x64xf32>
    %377 = math.exp %376 : vector<1x64xf32>
    %378 = arith.subf %359, %365 : vector<1x64xf32>
    %379 = math.exp %378 : vector<1x64xf32>
    %380 = arith.addf %367, %369 : vector<1x64xf32>
    %381 = arith.addf %380, %371 : vector<1x64xf32>
    %382 = arith.addf %381, %373 : vector<1x64xf32>
    %383 = arith.addf %382, %375 : vector<1x64xf32>
    %384 = arith.addf %383, %377 : vector<1x64xf32>
    %385 = arith.addf %384, %379 : vector<1x64xf32>
    %386 = vector.broadcast %367 : vector<1x64xf32> to vector<16x64xf32>
    %387 = arith.mulf %386, %6 : vector<16x64xf32>
    %388 = vector.broadcast %369 : vector<1x64xf32> to vector<16x64xf32>
    %389 = arith.mulf %388, %12 : vector<16x64xf32>
    %390 = vector.broadcast %371 : vector<1x64xf32> to vector<16x64xf32>
    %391 = arith.mulf %390, %18 : vector<16x64xf32>
    %392 = vector.broadcast %373 : vector<1x64xf32> to vector<16x64xf32>
    %393 = arith.mulf %392, %24 : vector<16x64xf32>
    %394 = vector.broadcast %375 : vector<1x64xf32> to vector<16x64xf32>
    %395 = arith.mulf %394, %30 : vector<16x64xf32>
    %396 = vector.broadcast %377 : vector<1x64xf32> to vector<16x64xf32>
    %397 = arith.mulf %396, %36 : vector<16x64xf32>
    %398 = vector.broadcast %379 : vector<1x64xf32> to vector<16x64xf32>
    %399 = arith.mulf %398, %42 : vector<16x64xf32>
    %400 = arith.addf %387, %389 : vector<16x64xf32>
    %401 = arith.addf %400, %391 : vector<16x64xf32>
    %402 = arith.addf %401, %393 : vector<16x64xf32>
    %403 = arith.addf %402, %395 : vector<16x64xf32>
    %404 = arith.addf %403, %397 : vector<16x64xf32>
    %405 = arith.addf %404, %399 : vector<16x64xf32>
    %cst_105 = arith.constant 1.000000e+00 : f32
    %406 = vector.broadcast %cst_105 : f32 to vector<1x64xf32>
    %407 = arith.divf %406, %385 : vector<1x64xf32>
    %408 = vector.broadcast %407 : vector<1x64xf32> to vector<16x64xf32>
    %409 = arith.mulf %405, %408 : vector<16x64xf32>
    %c6_106 = arith.constant 6 : index
    %c0_107 = arith.constant 0 : index
    %c0_108 = arith.constant 0 : index
    %410 = vector.load %arg3[%c6_106, %c0_107, %c0_108] : memref<8x16x64xf32, #tpu.memory_space<vmem>>, vector<1x16x64xf32>
    %411 = vector.shape_cast %410 : vector<1x16x64xf32> to vector<16x64xf32>
    %412 = vector.shape_cast %409 : vector<16x64xf32> to vector<1x16x64xf32>
    tpu.vector_store %arg3[%c6_106, %c0_107, %c0_108], %412 {strides = array<i32>} : memref<8x16x64xf32, #tpu.memory_space<vmem>>, vector<1x16x64xf32>,
    %413 = arith.mulf %47, %4 : vector<16x64xf32>
    %cst_109 = arith.constant dense<0.000000e+00> : vector<64xf32>
    %414 = vector.multi_reduction <add>, %413, %cst_109 [0] : vector<16x64xf32> to vector<64xf32>
    %415 = vector.shape_cast %414 : vector<64xf32> to vector<1x64xf32>
    %cst_110 = arith.constant 0.176776692 : f32
    %416 = vector.broadcast %cst_110 : f32 to vector<1x64xf32>
    %417 = arith.mulf %415, %416 : vector<1x64xf32>
    %418 = arith.mulf %47, %10 : vector<16x64xf32>
    %cst_111 = arith.constant dense<0.000000e+00> : vector<64xf32>
    %419 = vector.multi_reduction <add>, %418, %cst_111 [0] : vector<16x64xf32> to vector<64xf32>
    %420 = vector.shape_cast %419 : vector<64xf32> to vector<1x64xf32>
    %cst_112 = arith.constant 0.176776692 : f32
    %421 = vector.broadcast %cst_112 : f32 to vector<1x64xf32>
    %422 = arith.mulf %420, %421 : vector<1x64xf32>
    %423 = arith.mulf %47, %16 : vector<16x64xf32>
    %cst_113 = arith.constant dense<0.000000e+00> : vector<64xf32>
    %424 = vector.multi_reduction <add>, %423, %cst_113 [0] : vector<16x64xf32> to vector<64xf32>
    %425 = vector.shape_cast %424 : vector<64xf32> to vector<1x64xf32>
    %cst_114 = arith.constant 0.176776692 : f32
    %426 = vector.broadcast %cst_114 : f32 to vector<1x64xf32>
    %427 = arith.mulf %425, %426 : vector<1x64xf32>
    %428 = arith.mulf %47, %22 : vector<16x64xf32>
    %cst_115 = arith.constant dense<0.000000e+00> : vector<64xf32>
    %429 = vector.multi_reduction <add>, %428, %cst_115 [0] : vector<16x64xf32> to vector<64xf32>
    %430 = vector.shape_cast %429 : vector<64xf32> to vector<1x64xf32>
    %cst_116 = arith.constant 0.176776692 : f32
    %431 = vector.broadcast %cst_116 : f32 to vector<1x64xf32>
    %432 = arith.mulf %430, %431 : vector<1x64xf32>
    %433 = arith.mulf %47, %28 : vector<16x64xf32>
    %cst_117 = arith.constant dense<0.000000e+00> : vector<64xf32>
    %434 = vector.multi_reduction <add>, %433, %cst_117 [0] : vector<16x64xf32> to vector<64xf32>
    %435 = vector.shape_cast %434 : vector<64xf32> to vector<1x64xf32>
    %cst_118 = arith.constant 0.176776692 : f32
    %436 = vector.broadcast %cst_118 : f32 to vector<1x64xf32>
    %437 = arith.mulf %435, %436 : vector<1x64xf32>
    %438 = arith.mulf %47, %34 : vector<16x64xf32>
    %cst_119 = arith.constant dense<0.000000e+00> : vector<64xf32>
    %439 = vector.multi_reduction <add>, %438, %cst_119 [0] : vector<16x64xf32> to vector<64xf32>
    %440 = vector.shape_cast %439 : vector<64xf32> to vector<1x64xf32>
    %cst_120 = arith.constant 0.176776692 : f32
    %441 = vector.broadcast %cst_120 : f32 to vector<1x64xf32>
    %442 = arith.mulf %440, %441 : vector<1x64xf32>
    %443 = arith.mulf %47, %40 : vector<16x64xf32>
    %cst_121 = arith.constant dense<0.000000e+00> : vector<64xf32>
    %444 = vector.multi_reduction <add>, %443, %cst_121 [0] : vector<16x64xf32> to vector<64xf32>
    %445 = vector.shape_cast %444 : vector<64xf32> to vector<1x64xf32>
    %cst_122 = arith.constant 0.176776692 : f32
    %446 = vector.broadcast %cst_122 : f32 to vector<1x64xf32>
    %447 = arith.mulf %445, %446 : vector<1x64xf32>
    %448 = arith.mulf %47, %46 : vector<16x64xf32>
    %cst_123 = arith.constant dense<0.000000e+00> : vector<64xf32>
    %449 = vector.multi_reduction <add>, %448, %cst_123 [0] : vector<16x64xf32> to vector<64xf32>
    %450 = vector.shape_cast %449 : vector<64xf32> to vector<1x64xf32>
    %cst_124 = arith.constant 0.176776692 : f32
    %451 = vector.broadcast %cst_124 : f32 to vector<1x64xf32>
    %452 = arith.mulf %450, %451 : vector<1x64xf32>
    %453 = arith.maximumf %417, %422 : vector<1x64xf32>
    %454 = arith.maximumf %453, %427 : vector<1x64xf32>
    %455 = arith.maximumf %454, %432 : vector<1x64xf32>
    %456 = arith.maximumf %455, %437 : vector<1x64xf32>
    %457 = arith.maximumf %456, %442 : vector<1x64xf32>
    %458 = arith.maximumf %457, %447 : vector<1x64xf32>
    %459 = arith.maximumf %458, %452 : vector<1x64xf32>
    %460 = arith.subf %417, %459 : vector<1x64xf32>
    %461 = math.exp %460 : vector<1x64xf32>
    %462 = arith.subf %422, %459 : vector<1x64xf32>
    %463 = math.exp %462 : vector<1x64xf32>
    %464 = arith.subf %427, %459 : vector<1x64xf32>
    %465 = math.exp %464 : vector<1x64xf32>
    %466 = arith.subf %432, %459 : vector<1x64xf32>
    %467 = math.exp %466 : vector<1x64xf32>
    %468 = arith.subf %437, %459 : vector<1x64xf32>
    %469 = math.exp %468 : vector<1x64xf32>
    %470 = arith.subf %442, %459 : vector<1x64xf32>
    %471 = math.exp %470 : vector<1x64xf32>
    %472 = arith.subf %447, %459 : vector<1x64xf32>
    %473 = math.exp %472 : vector<1x64xf32>
    %474 = arith.subf %452, %459 : vector<1x64xf32>
    %475 = math.exp %474 : vector<1x64xf32>
    %476 = arith.addf %461, %463 : vector<1x64xf32>
    %477 = arith.addf %476, %465 : vector<1x64xf32>
    %478 = arith.addf %477, %467 : vector<1x64xf32>
    %479 = arith.addf %478, %469 : vector<1x64xf32>
    %480 = arith.addf %479, %471 : vector<1x64xf32>
    %481 = arith.addf %480, %473 : vector<1x64xf32>
    %482 = arith.addf %481, %475 : vector<1x64xf32>
    %483 = vector.broadcast %461 : vector<1x64xf32> to vector<16x64xf32>
    %484 = arith.mulf %483, %6 : vector<16x64xf32>
    %485 = vector.broadcast %463 : vector<1x64xf32> to vector<16x64xf32>
    %486 = arith.mulf %485, %12 : vector<16x64xf32>
    %487 = vector.broadcast %465 : vector<1x64xf32> to vector<16x64xf32>
    %488 = arith.mulf %487, %18 : vector<16x64xf32>
    %489 = vector.broadcast %467 : vector<1x64xf32> to vector<16x64xf32>
    %490 = arith.mulf %489, %24 : vector<16x64xf32>
    %491 = vector.broadcast %469 : vector<1x64xf32> to vector<16x64xf32>
    %492 = arith.mulf %491, %30 : vector<16x64xf32>
    %493 = vector.broadcast %471 : vector<1x64xf32> to vector<16x64xf32>
    %494 = arith.mulf %493, %36 : vector<16x64xf32>
    %495 = vector.broadcast %473 : vector<1x64xf32> to vector<16x64xf32>
    %496 = arith.mulf %495, %42 : vector<16x64xf32>
    %497 = vector.broadcast %475 : vector<1x64xf32> to vector<16x64xf32>
    %498 = arith.mulf %497, %48 : vector<16x64xf32>
    %499 = arith.addf %484, %486 : vector<16x64xf32>
    %500 = arith.addf %499, %488 : vector<16x64xf32>
    %501 = arith.addf %500, %490 : vector<16x64xf32>
    %502 = arith.addf %501, %492 : vector<16x64xf32>
    %503 = arith.addf %502, %494 : vector<16x64xf32>
    %504 = arith.addf %503, %496 : vector<16x64xf32>
    %505 = arith.addf %504, %498 : vector<16x64xf32>
    %cst_125 = arith.constant 1.000000e+00 : f32
    %506 = vector.broadcast %cst_125 : f32 to vector<1x64xf32>
    %507 = arith.divf %506, %482 : vector<1x64xf32>
    %508 = vector.broadcast %507 : vector<1x64xf32> to vector<16x64xf32>
    %509 = arith.mulf %505, %508 : vector<16x64xf32>
    %c7_126 = arith.constant 7 : index
    %c0_127 = arith.constant 0 : index
    %c0_128 = arith.constant 0 : index
    %510 = vector.load %arg3[%c7_126, %c0_127, %c0_128] : memref<8x16x64xf32, #tpu.memory_space<vmem>>, vector<1x16x64xf32>
    %511 = vector.shape_cast %510 : vector<1x16x64xf32> to vector<16x64xf32>
    %512 = vector.shape_cast %509 : vector<16x64xf32> to vector<1x16x64xf32>
    tpu.vector_store %arg3[%c7_126, %c0_127, %c0_128], %512 {strides = array<i32>} : memref<8x16x64xf32, #tpu.memory_space<vmem>>, vector<1x16x64xf32>,
    return
  }
  func.func @transform_0(%arg0: i32) -> (i32, i32, i32) {
    %c0_i32 = arith.constant 0 : i32
    %c0_i32_0 = arith.constant 0 : i32
    %c0_i32_1 = arith.constant 0 : i32
    return %c0_i32, %c0_i32_0, %arg0 : i32, i32, i32
  }
  func.func @transform_1(%arg0: i32) -> (i32, i32) {
    %c0_i32 = arith.constant 0 : i32
    %c0_i32_0 = arith.constant 0 : i32
    %c0_i32_1 = arith.constant 0 : i32
    return %c0_i32, %c0_i32_0 : i32, i32
  }
  func.func @transform_2(%arg0: i32) -> (i32, i32, i32) {
    %c0_i32 = arith.constant 0 : i32
    %c0_i32_0 = arith.constant 0 : i32
    %c0_i32_1 = arith.constant 0 : i32
    return %c0_i32, %c0_i32_0, %arg0 : i32, i32, i32
  }
}

</mosaic_0001>

<llo_original>
// kernel: tpu_custom_call.1
$region0: #{tpu_custom_call.1}
  #allocation0 [shape = 'u32[]', space=smem, size = 0x4, offset = 0x4, fixed_abs, tag = 'smem constant byte address 0x4 - core index']
  #allocation1 [shape = 'u32[72,128]{1,0:T(1,128)}', space=vmem, size = 0x9000, scoped, tag = 'internal scratch']
  %s0 = inlined_call_operand.hbm [shape: f32[8,32,64], index: 0, kind: input, shape index: {}]
  %s1 = inlined_call_operand.vmem [shape: f32[48,32], index: 1, kind: input, shape index: {}]
  %s2 = inlined_call_operand.hbm [shape: f32[8,16,64], index: 2, kind: output, shape index: {}]
  %s3 = sld [smem:[#allocation0]]
  $region22: #{tpu_custom_call.1} parent=0
    _
  %s5 = ssub.s32 1, %s3
  %s6 = scalar_select 0, %s5, %s3
  $region1: #{tpu_custom_call.1} parent=0
    #allocation2 [shape = 'u8[131072]{0}', space=vmem, size = 0x20000, scoped, tag = 'input window, operand 0, single buffered']
    #allocation3 [shape = 's32[1]{0}', space=sflag, size = 0x4, scoped, tag = 'scoped memory for tpu_custom_call.1']
    #allocation4 [shape = 's32[1]{0}', space=sflag, size = 0x4, scoped, tag = 'scoped memory for tpu_custom_call.1']
    #allocation5 [shape = 'u8[65536]{0}', space=vmem, size = 0x10000, scoped, tag = 'output window, operand 0, single buffered']
    %7 = vsyncpa [#allocation3], 0
    %8 = vsyncpa [#allocation4], 0
    // Predicated region
    $region2: #{tpu_custom_call.1} parent=1 // pred_check
      _
    $region3: #{tpu_custom_call.1} parent=1 // pred_check_branch
      %10 = sbr.rel (0) target = $region5
    $region4: #{tpu_custom_call.1} parent=1 // pred_region
      %12 = vsyncadd [#allocation3], 0
      %s13 = sshll.u32 %s0, 4
      %s14 = int_to_ptr.hbm [resolvable:$true] %s13
      %s15 = sshll.u32 [#allocation2], 4
      %s16 = int_to_ptr.vmem [resolvable:$true] %s15
      %21 = dma.hbm_to_vmem [thread:$0]  %s14, 4096, %s16, [#allocation3], 128, 128, 8
    $region5: #{tpu_custom_call.1} parent=1 // pred_fallthru
      _
    // Predicated region
    $region6: #{tpu_custom_call.1} parent=1 // pred_check
      _
    $region7: #{tpu_custom_call.1} parent=1 // pred_check_branch
      %23 = sbr.rel (0) target = $region9
    $region8: #{tpu_custom_call.1} parent=1 // pred_region
      _
    $region9: #{tpu_custom_call.1} parent=1 // pred_fallthru
      _
    // Predicated region
    $region10: #{tpu_custom_call.1} parent=1 // pred_check
      _
    $region11: #{tpu_custom_call.1} parent=1 // pred_check_branch
      %25 = sbr.rel (0) target = $region13
    $region12: #{tpu_custom_call.1} parent=1 // pred_region
      %27 = dma.done [#allocation3], 4096
    $region13: #{tpu_custom_call.1} parent=1 // pred_fallthru
      _
    %v28 = vld [vmem:[%s1] sm:$0xff]
    %v29 = vld [vmem:[%s1 + $0x8] sm:$0xff]
    %v30 = vld [vmem:[%s1 + $0x10] sm:$0xff]
    %v31 = vld [vmem:[%s1 + $0x18] sm:$0xff]
    %v32 = vld [vmem:[%s1 + $0x20] sm:$0xff]
    %v33 = vld [vmem:[%s1 + $0x28] sm:$0xff]
    %v34 = vld [vmem:[#allocation2] sm:$0xff]
    %v35 = vld [vmem:[#allocation2 + $0x8] sm:$0xff]
    %v36 = vld [vmem:[#allocation2 + $0x10] sm:$0xff]
    %v37 = vld [vmem:[#allocation2 + $0x18] sm:$0xff]
    %vm38 = vcmask 261120
    %v40 = vsel %vm38, %v28, 0
    %v43 = vsel %vm38, %v29, 0
    %v46 = vsel %vm38, %v30, 0
    %v49 = vsel %vm38, %v31, 0
    %v52 = vsel %vm38, %v32, 0
    %v55 = vsel %vm38, %v33, 0
    %57 = vmatpush.msra.mxu0 0.0
    %58 = vmatpush.msra.mxu0 0.0
    %59 = vmatpush.msra.mxu0 0.0
    %60 = vmatpush.msra.mxu0 0.0
    %61 = vmatpush.msra.mxu0 0.0
    %62 = vmatpush.msra.mxu0 0.0
    %63 = vmatpush.msra.mxu0 0.0
    %64 = vmatpush.msra.mxu0 0.0
    %65 = vmatpush.msra.mxu0 0.0
    %66 = vmatpush.msra.mxu0 0.0
    %67 = vmatpush.msra.mxu0 0.0
    %68 = vmatpush.msra.mxu0 0.0
    %v69 = vand.u32 %v37, 4294901760
    %70 = vmatpush.msra.mxu0 %v69
    %v71 = vand.u32 %v36, 4294901760
    %72 = vmatpush.msra.mxu0 %v71
    %v73 = vand.u32 %v35, 4294901760
    %74 = vmatpush.msra.mxu0 %v73
    %v75 = vand.u32 %v34, 4294901760
    %76 = vmatpush.msra.mxu0 %v75
    %v77 = vand.u32 %v40, 4294901760
    %v78 = vsub.f32 %v40, %v77
    %v79 = vand.u32 %v78, 4294901760
    %v80 = vsub.f32 %v78, %v79
    %v81 = vand.u32 %v80, 4294901760
    %82 = vmatmul.f32.gmra.mxu0 %v81
    %v83 = vpop.f32.mrf.mxu0
    %v84 = vadd.f32 0.0, %v83
    %v85 = vand.u32 %v43, 4294901760
    %v86 = vsub.f32 %v43, %v85
    %v87 = vand.u32 %v86, 4294901760
    %v88 = vsub.f32 %v86, %v87
    %v89 = vand.u32 %v88, 4294901760
    %90 = vmatmul.f32.gmra.mxu0 %v89
    %v91 = vpop.f32.mrf.mxu0
    %v92 = vadd.f32 0.0, %v91
    %v93 = vand.u32 %v46, 4294901760
    %v94 = vsub.f32 %v46, %v93
    %v95 = vand.u32 %v94, 4294901760
    %v96 = vsub.f32 %v94, %v95
    %v97 = vand.u32 %v96, 4294901760
    %98 = vmatmul.f32.gmra.mxu0 %v97
    %v99 = vpop.f32.mrf.mxu0
    %v100 = vadd.f32 0.0, %v99
    %v101 = vand.u32 %v49, 4294901760
    %v102 = vsub.f32 %v49, %v101
    %v103 = vand.u32 %v102, 4294901760
    %v104 = vsub.f32 %v102, %v103
    %v105 = vand.u32 %v104, 4294901760
    %106 = vmatmul.f32.gmra.mxu0 %v105
    %v107 = vpop.f32.mrf.mxu0
    %v108 = vadd.f32 0.0, %v107
    %v109 = vand.u32 %v52, 4294901760
    %v110 = vsub.f32 %v52, %v109
    %v111 = vand.u32 %v110, 4294901760
    %v112 = vsub.f32 %v110, %v111
    %v113 = vand.u32 %v112, 4294901760
    %114 = vmatmul.f32.gmra.mxu0 %v113
    %v115 = vpop.f32.mrf.mxu0
    %v116 = vadd.f32 0.0, %v115
    %v117 = vand.u32 %v55, 4294901760
    %v118 = vsub.f32 %v55, %v117
    %v119 = vand.u32 %v118, 4294901760
    %v120 = vsub.f32 %v118, %v119
    %v121 = vand.u32 %v120, 4294901760
    %122 = vmatmul.f32.gmra.mxu0 %v121
    %v123 = vpop.f32.mrf.mxu0
    %v124 = vadd.f32 0.0, %v123
    %125 = vdwg.mxu0
    %126 = vmatpush.msra.mxu0 0.0
    %127 = vmatpush.msra.mxu0 0.0
    %128 = vmatpush.msra.mxu0 0.0
    %129 = vmatpush.msra.mxu0 0.0
    %130 = vmatpush.msra.mxu0 0.0
    %131 = vmatpush.msra.mxu0 0.0
    %132 = vmatpush.msra.mxu0 0.0
    %133 = vmatpush.msra.mxu0 0.0
    %134 = vmatpush.msra.mxu0 0.0
    %135 = vmatpush.msra.mxu0 0.0
    %136 = vmatpush.msra.mxu0 0.0
    %137 = vmatpush.msra.mxu0 0.0
    %v138 = vand.u32 %v37, 4294901760
    %v139 = vsub.f32 %v37, %v138
    %v140 = vand.u32 %v139, 4294901760
    %v141 = vsub.f32 %v139, %v140
    %v142 = vand.u32 %v141, 4294901760
    %143 = vmatpush.msra.mxu0 %v142
    %v144 = vand.u32 %v36, 4294901760
    %v145 = vsub.f32 %v36, %v144
    %v146 = vand.u32 %v145, 4294901760
    %v147 = vsub.f32 %v145, %v146
    %v148 = vand.u32 %v147, 4294901760
    %149 = vmatpush.msra.mxu0 %v148
    %v150 = vand.u32 %v35, 4294901760
    %v151 = vsub.f32 %v35, %v150
    %v152 = vand.u32 %v151, 4294901760
    %v153 = vsub.f32 %v151, %v152
    %v154 = vand.u32 %v153, 4294901760
    %155 = vmatpush.msra.mxu0 %v154
    %v156 = vand.u32 %v34, 4294901760
    %v157 = vsub.f32 %v34, %v156
    %v158 = vand.u32 %v157, 4294901760
    %v159 = vsub.f32 %v157, %v158
    %v160 = vand.u32 %v159, 4294901760
    %161 = vmatpush.msra.mxu0 %v160
    %v162 = vand.u32 %v40, 4294901760
    %163 = vmatmul.f32.gmra.mxu0 %v162
    %v164 = vpop.f32.mrf.mxu0
    %v165 = vadd.f32 %v84, %v164
    %v166 = vand.u32 %v43, 4294901760
    %167 = vmatmul.f32.gmra.mxu0 %v166
    %v168 = vpop.f32.mrf.mxu0
    %v169 = vadd.f32 %v92, %v168
    %v170 = vand.u32 %v46, 4294901760
    %171 = vmatmul.f32.gmra.mxu0 %v170
    %v172 = vpop.f32.mrf.mxu0
    %v173 = vadd.f32 %v100, %v172
    %v174 = vand.u32 %v49, 4294901760
    %175 = vmatmul.f32.gmra.mxu0 %v174
    %v176 = vpop.f32.mrf.mxu0
    %v177 = vadd.f32 %v108, %v176
    %v178 = vand.u32 %v52, 4294901760
    %179 = vmatmul.f32.gmra.mxu0 %v178
    %v180 = vpop.f32.mrf.mxu0
    %v181 = vadd.f32 %v116, %v180
    %v182 = vand.u32 %v55, 4294901760
    %183 = vmatmul.f32.gmra.mxu0 %v182
    %v184 = vpop.f32.mrf.mxu0
    %v185 = vadd.f32 %v124, %v184
    %186 = vdwg.mxu0
    %187 = vmatpush.msra.mxu0 0.0
    %188 = vmatpush.msra.mxu0 0.0
    %189 = vmatpush.msra.mxu0 0.0
    %190 = vmatpush.msra.mxu0 0.0
    %191 = vmatpush.msra.mxu0 0.0
    %192 = vmatpush.msra.mxu0 0.0
    %193 = vmatpush.msra.mxu0 0.0
    %194 = vmatpush.msra.mxu0 0.0
    %195 = vmatpush.msra.mxu0 0.0
    %196 = vmatpush.msra.mxu0 0.0
    %197 = vmatpush.msra.mxu0 0.0
    %198 = vmatpush.msra.mxu0 0.0
    %v199 = vand.u32 %v37, 4294901760
    %v200 = vsub.f32 %v37, %v199
    %201 = vmatpush.msra.mxu0 %v200
    %v202 = vand.u32 %v36, 4294901760
    %v203 = vsub.f32 %v36, %v202
    %204 = vmatpush.msra.mxu0 %v203
    %v205 = vand.u32 %v35, 4294901760
    %v206 = vsub.f32 %v35, %v205
    %207 = vmatpush.msra.mxu0 %v206
    %v208 = vand.u32 %v34, 4294901760
    %v209 = vsub.f32 %v34, %v208
    %210 = vmatpush.msra.mxu0 %v209
    %v211 = vand.u32 %v40, 4294901760
    %v212 = vsub.f32 %v40, %v211
    %213 = vmatmul.f32.gmra.mxu0 %v212
    %v214 = vpop.f32.mrf.mxu0
    %v215 = vadd.f32 %v165, %v214
    %v216 = vand.u32 %v43, 4294901760
    %v217 = vsub.f32 %v43, %v216
    %218 = vmatmul.f32.gmra.mxu0 %v217
    %v219 = vpop.f32.mrf.mxu0
    %v220 = vadd.f32 %v169, %v219
    %v221 = vand.u32 %v46, 4294901760
    %v222 = vsub.f32 %v46, %v221
    %223 = vmatmul.f32.gmra.mxu0 %v222
    %v224 = vpop.f32.mrf.mxu0
    %v225 = vadd.f32 %v173, %v224
    %v226 = vand.u32 %v49, 4294901760
    %v227 = vsub.f32 %v49, %v226
    %228 = vmatmul.f32.gmra.mxu0 %v227
    %v229 = vpop.f32.mrf.mxu0
    %v230 = vadd.f32 %v177, %v229
    %v231 = vand.u32 %v52, 4294901760
    %v232 = vsub.f32 %v52, %v231
    %233 = vmatmul.f32.gmra.mxu0 %v232
    %v234 = vpop.f32.mrf.mxu0
    %v235 = vadd.f32 %v181, %v234
    %v236 = vand.u32 %v55, 4294901760
    %v237 = vsub.f32 %v55, %v236
    %238 = vmatmul.f32.gmra.mxu0 %v237
    %v239 = vpop.f32.mrf.mxu0
    %v240 = vadd.f32 %v185, %v239
    %241 = vdwg.mxu0
    %242 = vmatpush.msra.mxu0 0.0
    %243 = vmatpush.msra.mxu0 0.0
    %244 = vmatpush.msra.mxu0 0.0
    %245 = vmatpush.msra.mxu0 0.0
    %246 = vmatpush.msra.mxu0 0.0
    %247 = vmatpush.msra.mxu0 0.0
    %248 = vmatpush.msra.mxu0 0.0
    %249 = vmatpush.msra.mxu0 0.0
    %250 = vmatpush.msra.mxu0 0.0
    %251 = vmatpush.msra.mxu0 0.0
    %252 = vmatpush.msra.mxu0 0.0
    %253 = vmatpush.msra.mxu0 0.0
    %v254 = vand.u32 %v37, 4294901760
    %255 = vmatpush.msra.mxu0 %v254
    %v256 = vand.u32 %v36, 4294901760
    %257 = vmatpush.msra.mxu0 %v256
    %v258 = vand.u32 %v35, 4294901760
    %259 = vmatpush.msra.mxu0 %v258
    %v260 = vand.u32 %v34, 4294901760
    %261 = vmatpush.msra.mxu0 %v260
    %v262 = vand.u32 %v40, 4294901760
    %v263 = vsub.f32 %v40, %v262
    %v264 = vand.u32 %v263, 4294901760
    %265 = vmatmul.f32.gmra.mxu0 %v264
    %v266 = vpop.f32.mrf.mxu0
    %v267 = vadd.f32 %v215, %v266
    %v268 = vand.u32 %v43, 4294901760
    %v269 = vsub.f32 %v43, %v268
    %v270 = vand.u32 %v269, 4294901760
    %271 = vmatmul.f32.gmra.mxu0 %v270
    %v272 = vpop.f32.mrf.mxu0
    %v273 = vadd.f32 %v220, %v272
    %v274 = vand.u32 %v46, 4294901760
    %v275 = vsub.f32 %v46, %v274
    %v276 = vand.u32 %v275, 4294901760
    %277 = vmatmul.f32.gmra.mxu0 %v276
    %v278 = vpop.f32.mrf.mxu0
    %v279 = vadd.f32 %v225, %v278
    %v280 = vand.u32 %v49, 4294901760
    %v281 = vsub.f32 %v49, %v280
    %v282 = vand.u32 %v281, 4294901760
    %283 = vmatmul.f32.gmra.mxu0 %v282
    %v284 = vpop.f32.mrf.mxu0
    %v285 = vadd.f32 %v230, %v284
    %v286 = vand.u32 %v52, 4294901760
    %v287 = vsub.f32 %v52, %v286
    %v288 = vand.u32 %v287, 4294901760
    %289 = vmatmul.f32.gmra.mxu0 %v288
    %v290 = vpop.f32.mrf.mxu0
    %v291 = vadd.f32 %v235, %v290
    %v292 = vand.u32 %v55, 4294901760
    %v293 = vsub.f32 %v55, %v292
    %v294 = vand.u32 %v293, 4294901760
    %295 = vmatmul.f32.gmra.mxu0 %v294
    %v296 = vpop.f32.mrf.mxu0
    %v297 = vadd.f32 %v240, %v296
    %298 = vdwg.mxu0
    %299 = vmatpush.msra.mxu0 0.0
    %300 = vmatpush.msra.mxu0 0.0
    %301 = vmatpush.msra.mxu0 0.0
    %302 = vmatpush.msra.mxu0 0.0
    %303 = vmatpush.msra.mxu0 0.0
    %304 = vmatpush.msra.mxu0 0.0
    %305 = vmatpush.msra.mxu0 0.0
    %306 = vmatpush.msra.mxu0 0.0
    %307 = vmatpush.msra.mxu0 0.0
    %308 = vmatpush.msra.mxu0 0.0
    %309 = vmatpush.msra.mxu0 0.0
    %310 = vmatpush.msra.mxu0 0.0
    %v311 = vand.u32 %v37, 4294901760
    %v312 = vsub.f32 %v37, %v311
    %v313 = vand.u32 %v312, 4294901760
    %314 = vmatpush.msra.mxu0 %v313
    %v315 = vand.u32 %v36, 4294901760
    %v316 = vsub.f32 %v36, %v315
    %v317 = vand.u32 %v316, 4294901760
    %318 = vmatpush.msra.mxu0 %v317
    %v319 = vand.u32 %v35, 4294901760
    %v320 = vsub.f32 %v35, %v319
    %v321 = vand.u32 %v320, 4294901760
    %322 = vmatpush.msra.mxu0 %v321
    %v323 = vand.u32 %v34, 4294901760
    %v324 = vsub.f32 %v34, %v323
    %v325 = vand.u32 %v324, 4294901760
    %326 = vmatpush.msra.mxu0 %v325
    %v327 = vand.u32 %v40, 4294901760
    %328 = vmatmul.f32.gmra.mxu0 %v327
    %v329 = vpop.f32.mrf.mxu0
    %v330 = vadd.f32 %v267, %v329
    %v331 = vand.u32 %v43, 4294901760
    %332 = vmatmul.f32.gmra.mxu0 %v331
    %v333 = vpop.f32.mrf.mxu0
    %v334 = vadd.f32 %v273, %v333
    %v335 = vand.u32 %v46, 4294901760
    %336 = vmatmul.f32.gmra.mxu0 %v335
    %v337 = vpop.f32.mrf.mxu0
    %v338 = vadd.f32 %v279, %v337
    %v339 = vand.u32 %v49, 4294901760
    %340 = vmatmul.f32.gmra.mxu0 %v339
    %v341 = vpop.f32.mrf.mxu0
    %v342 = vadd.f32 %v285, %v341
    %v343 = vand.u32 %v52, 4294901760
    %344 = vmatmul.f32.gmra.mxu0 %v343
    %v345 = vpop.f32.mrf.mxu0
    %v346 = vadd.f32 %v291, %v345
    %v347 = vand.u32 %v55, 4294901760
    %348 = vmatmul.f32.gmra.mxu0 %v347
    %v349 = vpop.f32.mrf.mxu0
    %v350 = vadd.f32 %v297, %v349
    %351 = vdwg.mxu0
    %352 = vmatpush.msra.mxu0 0.0
    %353 = vmatpush.msra.mxu0 0.0
    %354 = vmatpush.msra.mxu0 0.0
    %355 = vmatpush.msra.mxu0 0.0
    %356 = vmatpush.msra.mxu0 0.0
    %357 = vmatpush.msra.mxu0 0.0
    %358 = vmatpush.msra.mxu0 0.0
    %359 = vmatpush.msra.mxu0 0.0
    %360 = vmatpush.msra.mxu0 0.0
    %361 = vmatpush.msra.mxu0 0.0
    %362 = vmatpush.msra.mxu0 0.0
    %363 = vmatpush.msra.mxu0 0.0
    %v364 = vand.u32 %v37, 4294901760
    %365 = vmatpush.msra.mxu0 %v364
    %v366 = vand.u32 %v36, 4294901760
    %367 = vmatpush.msra.mxu0 %v366
    %v368 = vand.u32 %v35, 4294901760
    %369 = vmatpush.msra.mxu0 %v368
    %v370 = vand.u32 %v34, 4294901760
    %371 = vmatpush.msra.mxu0 %v370
    %v372 = vand.u32 %v40, 4294901760
    %373 = vmatmul.f32.gmra.mxu0 %v372
    %v374 = vpop.f32.mrf.mxu0
    %v375 = vadd.f32 %v330, %v374
    %v376 = vand.u32 %v43, 4294901760
    %377 = vmatmul.f32.gmra.mxu0 %v376
    %v378 = vpop.f32.mrf.mxu0
    %v379 = vadd.f32 %v334, %v378
    %v380 = vand.u32 %v46, 4294901760
    %381 = vmatmul.f32.gmra.mxu0 %v380
    %v382 = vpop.f32.mrf.mxu0
    %v383 = vadd.f32 %v338, %v382
    %v384 = vand.u32 %v49, 4294901760
    %385 = vmatmul.f32.gmra.mxu0 %v384
    %v386 = vpop.f32.mrf.mxu0
    %v387 = vadd.f32 %v342, %v386
    %v388 = vand.u32 %v52, 4294901760
    %389 = vmatmul.f32.gmra.mxu0 %v388
    %v390 = vpop.f32.mrf.mxu0
    %v391 = vadd.f32 %v346, %v390
    %v392 = vand.u32 %v55, 4294901760
    %393 = vmatmul.f32.gmra.mxu0 %v392
    %v394 = vpop.f32.mrf.mxu0
    %v395 = vadd.f32 %v350, %v394
    %396 = vdwg.mxu0
    %s397 = scalar_lea.vmem [#allocation2], 32
    %v398 = vld [vmem:[%s397] sm:$0xff]
    %v399 = vld [vmem:[%s397 + $0x8] sm:$0xff]
    %v400 = vld [vmem:[%s397 + $0x10] sm:$0xff]
    %v401 = vld [vmem:[%s397 + $0x18] sm:$0xff]
    %402 = vmatpush.msra.mxu0 0.0
    %403 = vmatpush.msra.mxu0 0.0
    %404 = vmatpush.msra.mxu0 0.0
    %405 = vmatpush.msra.mxu0 0.0
    %406 = vmatpush.msra.mxu0 0.0
    %407 = vmatpush.msra.mxu0 0.0
    %408 = vmatpush.msra.mxu0 0.0
    %409 = vmatpush.msra.mxu0 0.0
    %410 = vmatpush.msra.mxu0 0.0
    %411 = vmatpush.msra.mxu0 0.0
    %412 = vmatpush.msra.mxu0 0.0
    %413 = vmatpush.msra.mxu0 0.0
    %v414 = vand.u32 %v401, 4294901760
    %415 = vmatpush.msra.mxu0 %v414
    %v416 = vand.u32 %v400, 4294901760
    %417 = vmatpush.msra.mxu0 %v416
    %v418 = vand.u32 %v399, 4294901760
    %419 = vmatpush.msra.mxu0 %v418
    %v420 = vand.u32 %v398, 4294901760
    %421 = vmatpush.msra.mxu0 %v420
    %v422 = vand.u32 %v40, 4294901760
    %v423 = vsub.f32 %v40, %v422
    %v424 = vand.u32 %v423, 4294901760
    %v425 = vsub.f32 %v423, %v424
    %v426 = vand.u32 %v425, 4294901760
    %427 = vmatmul.f32.gmra.mxu0 %v426
    %v428 = vpop.f32.mrf.mxu0
    %v429 = vadd.f32 0.0, %v428
    %v430 = vand.u32 %v43, 4294901760
    %v431 = vsub.f32 %v43, %v430
    %v432 = vand.u32 %v431, 4294901760
    %v433 = vsub.f32 %v431, %v432
    %v434 = vand.u32 %v433, 4294901760
    %435 = vmatmul.f32.gmra.mxu0 %v434
    %v436 = vpop.f32.mrf.mxu0
    %v437 = vadd.f32 0.0, %v436
    %v438 = vand.u32 %v46, 4294901760
    %v439 = vsub.f32 %v46, %v438
    %v440 = vand.u32 %v439, 4294901760
    %v441 = vsub.f32 %v439, %v440
    %v442 = vand.u32 %v441, 4294901760
    %443 = vmatmul.f32.gmra.mxu0 %v442
    %v444 = vpop.f32.mrf.mxu0
    %v445 = vadd.f32 0.0, %v444
    %v446 = vand.u32 %v49, 4294901760
    %v447 = vsub.f32 %v49, %v446
    %v448 = vand.u32 %v447, 4294901760
    %v449 = vsub.f32 %v447, %v448
    %v450 = vand.u32 %v449, 4294901760
    %451 = vmatmul.f32.gmra.mxu0 %v450
    %v452 = vpop.f32.mrf.mxu0
    %v453 = vadd.f32 0.0, %v452
    %v454 = vand.u32 %v52, 4294901760
    %v455 = vsub.f32 %v52, %v454
    %v456 = vand.u32 %v455, 4294901760
    %v457 = vsub.f32 %v455, %v456
    %v458 = vand.u32 %v457, 4294901760
    %459 = vmatmul.f32.gmra.mxu0 %v458
    %v460 = vpop.f32.mrf.mxu0
    %v461 = vadd.f32 0.0, %v460
    %v462 = vand.u32 %v55, 4294901760
    %v463 = vsub.f32 %v55, %v462
    %v464 = vand.u32 %v463, 4294901760
    %v465 = vsub.f32 %v463, %v464
    %v466 = vand.u32 %v465, 4294901760
    %467 = vmatmul.f32.gmra.mxu0 %v466
    %v468 = vpop.f32.mrf.mxu0
    %v469 = vadd.f32 0.0, %v468
    %470 = vdwg.mxu0
    %471 = vmatpush.msra.mxu0 0.0
    %472 = vmatpush.msra.mxu0 0.0
    %473 = vmatpush.msra.mxu0 0.0
    %474 = vmatpush.msra.mxu0 0.0
    %475 = vmatpush.msra.mxu0 0.0
    %476 = vmatpush.msra.mxu0 0.0
    %477 = vmatpush.msra.mxu0 0.0
    %478 = vmatpush.msra.mxu0 0.0
    %479 = vmatpush.msra.mxu0 0.0
    %480 = vmatpush.msra.mxu0 0.0
    %481 = vmatpush.msra.mxu0 0.0
    %482 = vmatpush.msra.mxu0 0.0
    %v483 = vand.u32 %v401, 4294901760
    %v484 = vsub.f32 %v401, %v483
    %v485 = vand.u32 %v484, 4294901760
    %v486 = vsub.f32 %v484, %v485
    %v487 = vand.u32 %v486, 4294901760
    %488 = vmatpush.msra.mxu0 %v487
    %v489 = vand.u32 %v400, 4294901760
    %v490 = vsub.f32 %v400, %v489
    %v491 = vand.u32 %v490, 4294901760
    %v492 = vsub.f32 %v490, %v491
    %v493 = vand.u32 %v492, 4294901760
    %494 = vmatpush.msra.mxu0 %v493
    %v495 = vand.u32 %v399, 4294901760
    %v496 = vsub.f32 %v399, %v495
    %v497 = vand.u32 %v496, 4294901760
    %v498 = vsub.f32 %v496, %v497
    %v499 = vand.u32 %v498, 4294901760
    %500 = vmatpush.msra.mxu0 %v499
    %v501 = vand.u32 %v398, 4294901760
    %v502 = vsub.f32 %v398, %v501
    %v503 = vand.u32 %v502, 4294901760
    %v504 = vsub.f32 %v502, %v503
    %v505 = vand.u32 %v504, 4294901760
    %506 = vmatpush.msra.mxu0 %v505
    %v507 = vand.u32 %v40, 4294901760
    %508 = vmatmul.f32.gmra.mxu0 %v507
    %v509 = vpop.f32.mrf.mxu0
    %v510 = vadd.f32 %v429, %v509
    %v511 = vand.u32 %v43, 4294901760
    %512 = vmatmul.f32.gmra.mxu0 %v511
    %v513 = vpop.f32.mrf.mxu0
    %v514 = vadd.f32 %v437, %v513
    %v515 = vand.u32 %v46, 4294901760
    %516 = vmatmul.f32.gmra.mxu0 %v515
    %v517 = vpop.f32.mrf.mxu0
    %v518 = vadd.f32 %v445, %v517
    %v519 = vand.u32 %v49, 4294901760
    %520 = vmatmul.f32.gmra.mxu0 %v519
    %v521 = vpop.f32.mrf.mxu0
    %v522 = vadd.f32 %v453, %v521
    %v523 = vand.u32 %v52, 4294901760
    %524 = vmatmul.f32.gmra.mxu0 %v523
    %v525 = vpop.f32.mrf.mxu0
    %v526 = vadd.f32 %v461, %v525
    %v527 = vand.u32 %v55, 4294901760
    %528 = vmatmul.f32.gmra.mxu0 %v527
    %v529 = vpop.f32.mrf.mxu0
    %v530 = vadd.f32 %v469, %v529
    %531 = vdwg.mxu0
    %532 = vmatpush.msra.mxu0 0.0
    %533 = vmatpush.msra.mxu0 0.0
    %534 = vmatpush.msra.mxu0 0.0
    %535 = vmatpush.msra.mxu0 0.0
    %536 = vmatpush.msra.mxu0 0.0
    %537 = vmatpush.msra.mxu0 0.0
    %538 = vmatpush.msra.mxu0 0.0
    %539 = vmatpush.msra.mxu0 0.0
    %540 = vmatpush.msra.mxu0 0.0
    %541 = vmatpush.msra.mxu0 0.0
    %542 = vmatpush.msra.mxu0 0.0
    %543 = vmatpush.msra.mxu0 0.0
    %v544 = vand.u32 %v401, 4294901760
    %v545 = vsub.f32 %v401, %v544
    %546 = vmatpush.msra.mxu0 %v545
    %v547 = vand.u32 %v400, 4294901760
    %v548 = vsub.f32 %v400, %v547
    %549 = vmatpush.msra.mxu0 %v548
    %v550 = vand.u32 %v399, 4294901760
    %v551 = vsub.f32 %v399, %v550
    %552 = vmatpush.msra.mxu0 %v551
    %v553 = vand.u32 %v398, 4294901760
    %v554 = vsub.f32 %v398, %v553
    %555 = vmatpush.msra.mxu0 %v554
    %v556 = vand.u32 %v40, 4294901760
    %v557 = vsub.f32 %v40, %v556
    %558 = vmatmul.f32.gmra.mxu0 %v557
    %v559 = vpop.f32.mrf.mxu0
    %v560 = vadd.f32 %v510, %v559
    %v561 = vand.u32 %v43, 4294901760
    %v562 = vsub.f32 %v43, %v561
    %563 = vmatmul.f32.gmra.mxu0 %v562
    %v564 = vpop.f32.mrf.mxu0
    %v565 = vadd.f32 %v514, %v564
    %v566 = vand.u32 %v46, 4294901760
    %v567 = vsub.f32 %v46, %v566
    %568 = vmatmul.f32.gmra.mxu0 %v567
    %v569 = vpop.f32.mrf.mxu0
    %v570 = vadd.f32 %v518, %v569
    %v571 = vand.u32 %v49, 4294901760
    %v572 = vsub.f32 %v49, %v571
    %573 = vmatmul.f32.gmra.mxu0 %v572
    %v574 = vpop.f32.mrf.mxu0
    %v575 = vadd.f32 %v522, %v574
    %v576 = vand.u32 %v52, 4294901760
    %v577 = vsub.f32 %v52, %v576
    %578 = vmatmul.f32.gmra.mxu0 %v577
    %v579 = vpop.f32.mrf.mxu0
    %v580 = vadd.f32 %v526, %v579
    %v581 = vand.u32 %v55, 4294901760
    %v582 = vsub.f32 %v55, %v581
    %583 = vmatmul.f32.gmra.mxu0 %v582
    %v584 = vpop.f32.mrf.mxu0
    %v585 = vadd.f32 %v530, %v584
    %586 = vdwg.mxu0
    %587 = vmatpush.msra.mxu0 0.0
    %588 = vmatpush.msra.mxu0 0.0
    %589 = vmatpush.msra.mxu0 0.0
    %590 = vmatpush.msra.mxu0 0.0
    %591 = vmatpush.msra.mxu0 0.0
    %592 = vmatpush.msra.mxu0 0.0
    %593 = vmatpush.msra.mxu0 0.0
    %594 = vmatpush.msra.mxu0 0.0
    %595 = vmatpush.msra.mxu0 0.0
    %596 = vmatpush.msra.mxu0 0.0
    %597 = vmatpush.msra.mxu0 0.0
    %598 = vmatpush.msra.mxu0 0.0
    %v599 = vand.u32 %v401, 4294901760
    %600 = vmatpush.msra.mxu0 %v599
    %v601 = vand.u32 %v400, 4294901760
    %602 = vmatpush.msra.mxu0 %v601
    %v603 = vand.u32 %v399, 4294901760
    %604 = vmatpush.msra.mxu0 %v603
    %v605 = vand.u32 %v398, 4294901760
    %606 = vmatpush.msra.mxu0 %v605
    %v607 = vand.u32 %v40, 4294901760
    %v608 = vsub.f32 %v40, %v607
    %v609 = vand.u32 %v608, 4294901760
    %610 = vmatmul.f32.gmra.mxu0 %v609
    %v611 = vpop.f32.mrf.mxu0
    %v612 = vadd.f32 %v560, %v611
    %v613 = vand.u32 %v43, 4294901760
    %v614 = vsub.f32 %v43, %v613
    %v615 = vand.u32 %v614, 4294901760
    %616 = vmatmul.f32.gmra.mxu0 %v615
    %v617 = vpop.f32.mrf.mxu0
    %v618 = vadd.f32 %v565, %v617
    %v619 = vand.u32 %v46, 4294901760
    %v620 = vsub.f32 %v46, %v619
    %v621 = vand.u32 %v620, 4294901760
    %622 = vmatmul.f32.gmra.mxu0 %v621
    %v623 = vpop.f32.mrf.mxu0
    %v624 = vadd.f32 %v570, %v623
    %v625 = vand.u32 %v49, 4294901760
    %v626 = vsub.f32 %v49, %v625
    %v627 = vand.u32 %v626, 4294901760
    %628 = vmatmul.f32.gmra.mxu0 %v627
    %v629 = vpop.f32.mrf.mxu0
    %v630 = vadd.f32 %v575, %v629
    %v631 = vand.u32 %v52, 4294901760
    %v632 = vsub.f32 %v52, %v631
    %v633 = vand.u32 %v632, 4294901760
    %634 = vmatmul.f32.gmra.mxu0 %v633
    %v635 = vpop.f32.mrf.mxu0
    %v636 = vadd.f32 %v580, %v635
    %v637 = vand.u32 %v55, 4294901760
    %v638 = vsub.f32 %v55, %v637
    %v639 = vand.u32 %v638, 4294901760
    %640 = vmatmul.f32.gmra.mxu0 %v639
    %v641 = vpop.f32.mrf.mxu0
    %v642 = vadd.f32 %v585, %v641
    %643 = vdwg.mxu0
    %644 = vmatpush.msra.mxu0 0.0
    %645 = vmatpush.msra.mxu0 0.0
    %646 = vmatpush.msra.mxu0 0.0
    %647 = vmatpush.msra.mxu0 0.0
    %648 = vmatpush.msra.mxu0 0.0
    %649 = vmatpush.msra.mxu0 0.0
    %650 = vmatpush.msra.mxu0 0.0
    %651 = vmatpush.msra.mxu0 0.0
    %652 = vmatpush.msra.mxu0 0.0
    %653 = vmatpush.msra.mxu0 0.0
    %654 = vmatpush.msra.mxu0 0.0
    %655 = vmatpush.msra.mxu0 0.0
    %v656 = vand.u32 %v401, 4294901760
    %v657 = vsub.f32 %v401, %v656
    %v658 = vand.u32 %v657, 4294901760
    %659 = vmatpush.msra.mxu0 %v658
    %v660 = vand.u32 %v400, 4294901760
    %v661 = vsub.f32 %v400, %v660
    %v662 = vand.u32 %v661, 4294901760
    %663 = vmatpush.msra.mxu0 %v662
    %v664 = vand.u32 %v399, 4294901760
    %v665 = vsub.f32 %v399, %v664
    %v666 = vand.u32 %v665, 4294901760
    %667 = vmatpush.msra.mxu0 %v666
    %v668 = vand.u32 %v398, 4294901760
    %v669 = vsub.f32 %v398, %v668
    %v670 = vand.u32 %v669, 4294901760
    %671 = vmatpush.msra.mxu0 %v670
    %v672 = vand.u32 %v40, 4294901760
    %673 = vmatmul.f32.gmra.mxu0 %v672
    %v674 = vpop.f32.mrf.mxu0
    %v675 = vadd.f32 %v612, %v674
    %v676 = vand.u32 %v43, 4294901760
    %677 = vmatmul.f32.gmra.mxu0 %v676
    %v678 = vpop.f32.mrf.mxu0
    %v679 = vadd.f32 %v618, %v678
    %v680 = vand.u32 %v46, 4294901760
    %681 = vmatmul.f32.gmra.mxu0 %v680
    %v682 = vpop.f32.mrf.mxu0
    %v683 = vadd.f32 %v624, %v682
    %v684 = vand.u32 %v49, 4294901760
    %685 = vmatmul.f32.gmra.mxu0 %v684
    %v686 = vpop.f32.mrf.mxu0
    %v687 = vadd.f32 %v630, %v686
    %v688 = vand.u32 %v52, 4294901760
    %689 = vmatmul.f32.gmra.mxu0 %v688
    %v690 = vpop.f32.mrf.mxu0
    %v691 = vadd.f32 %v636, %v690
    %v692 = vand.u32 %v55, 4294901760
    %693 = vmatmul.f32.gmra.mxu0 %v692
    %v694 = vpop.f32.mrf.mxu0
    %v695 = vadd.f32 %v642, %v694
    %696 = vdwg.mxu0
    %697 = vmatpush.msra.mxu0 0.0
    %698 = vmatpush.msra.mxu0 0.0
    %699 = vmatpush.msra.mxu0 0.0
    %700 = vmatpush.msra.mxu0 0.0
    %701 = vmatpush.msra.mxu0 0.0
    %702 = vmatpush.msra.mxu0 0.0
    %703 = vmatpush.msra.mxu0 0.0
    %704 = vmatpush.msra.mxu0 0.0
    %705 = vmatpush.msra.mxu0 0.0
    %706 = vmatpush.msra.mxu0 0.0
    %707 = vmatpush.msra.mxu0 0.0
    %708 = vmatpush.msra.mxu0 0.0
    %v709 = vand.u32 %v401, 4294901760
    %710 = vmatpush.msra.mxu0 %v709
    %v711 = vand.u32 %v400, 4294901760
    %712 = vmatpush.msra.mxu0 %v711
    %v713 = vand.u32 %v399, 4294901760
    %714 = vmatpush.msra.mxu0 %v713
    %v715 = vand.u32 %v398, 4294901760
    %716 = vmatpush.msra.mxu0 %v715
    %v717 = vand.u32 %v40, 4294901760
    %718 = vmatmul.f32.gmra.mxu0 %v717
    %v719 = vpop.f32.mrf.mxu0
    %v720 = vadd.f32 %v675, %v719
    %v721 = vand.u32 %v43, 4294901760
    %722 = vmatmul.f32.gmra.mxu0 %v721
    %v723 = vpop.f32.mrf.mxu0
    %v724 = vadd.f32 %v679, %v723
    %v725 = vand.u32 %v46, 4294901760
    %726 = vmatmul.f32.gmra.mxu0 %v725
    %v727 = vpop.f32.mrf.mxu0
    %v728 = vadd.f32 %v683, %v727
    %v729 = vand.u32 %v49, 4294901760
    %730 = vmatmul.f32.gmra.mxu0 %v729
    %v731 = vpop.f32.mrf.mxu0
    %v732 = vadd.f32 %v687, %v731
    %v733 = vand.u32 %v52, 4294901760
    %734 = vmatmul.f32.gmra.mxu0 %v733
    %v735 = vpop.f32.mrf.mxu0
    %v736 = vadd.f32 %v691, %v735
    %v737 = vand.u32 %v55, 4294901760
    %738 = vmatmul.f32.gmra.mxu0 %v737
    %v739 = vpop.f32.mrf.mxu0
    %v740 = vadd.f32 %v695, %v739
    %741 = vdwg.mxu0
    %s742 = scalar_lea.vmem [#allocation2], 64
    %v743 = vld [vmem:[%s742] sm:$0xff]
    %v744 = vld [vmem:[%s742 + $0x8] sm:$0xff]
    %v745 = vld [vmem:[%s742 + $0x10] sm:$0xff]
    %v746 = vld [vmem:[%s742 + $0x18] sm:$0xff]
    %747 = vmatpush.msra.mxu0 0.0
    %748 = vmatpush.msra.mxu0 0.0
    %749 = vmatpush.msra.mxu0 0.0
    %750 = vmatpush.msra.mxu0 0.0
    %751 = vmatpush.msra.mxu0 0.0
    %752 = vmatpush.msra.mxu0 0.0
    %753 = vmatpush.msra.mxu0 0.0
    %754 = vmatpush.msra.mxu0 0.0
    %755 = vmatpush.msra.mxu0 0.0
    %756 = vmatpush.msra.mxu0 0.0
    %757 = vmatpush.msra.mxu0 0.0
    %758 = vmatpush.msra.mxu0 0.0
    %v759 = vand.u32 %v746, 4294901760
    %760 = vmatpush.msra.mxu0 %v759
    %v761 = vand.u32 %v745, 4294901760
    %762 = vmatpush.msra.mxu0 %v761
    %v763 = vand.u32 %v744, 4294901760
    %764 = vmatpush.msra.mxu0 %v763
    %v765 = vand.u32 %v743, 4294901760
    %766 = vmatpush.msra.mxu0 %v765
    %v767 = vand.u32 %v40, 4294901760
    %v768 = vsub.f32 %v40, %v767
    %v769 = vand.u32 %v768, 4294901760
    %v770 = vsub.f32 %v768, %v769
    %v771 = vand.u32 %v770, 4294901760
    %772 = vmatmul.f32.gmra.mxu0 %v771
    %v773 = vpop.f32.mrf.mxu0
    %v774 = vadd.f32 0.0, %v773
    %v775 = vand.u32 %v43, 4294901760
    %v776 = vsub.f32 %v43, %v775
    %v777 = vand.u32 %v776, 4294901760
    %v778 = vsub.f32 %v776, %v777
    %v779 = vand.u32 %v778, 4294901760
    %780 = vmatmul.f32.gmra.mxu0 %v779
    %v781 = vpop.f32.mrf.mxu0
    %v782 = vadd.f32 0.0, %v781
    %v783 = vand.u32 %v46, 4294901760
    %v784 = vsub.f32 %v46, %v783
    %v785 = vand.u32 %v784, 4294901760
    %v786 = vsub.f32 %v784, %v785
    %v787 = vand.u32 %v786, 4294901760
    %788 = vmatmul.f32.gmra.mxu0 %v787
    %v789 = vpop.f32.mrf.mxu0
    %v790 = vadd.f32 0.0, %v789
    %v791 = vand.u32 %v49, 4294901760
    %v792 = vsub.f32 %v49, %v791
    %v793 = vand.u32 %v792, 4294901760
    %v794 = vsub.f32 %v792, %v793
    %v795 = vand.u32 %v794, 4294901760
    %796 = vmatmul.f32.gmra.mxu0 %v795
    %v797 = vpop.f32.mrf.mxu0
    %v798 = vadd.f32 0.0, %v797
    %v799 = vand.u32 %v52, 4294901760
    %v800 = vsub.f32 %v52, %v799
    %v801 = vand.u32 %v800, 4294901760
    %v802 = vsub.f32 %v800, %v801
    %v803 = vand.u32 %v802, 4294901760
    %804 = vmatmul.f32.gmra.mxu0 %v803
    %v805 = vpop.f32.mrf.mxu0
    %v806 = vadd.f32 0.0, %v805
    %v807 = vand.u32 %v55, 4294901760
    %v808 = vsub.f32 %v55, %v807
    %v809 = vand.u32 %v808, 4294901760
    %v810 = vsub.f32 %v808, %v809
    %v811 = vand.u32 %v810, 4294901760
    %812 = vmatmul.f32.gmra.mxu0 %v811
    %v813 = vpop.f32.mrf.mxu0
    %v814 = vadd.f32 0.0, %v813
    %815 = vdwg.mxu0
    %816 = vmatpush.msra.mxu0 0.0
    %817 = vmatpush.msra.mxu0 0.0
    %818 = vmatpush.msra.mxu0 0.0
    %819 = vmatpush.msra.mxu0 0.0
    %820 = vmatpush.msra.mxu0 0.0
    %821 = vmatpush.msra.mxu0 0.0
    %822 = vmatpush.msra.mxu0 0.0
    %823 = vmatpush.msra.mxu0 0.0
    %824 = vmatpush.msra.mxu0 0.0
    %825 = vmatpush.msra.mxu0 0.0
    %826 = vmatpush.msra.mxu0 0.0
    %827 = vmatpush.msra.mxu0 0.0
    %v828 = vand.u32 %v746, 4294901760
    %v829 = vsub.f32 %v746, %v828
    %v830 = vand.u32 %v829, 4294901760
    %v831 = vsub.f32 %v829, %v830
    %v832 = vand.u32 %v831, 4294901760
    %833 = vmatpush.msra.mxu0 %v832
    %v834 = vand.u32 %v745, 4294901760
    %v835 = vsub.f32 %v745, %v834
    %v836 = vand.u32 %v835, 4294901760
    %v837 = vsub.f32 %v835, %v836
    %v838 = vand.u32 %v837, 4294901760
    %839 = vmatpush.msra.mxu0 %v838
    %v840 = vand.u32 %v744, 4294901760
    %v841 = vsub.f32 %v744, %v840
    %v842 = vand.u32 %v841, 4294901760
    %v843 = vsub.f32 %v841, %v842
    %v844 = vand.u32 %v843, 4294901760
    %845 = vmatpush.msra.mxu0 %v844
    %v846 = vand.u32 %v743, 4294901760
    %v847 = vsub.f32 %v743, %v846
    %v848 = vand.u32 %v847, 4294901760
    %v849 = vsub.f32 %v847, %v848
    %v850 = vand.u32 %v849, 4294901760
    %851 = vmatpush.msra.mxu0 %v850
    %v852 = vand.u32 %v40, 4294901760
    %853 = vmatmul.f32.gmra.mxu0 %v852
    %v854 = vpop.f32.mrf.mxu0
    %v855 = vadd.f32 %v774, %v854
    %v856 = vand.u32 %v43, 4294901760
    %857 = vmatmul.f32.gmra.mxu0 %v856
    %v858 = vpop.f32.mrf.mxu0
    %v859 = vadd.f32 %v782, %v858
    %v860 = vand.u32 %v46, 4294901760
    %861 = vmatmul.f32.gmra.mxu0 %v860
    %v862 = vpop.f32.mrf.mxu0
    %v863 = vadd.f32 %v790, %v862
    %v864 = vand.u32 %v49, 4294901760
    %865 = vmatmul.f32.gmra.mxu0 %v864
    %v866 = vpop.f32.mrf.mxu0
    %v867 = vadd.f32 %v798, %v866
    %v868 = vand.u32 %v52, 4294901760
    %869 = vmatmul.f32.gmra.mxu0 %v868
    %v870 = vpop.f32.mrf.mxu0
    %v871 = vadd.f32 %v806, %v870
    %v872 = vand.u32 %v55, 4294901760
    %873 = vmatmul.f32.gmra.mxu0 %v872
    %v874 = vpop.f32.mrf.mxu0
    %v875 = vadd.f32 %v814, %v874
    %876 = vdwg.mxu0
    %877 = vmatpush.msra.mxu0 0.0
    %878 = vmatpush.msra.mxu0 0.0
    %879 = vmatpush.msra.mxu0 0.0
    %880 = vmatpush.msra.mxu0 0.0
    %881 = vmatpush.msra.mxu0 0.0
    %882 = vmatpush.msra.mxu0 0.0
    %883 = vmatpush.msra.mxu0 0.0
    %884 = vmatpush.msra.mxu0 0.0
    %885 = vmatpush.msra.mxu0 0.0
    %886 = vmatpush.msra.mxu0 0.0
    %887 = vmatpush.msra.mxu0 0.0
    %888 = vmatpush.msra.mxu0 0.0
    %v889 = vand.u32 %v746, 4294901760
    %v890 = vsub.f32 %v746, %v889
    %891 = vmatpush.msra.mxu0 %v890
    %v892 = vand.u32 %v745, 4294901760
    %v893 = vsub.f32 %v745, %v892
    %894 = vmatpush.msra.mxu0 %v893
    %v895 = vand.u32 %v744, 4294901760
    %v896 = vsub.f32 %v744, %v895
    %897 = vmatpush.msra.mxu0 %v896
    %v898 = vand.u32 %v743, 4294901760
    %v899 = vsub.f32 %v743, %v898
    %900 = vmatpush.msra.mxu0 %v899
    %v901 = vand.u32 %v40, 4294901760
    %v902 = vsub.f32 %v40, %v901
    %903 = vmatmul.f32.gmra.mxu0 %v902
    %v904 = vpop.f32.mrf.mxu0
    %v905 = vadd.f32 %v855, %v904
    %v906 = vand.u32 %v43, 4294901760
    %v907 = vsub.f32 %v43, %v906
    %908 = vmatmul.f32.gmra.mxu0 %v907
    %v909 = vpop.f32.mrf.mxu0
    %v910 = vadd.f32 %v859, %v909
    %v911 = vand.u32 %v46, 4294901760
    %v912 = vsub.f32 %v46, %v911
    %913 = vmatmul.f32.gmra.mxu0 %v912
    %v914 = vpop.f32.mrf.mxu0
    %v915 = vadd.f32 %v863, %v914
    %v916 = vand.u32 %v49, 4294901760
    %v917 = vsub.f32 %v49, %v916
    %918 = vmatmul.f32.gmra.mxu0 %v917
    %v919 = vpop.f32.mrf.mxu0
    %v920 = vadd.f32 %v867, %v919
    %v921 = vand.u32 %v52, 4294901760
    %v922 = vsub.f32 %v52, %v921
    %923 = vmatmul.f32.gmra.mxu0 %v922
    %v924 = vpop.f32.mrf.mxu0
    %v925 = vadd.f32 %v871, %v924
    %v926 = vand.u32 %v55, 4294901760
    %v927 = vsub.f32 %v55, %v926
    %928 = vmatmul.f32.gmra.mxu0 %v927
    %v929 = vpop.f32.mrf.mxu0
    %v930 = vadd.f32 %v875, %v929
    %931 = vdwg.mxu0
    %932 = vmatpush.msra.mxu0 0.0
    %933 = vmatpush.msra.mxu0 0.0
    %934 = vmatpush.msra.mxu0 0.0
    %935 = vmatpush.msra.mxu0 0.0
    %936 = vmatpush.msra.mxu0 0.0
    %937 = vmatpush.msra.mxu0 0.0
    %938 = vmatpush.msra.mxu0 0.0
    %939 = vmatpush.msra.mxu0 0.0
    %940 = vmatpush.msra.mxu0 0.0
    %941 = vmatpush.msra.mxu0 0.0
    %942 = vmatpush.msra.mxu0 0.0
    %943 = vmatpush.msra.mxu0 0.0
    %v944 = vand.u32 %v746, 4294901760
    %945 = vmatpush.msra.mxu0 %v944
    %v946 = vand.u32 %v745, 4294901760
    %947 = vmatpush.msra.mxu0 %v946
    %v948 = vand.u32 %v744, 4294901760
    %949 = vmatpush.msra.mxu0 %v948
    %v950 = vand.u32 %v743, 4294901760
    %951 = vmatpush.msra.mxu0 %v950
    %v952 = vand.u32 %v40, 4294901760
    %v953 = vsub.f32 %v40, %v952
    %v954 = vand.u32 %v953, 4294901760
    %955 = vmatmul.f32.gmra.mxu0 %v954
    %v956 = vpop.f32.mrf.mxu0
    %v957 = vadd.f32 %v905, %v956
    %v958 = vand.u32 %v43, 4294901760
    %v959 = vsub.f32 %v43, %v958
    %v960 = vand.u32 %v959, 4294901760
    %961 = vmatmul.f32.gmra.mxu0 %v960
    %v962 = vpop.f32.mrf.mxu0
    %v963 = vadd.f32 %v910, %v962
    %v964 = vand.u32 %v46, 4294901760
    %v965 = vsub.f32 %v46, %v964
    %v966 = vand.u32 %v965, 4294901760
    %967 = vmatmul.f32.gmra.mxu0 %v966
    %v968 = vpop.f32.mrf.mxu0
    %v969 = vadd.f32 %v915, %v968
    %v970 = vand.u32 %v49, 4294901760
    %v971 = vsub.f32 %v49, %v970
    %v972 = vand.u32 %v971, 4294901760
    %973 = vmatmul.f32.gmra.mxu0 %v972
    %v974 = vpop.f32.mrf.mxu0
    %v975 = vadd.f32 %v920, %v974
    %v976 = vand.u32 %v52, 4294901760
    %v977 = vsub.f32 %v52, %v976
    %v978 = vand.u32 %v977, 4294901760
    %979 = vmatmul.f32.gmra.mxu0 %v978
    %v980 = vpop.f32.mrf.mxu0
    %v981 = vadd.f32 %v925, %v980
    %v982 = vand.u32 %v55, 4294901760
    %v983 = vsub.f32 %v55, %v982
    %v984 = vand.u32 %v983, 4294901760
    %985 = vmatmul.f32.gmra.mxu0 %v984
    %v986 = vpop.f32.mrf.mxu0
    %v987 = vadd.f32 %v930, %v986
    %988 = vdwg.mxu0
    %989 = vmatpush.msra.mxu0 0.0
    %990 = vmatpush.msra.mxu0 0.0
    %991 = vmatpush.msra.mxu0 0.0
    %992 = vmatpush.msra.mxu0 0.0
    %993 = vmatpush.msra.mxu0 0.0
    %994 = vmatpush.msra.mxu0 0.0
    %995 = vmatpush.msra.mxu0 0.0
    %996 = vmatpush.msra.mxu0 0.0
    %997 = vmatpush.msra.mxu0 0.0
    %998 = vmatpush.msra.mxu0 0.0
    %999 = vmatpush.msra.mxu0 0.0
    %1000 = vmatpush.msra.mxu0 0.0
    %v1001 = vand.u32 %v746, 4294901760
    %v1002 = vsub.f32 %v746, %v1001
    %v1003 = vand.u32 %v1002, 4294901760
    %1004 = vmatpush.msra.mxu0 %v1003
    %v1005 = vand.u32 %v745, 4294901760
    %v1006 = vsub.f32 %v745, %v1005
    %v1007 = vand.u32 %v1006, 4294901760
    %1008 = vmatpush.msra.mxu0 %v1007
    %v1009 = vand.u32 %v744, 4294901760
    %v1010 = vsub.f32 %v744, %v1009
    %v1011 = vand.u32 %v1010, 4294901760
    %1012 = vmatpush.msra.mxu0 %v1011
    %v1013 = vand.u32 %v743, 4294901760
    %v1014 = vsub.f32 %v743, %v1013
    %v1015 = vand.u32 %v1014, 4294901760
    %1016 = vmatpush.msra.mxu0 %v1015
    %v1017 = vand.u32 %v40, 4294901760
    %1018 = vmatmul.f32.gmra.mxu0 %v1017
    %v1019 = vpop.f32.mrf.mxu0
    %v1020 = vadd.f32 %v957, %v1019
    %v1021 = vand.u32 %v43, 4294901760
    %1022 = vmatmul.f32.gmra.mxu0 %v1021
    %v1023 = vpop.f32.mrf.mxu0
    %v1024 = vadd.f32 %v963, %v1023
    %v1025 = vand.u32 %v46, 4294901760
    %1026 = vmatmul.f32.gmra.mxu0 %v1025
    %v1027 = vpop.f32.mrf.mxu0
    %v1028 = vadd.f32 %v969, %v1027
    %v1029 = vand.u32 %v49, 4294901760
    %1030 = vmatmul.f32.gmra.mxu0 %v1029
    %v1031 = vpop.f32.mrf.mxu0
    %v1032 = vadd.f32 %v975, %v1031
    %v1033 = vand.u32 %v52, 4294901760
    %1034 = vmatmul.f32.gmra.mxu0 %v1033
    %v1035 = vpop.f32.mrf.mxu0
    %v1036 = vadd.f32 %v981, %v1035
    %v1037 = vand.u32 %v55, 4294901760
    %1038 = vmatmul.f32.gmra.mxu0 %v1037
    %v1039 = vpop.f32.mrf.mxu0
    %v1040 = vadd.f32 %v987, %v1039
    %1041 = vdwg.mxu0
    %1042 = vmatpush.msra.mxu0 0.0
    %1043 = vmatpush.msra.mxu0 0.0
    %1044 = vmatpush.msra.mxu0 0.0
    %1045 = vmatpush.msra.mxu0 0.0
    %1046 = vmatpush.msra.mxu0 0.0
    %1047 = vmatpush.msra.mxu0 0.0
    %1048 = vmatpush.msra.mxu0 0.0
    %1049 = vmatpush.msra.mxu0 0.0
    %1050 = vmatpush.msra.mxu0 0.0
    %1051 = vmatpush.msra.mxu0 0.0
    %1052 = vmatpush.msra.mxu0 0.0
    %1053 = vmatpush.msra.mxu0 0.0
    %v1054 = vand.u32 %v746, 4294901760
    %1055 = vmatpush.msra.mxu0 %v1054
    %v1056 = vand.u32 %v745, 4294901760
    %1057 = vmatpush.msra.mxu0 %v1056
    %v1058 = vand.u32 %v744, 4294901760
    %1059 = vmatpush.msra.mxu0 %v1058
    %v1060 = vand.u32 %v743, 4294901760
    %1061 = vmatpush.msra.mxu0 %v1060
    %v1062 = vand.u32 %v40, 4294901760
    %1063 = vmatmul.f32.gmra.mxu0 %v1062
    %v1064 = vpop.f32.mrf.mxu0
    %v1065 = vadd.f32 %v1020, %v1064
    %v1066 = vand.u32 %v43, 4294901760
    %1067 = vmatmul.f32.gmra.mxu0 %v1066
    %v1068 = vpop.f32.mrf.mxu0
    %v1069 = vadd.f32 %v1024, %v1068
    %v1070 = vand.u32 %v46, 4294901760
    %1071 = vmatmul.f32.gmra.mxu0 %v1070
    %v1072 = vpop.f32.mrf.mxu0
    %v1073 = vadd.f32 %v1028, %v1072
    %v1074 = vand.u32 %v49, 4294901760
    %1075 = vmatmul.f32.gmra.mxu0 %v1074
    %v1076 = vpop.f32.mrf.mxu0
    %v1077 = vadd.f32 %v1032, %v1076
    %v1078 = vand.u32 %v52, 4294901760
    %1079 = vmatmul.f32.gmra.mxu0 %v1078
    %v1080 = vpop.f32.mrf.mxu0
    %v1081 = vadd.f32 %v1036, %v1080
    %v1082 = vand.u32 %v55, 4294901760
    %1083 = vmatmul.f32.gmra.mxu0 %v1082
    %v1084 = vpop.f32.mrf.mxu0
    %v1085 = vadd.f32 %v1040, %v1084
    %1086 = vdwg.mxu0
    %s1087 = scalar_lea.vmem [#allocation2], 96
    %v1088 = vld [vmem:[%s1087] sm:$0xff]
    %v1089 = vld [vmem:[%s1087 + $0x8] sm:$0xff]
    %v1090 = vld [vmem:[%s1087 + $0x10] sm:$0xff]
    %v1091 = vld [vmem:[%s1087 + $0x18] sm:$0xff]
    %1092 = vmatpush.msra.mxu0 0.0
    %1093 = vmatpush.msra.mxu0 0.0
    %1094 = vmatpush.msra.mxu0 0.0
    %1095 = vmatpush.msra.mxu0 0.0
    %1096 = vmatpush.msra.mxu0 0.0
    %1097 = vmatpush.msra.mxu0 0.0
    %1098 = vmatpush.msra.mxu0 0.0
    %1099 = vmatpush.msra.mxu0 0.0
    %1100 = vmatpush.msra.mxu0 0.0
    %1101 = vmatpush.msra.mxu0 0.0
    %1102 = vmatpush.msra.mxu0 0.0
    %1103 = vmatpush.msra.mxu0 0.0
    %v1104 = vand.u32 %v1091, 4294901760
    %1105 = vmatpush.msra.mxu0 %v1104
    %v1106 = vand.u32 %v1090, 4294901760
    %1107 = vmatpush.msra.mxu0 %v1106
    %v1108 = vand.u32 %v1089, 4294901760
    %1109 = vmatpush.msra.mxu0 %v1108
    %v1110 = vand.u32 %v1088, 4294901760
    %1111 = vmatpush.msra.mxu0 %v1110
    %v1112 = vand.u32 %v40, 4294901760
    %v1113 = vsub.f32 %v40, %v1112
    %v1114 = vand.u32 %v1113, 4294901760
    %v1115 = vsub.f32 %v1113, %v1114
    %v1116 = vand.u32 %v1115, 4294901760
    %1117 = vmatmul.f32.gmra.mxu0 %v1116
    %v1118 = vpop.f32.mrf.mxu0
    %v1119 = vadd.f32 0.0, %v1118
    %v1120 = vand.u32 %v43, 4294901760
    %v1121 = vsub.f32 %v43, %v1120
    %v1122 = vand.u32 %v1121, 4294901760
    %v1123 = vsub.f32 %v1121, %v1122
    %v1124 = vand.u32 %v1123, 4294901760
    %1125 = vmatmul.f32.gmra.mxu0 %v1124
    %v1126 = vpop.f32.mrf.mxu0
    %v1127 = vadd.f32 0.0, %v1126
    %v1128 = vand.u32 %v46, 4294901760
    %v1129 = vsub.f32 %v46, %v1128
    %v1130 = vand.u32 %v1129, 4294901760
    %v1131 = vsub.f32 %v1129, %v1130
    %v1132 = vand.u32 %v1131, 4294901760
    %1133 = vmatmul.f32.gmra.mxu0 %v1132
    %v1134 = vpop.f32.mrf.mxu0
    %v1135 = vadd.f32 0.0, %v1134
    %v1136 = vand.u32 %v49, 4294901760
    %v1137 = vsub.f32 %v49, %v1136
    %v1138 = vand.u32 %v1137, 4294901760
    %v1139 = vsub.f32 %v1137, %v1138
    %v1140 = vand.u32 %v1139, 4294901760
    %1141 = vmatmul.f32.gmra.mxu0 %v1140
    %v1142 = vpop.f32.mrf.mxu0
    %v1143 = vadd.f32 0.0, %v1142
    %v1144 = vand.u32 %v52, 4294901760
    %v1145 = vsub.f32 %v52, %v1144
    %v1146 = vand.u32 %v1145, 4294901760
    %v1147 = vsub.f32 %v1145, %v1146
    %v1148 = vand.u32 %v1147, 4294901760
    %1149 = vmatmul.f32.gmra.mxu0 %v1148
    %v1150 = vpop.f32.mrf.mxu0
    %v1151 = vadd.f32 0.0, %v1150
    %v1152 = vand.u32 %v55, 4294901760
    %v1153 = vsub.f32 %v55, %v1152
    %v1154 = vand.u32 %v1153, 4294901760
    %v1155 = vsub.f32 %v1153, %v1154
    %v1156 = vand.u32 %v1155, 4294901760
    %1157 = vmatmul.f32.gmra.mxu0 %v1156
    %v1158 = vpop.f32.mrf.mxu0
    %v1159 = vadd.f32 0.0, %v1158
    %1160 = vdwg.mxu0
    %1161 = vmatpush.msra.mxu0 0.0
    %1162 = vmatpush.msra.mxu0 0.0
    %1163 = vmatpush.msra.mxu0 0.0
    %1164 = vmatpush.msra.mxu0 0.0
    %1165 = vmatpush.msra.mxu0 0.0
    %1166 = vmatpush.msra.mxu0 0.0
    %1167 = vmatpush.msra.mxu0 0.0
    %1168 = vmatpush.msra.mxu0 0.0
    %1169 = vmatpush.msra.mxu0 0.0
    %1170 = vmatpush.msra.mxu0 0.0
    %1171 = vmatpush.msra.mxu0 0.0
    %1172 = vmatpush.msra.mxu0 0.0
    %v1173 = vand.u32 %v1091, 4294901760
    %v1174 = vsub.f32 %v1091, %v1173
    %v1175 = vand.u32 %v1174, 4294901760
    %v1176 = vsub.f32 %v1174, %v1175
    %v1177 = vand.u32 %v1176, 4294901760
    %1178 = vmatpush.msra.mxu0 %v1177
    %v1179 = vand.u32 %v1090, 4294901760
    %v1180 = vsub.f32 %v1090, %v1179
    %v1181 = vand.u32 %v1180, 4294901760
    %v1182 = vsub.f32 %v1180, %v1181
    %v1183 = vand.u32 %v1182, 4294901760
    %1184 = vmatpush.msra.mxu0 %v1183
    %v1185 = vand.u32 %v1089, 4294901760
    %v1186 = vsub.f32 %v1089, %v1185
    %v1187 = vand.u32 %v1186, 4294901760
    %v1188 = vsub.f32 %v1186, %v1187
    %v1189 = vand.u32 %v1188, 4294901760
    %1190 = vmatpush.msra.mxu0 %v1189
    %v1191 = vand.u32 %v1088, 4294901760
    %v1192 = vsub.f32 %v1088, %v1191
    %v1193 = vand.u32 %v1192, 4294901760
    %v1194 = vsub.f32 %v1192, %v1193
    %v1195 = vand.u32 %v1194, 4294901760
    %1196 = vmatpush.msra.mxu0 %v1195
    %v1197 = vand.u32 %v40, 4294901760
    %1198 = vmatmul.f32.gmra.mxu0 %v1197
    %v1199 = vpop.f32.mrf.mxu0
    %v1200 = vadd.f32 %v1119, %v1199
    %v1201 = vand.u32 %v43, 4294901760
    %1202 = vmatmul.f32.gmra.mxu0 %v1201
    %v1203 = vpop.f32.mrf.mxu0
    %v1204 = vadd.f32 %v1127, %v1203
    %v1205 = vand.u32 %v46, 4294901760
    %1206 = vmatmul.f32.gmra.mxu0 %v1205
    %v1207 = vpop.f32.mrf.mxu0
    %v1208 = vadd.f32 %v1135, %v1207
    %v1209 = vand.u32 %v49, 4294901760
    %1210 = vmatmul.f32.gmra.mxu0 %v1209
    %v1211 = vpop.f32.mrf.mxu0
    %v1212 = vadd.f32 %v1143, %v1211
    %v1213 = vand.u32 %v52, 4294901760
    %1214 = vmatmul.f32.gmra.mxu0 %v1213
    %v1215 = vpop.f32.mrf.mxu0
    %v1216 = vadd.f32 %v1151, %v1215
    %v1217 = vand.u32 %v55, 4294901760
    %1218 = vmatmul.f32.gmra.mxu0 %v1217
    %v1219 = vpop.f32.mrf.mxu0
    %v1220 = vadd.f32 %v1159, %v1219
    %1221 = vdwg.mxu0
    %1222 = vmatpush.msra.mxu0 0.0
    %1223 = vmatpush.msra.mxu0 0.0
    %1224 = vmatpush.msra.mxu0 0.0
    %1225 = vmatpush.msra.mxu0 0.0
    %1226 = vmatpush.msra.mxu0 0.0
    %1227 = vmatpush.msra.mxu0 0.0
    %1228 = vmatpush.msra.mxu0 0.0
    %1229 = vmatpush.msra.mxu0 0.0
    %1230 = vmatpush.msra.mxu0 0.0
    %1231 = vmatpush.msra.mxu0 0.0
    %1232 = vmatpush.msra.mxu0 0.0
    %1233 = vmatpush.msra.mxu0 0.0
    %v1234 = vand.u32 %v1091, 4294901760
    %v1235 = vsub.f32 %v1091, %v1234
    %1236 = vmatpush.msra.mxu0 %v1235
    %v1237 = vand.u32 %v1090, 4294901760
    %v1238 = vsub.f32 %v1090, %v1237
    %1239 = vmatpush.msra.mxu0 %v1238
    %v1240 = vand.u32 %v1089, 4294901760
    %v1241 = vsub.f32 %v1089, %v1240
    %1242 = vmatpush.msra.mxu0 %v1241
    %v1243 = vand.u32 %v1088, 4294901760
    %v1244 = vsub.f32 %v1088, %v1243
    %1245 = vmatpush.msra.mxu0 %v1244
    %v1246 = vand.u32 %v40, 4294901760
    %v1247 = vsub.f32 %v40, %v1246
    %1248 = vmatmul.f32.gmra.mxu0 %v1247
    %v1249 = vpop.f32.mrf.mxu0
    %v1250 = vadd.f32 %v1200, %v1249
    %v1251 = vand.u32 %v43, 4294901760
    %v1252 = vsub.f32 %v43, %v1251
    %1253 = vmatmul.f32.gmra.mxu0 %v1252
    %v1254 = vpop.f32.mrf.mxu0
    %v1255 = vadd.f32 %v1204, %v1254
    %v1256 = vand.u32 %v46, 4294901760
    %v1257 = vsub.f32 %v46, %v1256
    %1258 = vmatmul.f32.gmra.mxu0 %v1257
    %v1259 = vpop.f32.mrf.mxu0
    %v1260 = vadd.f32 %v1208, %v1259
    %v1261 = vand.u32 %v49, 4294901760
    %v1262 = vsub.f32 %v49, %v1261
    %1263 = vmatmul.f32.gmra.mxu0 %v1262
    %v1264 = vpop.f32.mrf.mxu0
    %v1265 = vadd.f32 %v1212, %v1264
    %v1266 = vand.u32 %v52, 4294901760
    %v1267 = vsub.f32 %v52, %v1266
    %1268 = vmatmul.f32.gmra.mxu0 %v1267
    %v1269 = vpop.f32.mrf.mxu0
    %v1270 = vadd.f32 %v1216, %v1269
    %v1271 = vand.u32 %v55, 4294901760
    %v1272 = vsub.f32 %v55, %v1271
    %1273 = vmatmul.f32.gmra.mxu0 %v1272
    %v1274 = vpop.f32.mrf.mxu0
    %v1275 = vadd.f32 %v1220, %v1274
    %1276 = vdwg.mxu0
    %1277 = vmatpush.msra.mxu0 0.0
    %1278 = vmatpush.msra.mxu0 0.0
    %1279 = vmatpush.msra.mxu0 0.0
    %1280 = vmatpush.msra.mxu0 0.0
    %1281 = vmatpush.msra.mxu0 0.0
    %1282 = vmatpush.msra.mxu0 0.0
    %1283 = vmatpush.msra.mxu0 0.0
    %1284 = vmatpush.msra.mxu0 0.0
    %1285 = vmatpush.msra.mxu0 0.0
    %1286 = vmatpush.msra.mxu0 0.0
    %1287 = vmatpush.msra.mxu0 0.0
    %1288 = vmatpush.msra.mxu0 0.0
    %v1289 = vand.u32 %v1091, 4294901760
    %1290 = vmatpush.msra.mxu0 %v1289
    %v1291 = vand.u32 %v1090, 4294901760
    %1292 = vmatpush.msra.mxu0 %v1291
    %v1293 = vand.u32 %v1089, 4294901760
    %1294 = vmatpush.msra.mxu0 %v1293
    %v1295 = vand.u32 %v1088, 4294901760
    %1296 = vmatpush.msra.mxu0 %v1295
    %v1297 = vand.u32 %v40, 4294901760
    %v1298 = vsub.f32 %v40, %v1297
    %v1299 = vand.u32 %v1298, 4294901760
    %1300 = vmatmul.f32.gmra.mxu0 %v1299
    %v1301 = vpop.f32.mrf.mxu0
    %v1302 = vadd.f32 %v1250, %v1301
    %v1303 = vand.u32 %v43, 4294901760
    %v1304 = vsub.f32 %v43, %v1303
    %v1305 = vand.u32 %v1304, 4294901760
    %1306 = vmatmul.f32.gmra.mxu0 %v1305
    %v1307 = vpop.f32.mrf.mxu0
    %v1308 = vadd.f32 %v1255, %v1307
    %v1309 = vand.u32 %v46, 4294901760
    %v1310 = vsub.f32 %v46, %v1309
    %v1311 = vand.u32 %v1310, 4294901760
    %1312 = vmatmul.f32.gmra.mxu0 %v1311
    %v1313 = vpop.f32.mrf.mxu0
    %v1314 = vadd.f32 %v1260, %v1313
    %v1315 = vand.u32 %v49, 4294901760
    %v1316 = vsub.f32 %v49, %v1315
    %v1317 = vand.u32 %v1316, 4294901760
    %1318 = vmatmul.f32.gmra.mxu0 %v1317
    %v1319 = vpop.f32.mrf.mxu0
    %v1320 = vadd.f32 %v1265, %v1319
    %v1321 = vand.u32 %v52, 4294901760
    %v1322 = vsub.f32 %v52, %v1321
    %v1323 = vand.u32 %v1322, 4294901760
    %1324 = vmatmul.f32.gmra.mxu0 %v1323
    %v1325 = vpop.f32.mrf.mxu0
    %v1326 = vadd.f32 %v1270, %v1325
    %v1327 = vand.u32 %v55, 4294901760
    %v1328 = vsub.f32 %v55, %v1327
    %v1329 = vand.u32 %v1328, 4294901760
    %1330 = vmatmul.f32.gmra.mxu0 %v1329
    %v1331 = vpop.f32.mrf.mxu0
    %v1332 = vadd.f32 %v1275, %v1331
    %1333 = vdwg.mxu0
    %1334 = vmatpush.msra.mxu0 0.0
    %1335 = vmatpush.msra.mxu0 0.0
    %1336 = vmatpush.msra.mxu0 0.0
    %1337 = vmatpush.msra.mxu0 0.0
    %1338 = vmatpush.msra.mxu0 0.0
    %1339 = vmatpush.msra.mxu0 0.0
    %1340 = vmatpush.msra.mxu0 0.0
    %1341 = vmatpush.msra.mxu0 0.0
    %1342 = vmatpush.msra.mxu0 0.0
    %1343 = vmatpush.msra.mxu0 0.0
    %1344 = vmatpush.msra.mxu0 0.0
    %1345 = vmatpush.msra.mxu0 0.0
    %v1346 = vand.u32 %v1091, 4294901760
    %v1347 = vsub.f32 %v1091, %v1346
    %v1348 = vand.u32 %v1347, 4294901760
    %1349 = vmatpush.msra.mxu0 %v1348
    %v1350 = vand.u32 %v1090, 4294901760
    %v1351 = vsub.f32 %v1090, %v1350
    %v1352 = vand.u32 %v1351, 4294901760
    %1353 = vmatpush.msra.mxu0 %v1352
    %v1354 = vand.u32 %v1089, 4294901760
    %v1355 = vsub.f32 %v1089, %v1354
    %v1356 = vand.u32 %v1355, 4294901760
    %1357 = vmatpush.msra.mxu0 %v1356
    %v1358 = vand.u32 %v1088, 4294901760
    %v1359 = vsub.f32 %v1088, %v1358
    %v1360 = vand.u32 %v1359, 4294901760
    %1361 = vmatpush.msra.mxu0 %v1360
    %v1362 = vand.u32 %v40, 4294901760
    %1363 = vmatmul.f32.gmra.mxu0 %v1362
    %v1364 = vpop.f32.mrf.mxu0
    %v1365 = vadd.f32 %v1302, %v1364
    %v1366 = vand.u32 %v43, 4294901760
    %1367 = vmatmul.f32.gmra.mxu0 %v1366
    %v1368 = vpop.f32.mrf.mxu0
    %v1369 = vadd.f32 %v1308, %v1368
    %v1370 = vand.u32 %v46, 4294901760
    %1371 = vmatmul.f32.gmra.mxu0 %v1370
    %v1372 = vpop.f32.mrf.mxu0
    %v1373 = vadd.f32 %v1314, %v1372
    %v1374 = vand.u32 %v49, 4294901760
    %1375 = vmatmul.f32.gmra.mxu0 %v1374
    %v1376 = vpop.f32.mrf.mxu0
    %v1377 = vadd.f32 %v1320, %v1376
    %v1378 = vand.u32 %v52, 4294901760
    %1379 = vmatmul.f32.gmra.mxu0 %v1378
    %v1380 = vpop.f32.mrf.mxu0
    %v1381 = vadd.f32 %v1326, %v1380
    %v1382 = vand.u32 %v55, 4294901760
    %1383 = vmatmul.f32.gmra.mxu0 %v1382
    %v1384 = vpop.f32.mrf.mxu0
    %v1385 = vadd.f32 %v1332, %v1384
    %1386 = vdwg.mxu0
    %1387 = vmatpush.msra.mxu0 0.0
    %1388 = vmatpush.msra.mxu0 0.0
    %1389 = vmatpush.msra.mxu0 0.0
    %1390 = vmatpush.msra.mxu0 0.0
    %1391 = vmatpush.msra.mxu0 0.0
    %1392 = vmatpush.msra.mxu0 0.0
    %1393 = vmatpush.msra.mxu0 0.0
    %1394 = vmatpush.msra.mxu0 0.0
    %1395 = vmatpush.msra.mxu0 0.0
    %1396 = vmatpush.msra.mxu0 0.0
    %1397 = vmatpush.msra.mxu0 0.0
    %1398 = vmatpush.msra.mxu0 0.0
    %v1399 = vand.u32 %v1091, 4294901760
    %1400 = vmatpush.msra.mxu0 %v1399
    %v1401 = vand.u32 %v1090, 4294901760
    %1402 = vmatpush.msra.mxu0 %v1401
    %v1403 = vand.u32 %v1089, 4294901760
    %1404 = vmatpush.msra.mxu0 %v1403
    %v1405 = vand.u32 %v1088, 4294901760
    %1406 = vmatpush.msra.mxu0 %v1405
    %v1407 = vand.u32 %v40, 4294901760
    %1408 = vmatmul.f32.gmra.mxu0 %v1407
    %v1409 = vpop.f32.mrf.mxu0
    %v1410 = vadd.f32 %v1365, %v1409
    %v1411 = vand.u32 %v43, 4294901760
    %1412 = vmatmul.f32.gmra.mxu0 %v1411
    %v1413 = vpop.f32.mrf.mxu0
    %v1414 = vadd.f32 %v1369, %v1413
    %v1415 = vand.u32 %v46, 4294901760
    %1416 = vmatmul.f32.gmra.mxu0 %v1415
    %v1417 = vpop.f32.mrf.mxu0
    %v1418 = vadd.f32 %v1373, %v1417
    %v1419 = vand.u32 %v49, 4294901760
    %1420 = vmatmul.f32.gmra.mxu0 %v1419
    %v1421 = vpop.f32.mrf.mxu0
    %v1422 = vadd.f32 %v1377, %v1421
    %v1423 = vand.u32 %v52, 4294901760
    %1424 = vmatmul.f32.gmra.mxu0 %v1423
    %v1425 = vpop.f32.mrf.mxu0
    %v1426 = vadd.f32 %v1381, %v1425
    %v1427 = vand.u32 %v55, 4294901760
    %1428 = vmatmul.f32.gmra.mxu0 %v1427
    %v1429 = vpop.f32.mrf.mxu0
    %v1430 = vadd.f32 %v1385, %v1429
    %1431 = vdwg.mxu0
    %s1432 = scalar_lea.vmem [#allocation2], 128
    %v1433 = vld [vmem:[%s1432] sm:$0xff]
    %v1434 = vld [vmem:[%s1432 + $0x8] sm:$0xff]
    %v1435 = vld [vmem:[%s1432 + $0x10] sm:$0xff]
    %v1436 = vld [vmem:[%s1432 + $0x18] sm:$0xff]
    %1437 = vmatpush.msra.mxu0 0.0
    %1438 = vmatpush.msra.mxu0 0.0
    %1439 = vmatpush.msra.mxu0 0.0
    %1440 = vmatpush.msra.mxu0 0.0
    %1441 = vmatpush.msra.mxu0 0.0
    %1442 = vmatpush.msra.mxu0 0.0
    %1443 = vmatpush.msra.mxu0 0.0
    %1444 = vmatpush.msra.mxu0 0.0
    %1445 = vmatpush.msra.mxu0 0.0
    %1446 = vmatpush.msra.mxu0 0.0
    %1447 = vmatpush.msra.mxu0 0.0
    %1448 = vmatpush.msra.mxu0 0.0
    %v1449 = vand.u32 %v1436, 4294901760
    %1450 = vmatpush.msra.mxu0 %v1449
    %v1451 = vand.u32 %v1435, 4294901760
    %1452 = vmatpush.msra.mxu0 %v1451
    %v1453 = vand.u32 %v1434, 4294901760
    %1454 = vmatpush.msra.mxu0 %v1453
    %v1455 = vand.u32 %v1433, 4294901760
    %1456 = vmatpush.msra.mxu0 %v1455
    %v1457 = vand.u32 %v40, 4294901760
    %v1458 = vsub.f32 %v40, %v1457
    %v1459 = vand.u32 %v1458, 4294901760
    %v1460 = vsub.f32 %v1458, %v1459
    %v1461 = vand.u32 %v1460, 4294901760
    %1462 = vmatmul.f32.gmra.mxu0 %v1461
    %v1463 = vpop.f32.mrf.mxu0
    %v1464 = vadd.f32 0.0, %v1463
    %v1465 = vand.u32 %v43, 4294901760
    %v1466 = vsub.f32 %v43, %v1465
    %v1467 = vand.u32 %v1466, 4294901760
    %v1468 = vsub.f32 %v1466, %v1467
    %v1469 = vand.u32 %v1468, 4294901760
    %1470 = vmatmul.f32.gmra.mxu0 %v1469
    %v1471 = vpop.f32.mrf.mxu0
    %v1472 = vadd.f32 0.0, %v1471
    %v1473 = vand.u32 %v46, 4294901760
    %v1474 = vsub.f32 %v46, %v1473
    %v1475 = vand.u32 %v1474, 4294901760
    %v1476 = vsub.f32 %v1474, %v1475
    %v1477 = vand.u32 %v1476, 4294901760
    %1478 = vmatmul.f32.gmra.mxu0 %v1477
    %v1479 = vpop.f32.mrf.mxu0
    %v1480 = vadd.f32 0.0, %v1479
    %v1481 = vand.u32 %v49, 4294901760
    %v1482 = vsub.f32 %v49, %v1481
    %v1483 = vand.u32 %v1482, 4294901760
    %v1484 = vsub.f32 %v1482, %v1483
    %v1485 = vand.u32 %v1484, 4294901760
    %1486 = vmatmul.f32.gmra.mxu0 %v1485
    %v1487 = vpop.f32.mrf.mxu0
    %v1488 = vadd.f32 0.0, %v1487
    %v1489 = vand.u32 %v52, 4294901760
    %v1490 = vsub.f32 %v52, %v1489
    %v1491 = vand.u32 %v1490, 4294901760
    %v1492 = vsub.f32 %v1490, %v1491
    %v1493 = vand.u32 %v1492, 4294901760
    %1494 = vmatmul.f32.gmra.mxu0 %v1493
    %v1495 = vpop.f32.mrf.mxu0
    %v1496 = vadd.f32 0.0, %v1495
    %v1497 = vand.u32 %v55, 4294901760
    %v1498 = vsub.f32 %v55, %v1497
    %v1499 = vand.u32 %v1498, 4294901760
    %v1500 = vsub.f32 %v1498, %v1499
    %v1501 = vand.u32 %v1500, 4294901760
    %1502 = vmatmul.f32.gmra.mxu0 %v1501
    %v1503 = vpop.f32.mrf.mxu0
    %v1504 = vadd.f32 0.0, %v1503
    %1505 = vdwg.mxu0
    %1506 = vmatpush.msra.mxu0 0.0
    %1507 = vmatpush.msra.mxu0 0.0
    %1508 = vmatpush.msra.mxu0 0.0
    %1509 = vmatpush.msra.mxu0 0.0
    %1510 = vmatpush.msra.mxu0 0.0
    %1511 = vmatpush.msra.mxu0 0.0
    %1512 = vmatpush.msra.mxu0 0.0
    %1513 = vmatpush.msra.mxu0 0.0
    %1514 = vmatpush.msra.mxu0 0.0
    %1515 = vmatpush.msra.mxu0 0.0
    %1516 = vmatpush.msra.mxu0 0.0
    %1517 = vmatpush.msra.mxu0 0.0
    %v1518 = vand.u32 %v1436, 4294901760
    %v1519 = vsub.f32 %v1436, %v1518
    %v1520 = vand.u32 %v1519, 4294901760
    %v1521 = vsub.f32 %v1519, %v1520
    %v1522 = vand.u32 %v1521, 4294901760
    %1523 = vmatpush.msra.mxu0 %v1522
    %v1524 = vand.u32 %v1435, 4294901760
    %v1525 = vsub.f32 %v1435, %v1524
    %v1526 = vand.u32 %v1525, 4294901760
    %v1527 = vsub.f32 %v1525, %v1526
    %v1528 = vand.u32 %v1527, 4294901760
    %1529 = vmatpush.msra.mxu0 %v1528
    %v1530 = vand.u32 %v1434, 4294901760
    %v1531 = vsub.f32 %v1434, %v1530
    %v1532 = vand.u32 %v1531, 4294901760
    %v1533 = vsub.f32 %v1531, %v1532
    %v1534 = vand.u32 %v1533, 4294901760
    %1535 = vmatpush.msra.mxu0 %v1534
    %v1536 = vand.u32 %v1433, 4294901760
    %v1537 = vsub.f32 %v1433, %v1536
    %v1538 = vand.u32 %v1537, 4294901760
    %v1539 = vsub.f32 %v1537, %v1538
    %v1540 = vand.u32 %v1539, 4294901760
    %1541 = vmatpush.msra.mxu0 %v1540
    %v1542 = vand.u32 %v40, 4294901760
    %1543 = vmatmul.f32.gmra.mxu0 %v1542
    %v1544 = vpop.f32.mrf.mxu0
    %v1545 = vadd.f32 %v1464, %v1544
    %v1546 = vand.u32 %v43, 4294901760
    %1547 = vmatmul.f32.gmra.mxu0 %v1546
    %v1548 = vpop.f32.mrf.mxu0
    %v1549 = vadd.f32 %v1472, %v1548
    %v1550 = vand.u32 %v46, 4294901760
    %1551 = vmatmul.f32.gmra.mxu0 %v1550
    %v1552 = vpop.f32.mrf.mxu0
    %v1553 = vadd.f32 %v1480, %v1552
    %v1554 = vand.u32 %v49, 4294901760
    %1555 = vmatmul.f32.gmra.mxu0 %v1554
    %v1556 = vpop.f32.mrf.mxu0
    %v1557 = vadd.f32 %v1488, %v1556
    %v1558 = vand.u32 %v52, 4294901760
    %1559 = vmatmul.f32.gmra.mxu0 %v1558
    %v1560 = vpop.f32.mrf.mxu0
    %v1561 = vadd.f32 %v1496, %v1560
    %v1562 = vand.u32 %v55, 4294901760
    %1563 = vmatmul.f32.gmra.mxu0 %v1562
    %v1564 = vpop.f32.mrf.mxu0
    %v1565 = vadd.f32 %v1504, %v1564
    %1566 = vdwg.mxu0
    %1567 = vmatpush.msra.mxu0 0.0
    %1568 = vmatpush.msra.mxu0 0.0
    %1569 = vmatpush.msra.mxu0 0.0
    %1570 = vmatpush.msra.mxu0 0.0
    %1571 = vmatpush.msra.mxu0 0.0
    %1572 = vmatpush.msra.mxu0 0.0
    %1573 = vmatpush.msra.mxu0 0.0
    %1574 = vmatpush.msra.mxu0 0.0
    %1575 = vmatpush.msra.mxu0 0.0
    %1576 = vmatpush.msra.mxu0 0.0
    %1577 = vmatpush.msra.mxu0 0.0
    %1578 = vmatpush.msra.mxu0 0.0
    %v1579 = vand.u32 %v1436, 4294901760
    %v1580 = vsub.f32 %v1436, %v1579
    %1581 = vmatpush.msra.mxu0 %v1580
    %v1582 = vand.u32 %v1435, 4294901760
    %v1583 = vsub.f32 %v1435, %v1582
    %1584 = vmatpush.msra.mxu0 %v1583
    %v1585 = vand.u32 %v1434, 4294901760
    %v1586 = vsub.f32 %v1434, %v1585
    %1587 = vmatpush.msra.mxu0 %v1586
    %v1588 = vand.u32 %v1433, 4294901760
    %v1589 = vsub.f32 %v1433, %v1588
    %1590 = vmatpush.msra.mxu0 %v1589
    %v1591 = vand.u32 %v40, 4294901760
    %v1592 = vsub.f32 %v40, %v1591
    %1593 = vmatmul.f32.gmra.mxu0 %v1592
    %v1594 = vpop.f32.mrf.mxu0
    %v1595 = vadd.f32 %v1545, %v1594
    %v1596 = vand.u32 %v43, 4294901760
    %v1597 = vsub.f32 %v43, %v1596
    %1598 = vmatmul.f32.gmra.mxu0 %v1597
    %v1599 = vpop.f32.mrf.mxu0
    %v1600 = vadd.f32 %v1549, %v1599
    %v1601 = vand.u32 %v46, 4294901760
    %v1602 = vsub.f32 %v46, %v1601
    %1603 = vmatmul.f32.gmra.mxu0 %v1602
    %v1604 = vpop.f32.mrf.mxu0
    %v1605 = vadd.f32 %v1553, %v1604
    %v1606 = vand.u32 %v49, 4294901760
    %v1607 = vsub.f32 %v49, %v1606
    %1608 = vmatmul.f32.gmra.mxu0 %v1607
    %v1609 = vpop.f32.mrf.mxu0
    %v1610 = vadd.f32 %v1557, %v1609
    %v1611 = vand.u32 %v52, 4294901760
    %v1612 = vsub.f32 %v52, %v1611
    %1613 = vmatmul.f32.gmra.mxu0 %v1612
    %v1614 = vpop.f32.mrf.mxu0
    %v1615 = vadd.f32 %v1561, %v1614
    %v1616 = vand.u32 %v55, 4294901760
    %v1617 = vsub.f32 %v55, %v1616
    %1618 = vmatmul.f32.gmra.mxu0 %v1617
    %v1619 = vpop.f32.mrf.mxu0
    %v1620 = vadd.f32 %v1565, %v1619
    %1621 = vdwg.mxu0
    %1622 = vmatpush.msra.mxu0 0.0
    %1623 = vmatpush.msra.mxu0 0.0
    %1624 = vmatpush.msra.mxu0 0.0
    %1625 = vmatpush.msra.mxu0 0.0
    %1626 = vmatpush.msra.mxu0 0.0
    %1627 = vmatpush.msra.mxu0 0.0
    %1628 = vmatpush.msra.mxu0 0.0
    %1629 = vmatpush.msra.mxu0 0.0
    %1630 = vmatpush.msra.mxu0 0.0
    %1631 = vmatpush.msra.mxu0 0.0
    %1632 = vmatpush.msra.mxu0 0.0
    %1633 = vmatpush.msra.mxu0 0.0
    %v1634 = vand.u32 %v1436, 4294901760
    %1635 = vmatpush.msra.mxu0 %v1634
    %v1636 = vand.u32 %v1435, 4294901760
    %1637 = vmatpush.msra.mxu0 %v1636
    %v1638 = vand.u32 %v1434, 4294901760
    %1639 = vmatpush.msra.mxu0 %v1638
    %v1640 = vand.u32 %v1433, 4294901760
    %1641 = vmatpush.msra.mxu0 %v1640
    %v1642 = vand.u32 %v40, 4294901760
    %v1643 = vsub.f32 %v40, %v1642
    %v1644 = vand.u32 %v1643, 4294901760
    %1645 = vmatmul.f32.gmra.mxu0 %v1644
    %v1646 = vpop.f32.mrf.mxu0
    %v1647 = vadd.f32 %v1595, %v1646
    %v1648 = vand.u32 %v43, 4294901760
    %v1649 = vsub.f32 %v43, %v1648
    %v1650 = vand.u32 %v1649, 4294901760
    %1651 = vmatmul.f32.gmra.mxu0 %v1650
    %v1652 = vpop.f32.mrf.mxu0
    %v1653 = vadd.f32 %v1600, %v1652
    %v1654 = vand.u32 %v46, 4294901760
    %v1655 = vsub.f32 %v46, %v1654
    %v1656 = vand.u32 %v1655, 4294901760
    %1657 = vmatmul.f32.gmra.mxu0 %v1656
    %v1658 = vpop.f32.mrf.mxu0
    %v1659 = vadd.f32 %v1605, %v1658
    %v1660 = vand.u32 %v49, 4294901760
    %v1661 = vsub.f32 %v49, %v1660
    %v1662 = vand.u32 %v1661, 4294901760
    %1663 = vmatmul.f32.gmra.mxu0 %v1662
    %v1664 = vpop.f32.mrf.mxu0
    %v1665 = vadd.f32 %v1610, %v1664
    %v1666 = vand.u32 %v52, 4294901760
    %v1667 = vsub.f32 %v52, %v1666
    %v1668 = vand.u32 %v1667, 4294901760
    %1669 = vmatmul.f32.gmra.mxu0 %v1668
    %v1670 = vpop.f32.mrf.mxu0
    %v1671 = vadd.f32 %v1615, %v1670
    %v1672 = vand.u32 %v55, 4294901760
    %v1673 = vsub.f32 %v55, %v1672
    %v1674 = vand.u32 %v1673, 4294901760
    %1675 = vmatmul.f32.gmra.mxu0 %v1674
    %v1676 = vpop.f32.mrf.mxu0
    %v1677 = vadd.f32 %v1620, %v1676
    %1678 = vdwg.mxu0
    %1679 = vmatpush.msra.mxu0 0.0
    %1680 = vmatpush.msra.mxu0 0.0
    %1681 = vmatpush.msra.mxu0 0.0
    %1682 = vmatpush.msra.mxu0 0.0
    %1683 = vmatpush.msra.mxu0 0.0
    %1684 = vmatpush.msra.mxu0 0.0
    %1685 = vmatpush.msra.mxu0 0.0
    %1686 = vmatpush.msra.mxu0 0.0
    %1687 = vmatpush.msra.mxu0 0.0
    %1688 = vmatpush.msra.mxu0 0.0
    %1689 = vmatpush.msra.mxu0 0.0
    %1690 = vmatpush.msra.mxu0 0.0
    %v1691 = vand.u32 %v1436, 4294901760
    %v1692 = vsub.f32 %v1436, %v1691
    %v1693 = vand.u32 %v1692, 4294901760
    %1694 = vmatpush.msra.mxu0 %v1693
    %v1695 = vand.u32 %v1435, 4294901760
    %v1696 = vsub.f32 %v1435, %v1695
    %v1697 = vand.u32 %v1696, 4294901760
    %1698 = vmatpush.msra.mxu0 %v1697
    %v1699 = vand.u32 %v1434, 4294901760
    %v1700 = vsub.f32 %v1434, %v1699
    %v1701 = vand.u32 %v1700, 4294901760
    %1702 = vmatpush.msra.mxu0 %v1701
    %v1703 = vand.u32 %v1433, 4294901760
    %v1704 = vsub.f32 %v1433, %v1703
    %v1705 = vand.u32 %v1704, 4294901760
    %1706 = vmatpush.msra.mxu0 %v1705
    %v1707 = vand.u32 %v40, 4294901760
    %1708 = vmatmul.f32.gmra.mxu0 %v1707
    %v1709 = vpop.f32.mrf.mxu0
    %v1710 = vadd.f32 %v1647, %v1709
    %v1711 = vand.u32 %v43, 4294901760
    %1712 = vmatmul.f32.gmra.mxu0 %v1711
    %v1713 = vpop.f32.mrf.mxu0
    %v1714 = vadd.f32 %v1653, %v1713
    %v1715 = vand.u32 %v46, 4294901760
    %1716 = vmatmul.f32.gmra.mxu0 %v1715
    %v1717 = vpop.f32.mrf.mxu0
    %v1718 = vadd.f32 %v1659, %v1717
    %v1719 = vand.u32 %v49, 4294901760
    %1720 = vmatmul.f32.gmra.mxu0 %v1719
    %v1721 = vpop.f32.mrf.mxu0
    %v1722 = vadd.f32 %v1665, %v1721
    %v1723 = vand.u32 %v52, 4294901760
    %1724 = vmatmul.f32.gmra.mxu0 %v1723
    %v1725 = vpop.f32.mrf.mxu0
    %v1726 = vadd.f32 %v1671, %v1725
    %v1727 = vand.u32 %v55, 4294901760
    %1728 = vmatmul.f32.gmra.mxu0 %v1727
    %v1729 = vpop.f32.mrf.mxu0
    %v1730 = vadd.f32 %v1677, %v1729
    %1731 = vdwg.mxu0
    %1732 = vmatpush.msra.mxu0 0.0
    %1733 = vmatpush.msra.mxu0 0.0
    %1734 = vmatpush.msra.mxu0 0.0
    %1735 = vmatpush.msra.mxu0 0.0
    %1736 = vmatpush.msra.mxu0 0.0
    %1737 = vmatpush.msra.mxu0 0.0
    %1738 = vmatpush.msra.mxu0 0.0
    %1739 = vmatpush.msra.mxu0 0.0
    %1740 = vmatpush.msra.mxu0 0.0
    %1741 = vmatpush.msra.mxu0 0.0
    %1742 = vmatpush.msra.mxu0 0.0
    %1743 = vmatpush.msra.mxu0 0.0
    %v1744 = vand.u32 %v1436, 4294901760
    %1745 = vmatpush.msra.mxu0 %v1744
    %v1746 = vand.u32 %v1435, 4294901760
    %1747 = vmatpush.msra.mxu0 %v1746
    %v1748 = vand.u32 %v1434, 4294901760
    %1749 = vmatpush.msra.mxu0 %v1748
    %v1750 = vand.u32 %v1433, 4294901760
    %1751 = vmatpush.msra.mxu0 %v1750
    %v1752 = vand.u32 %v40, 4294901760
    %1753 = vmatmul.f32.gmra.mxu0 %v1752
    %v1754 = vpop.f32.mrf.mxu0
    %v1755 = vadd.f32 %v1710, %v1754
    %v1756 = vand.u32 %v43, 4294901760
    %1757 = vmatmul.f32.gmra.mxu0 %v1756
    %v1758 = vpop.f32.mrf.mxu0
    %v1759 = vadd.f32 %v1714, %v1758
    %v1760 = vand.u32 %v46, 4294901760
    %1761 = vmatmul.f32.gmra.mxu0 %v1760
    %v1762 = vpop.f32.mrf.mxu0
    %v1763 = vadd.f32 %v1718, %v1762
    %v1764 = vand.u32 %v49, 4294901760
    %1765 = vmatmul.f32.gmra.mxu0 %v1764
    %v1766 = vpop.f32.mrf.mxu0
    %v1767 = vadd.f32 %v1722, %v1766
    %v1768 = vand.u32 %v52, 4294901760
    %1769 = vmatmul.f32.gmra.mxu0 %v1768
    %v1770 = vpop.f32.mrf.mxu0
    %v1771 = vadd.f32 %v1726, %v1770
    %v1772 = vand.u32 %v55, 4294901760
    %1773 = vmatmul.f32.gmra.mxu0 %v1772
    %v1774 = vpop.f32.mrf.mxu0
    %v1775 = vadd.f32 %v1730, %v1774
    %1776 = vdwg.mxu0
    %s1777 = scalar_lea.vmem [#allocation2], 160
    %v1778 = vld [vmem:[%s1777] sm:$0xff]
    %v1779 = vld [vmem:[%s1777 + $0x8] sm:$0xff]
    %v1780 = vld [vmem:[%s1777 + $0x10] sm:$0xff]
    %v1781 = vld [vmem:[%s1777 + $0x18] sm:$0xff]
    %1782 = vmatpush.msra.mxu0 0.0
    %1783 = vmatpush.msra.mxu0 0.0
    %1784 = vmatpush.msra.mxu0 0.0
    %1785 = vmatpush.msra.mxu0 0.0
    %1786 = vmatpush.msra.mxu0 0.0
    %1787 = vmatpush.msra.mxu0 0.0
    %1788 = vmatpush.msra.mxu0 0.0
    %1789 = vmatpush.msra.mxu0 0.0
    %1790 = vmatpush.msra.mxu0 0.0
    %1791 = vmatpush.msra.mxu0 0.0
    %1792 = vmatpush.msra.mxu0 0.0
    %1793 = vmatpush.msra.mxu0 0.0
    %v1794 = vand.u32 %v1781, 4294901760
    %1795 = vmatpush.msra.mxu0 %v1794
    %v1796 = vand.u32 %v1780, 4294901760
    %1797 = vmatpush.msra.mxu0 %v1796
    %v1798 = vand.u32 %v1779, 4294901760
    %1799 = vmatpush.msra.mxu0 %v1798
    %v1800 = vand.u32 %v1778, 4294901760
    %1801 = vmatpush.msra.mxu0 %v1800
    %v1802 = vand.u32 %v40, 4294901760
    %v1803 = vsub.f32 %v40, %v1802
    %v1804 = vand.u32 %v1803, 4294901760
    %v1805 = vsub.f32 %v1803, %v1804
    %v1806 = vand.u32 %v1805, 4294901760
    %1807 = vmatmul.f32.gmra.mxu0 %v1806
    %v1808 = vpop.f32.mrf.mxu0
    %v1809 = vadd.f32 0.0, %v1808
    %v1810 = vand.u32 %v43, 4294901760
    %v1811 = vsub.f32 %v43, %v1810
    %v1812 = vand.u32 %v1811, 4294901760
    %v1813 = vsub.f32 %v1811, %v1812
    %v1814 = vand.u32 %v1813, 4294901760
    %1815 = vmatmul.f32.gmra.mxu0 %v1814
    %v1816 = vpop.f32.mrf.mxu0
    %v1817 = vadd.f32 0.0, %v1816
    %v1818 = vand.u32 %v46, 4294901760
    %v1819 = vsub.f32 %v46, %v1818
    %v1820 = vand.u32 %v1819, 4294901760
    %v1821 = vsub.f32 %v1819, %v1820
    %v1822 = vand.u32 %v1821, 4294901760
    %1823 = vmatmul.f32.gmra.mxu0 %v1822
    %v1824 = vpop.f32.mrf.mxu0
    %v1825 = vadd.f32 0.0, %v1824
    %v1826 = vand.u32 %v49, 4294901760
    %v1827 = vsub.f32 %v49, %v1826
    %v1828 = vand.u32 %v1827, 4294901760
    %v1829 = vsub.f32 %v1827, %v1828
    %v1830 = vand.u32 %v1829, 4294901760
    %1831 = vmatmul.f32.gmra.mxu0 %v1830
    %v1832 = vpop.f32.mrf.mxu0
    %v1833 = vadd.f32 0.0, %v1832
    %v1834 = vand.u32 %v52, 4294901760
    %v1835 = vsub.f32 %v52, %v1834
    %v1836 = vand.u32 %v1835, 4294901760
    %v1837 = vsub.f32 %v1835, %v1836
    %v1838 = vand.u32 %v1837, 4294901760
    %1839 = vmatmul.f32.gmra.mxu0 %v1838
    %v1840 = vpop.f32.mrf.mxu0
    %v1841 = vadd.f32 0.0, %v1840
    %v1842 = vand.u32 %v55, 4294901760
    %v1843 = vsub.f32 %v55, %v1842
    %v1844 = vand.u32 %v1843, 4294901760
    %v1845 = vsub.f32 %v1843, %v1844
    %v1846 = vand.u32 %v1845, 4294901760
    %1847 = vmatmul.f32.gmra.mxu0 %v1846
    %v1848 = vpop.f32.mrf.mxu0
    %v1849 = vadd.f32 0.0, %v1848
    %1850 = vdwg.mxu0
    %1851 = vmatpush.msra.mxu0 0.0
    %1852 = vmatpush.msra.mxu0 0.0
    %1853 = vmatpush.msra.mxu0 0.0
    %1854 = vmatpush.msra.mxu0 0.0
    %1855 = vmatpush.msra.mxu0 0.0
    %1856 = vmatpush.msra.mxu0 0.0
    %1857 = vmatpush.msra.mxu0 0.0
    %1858 = vmatpush.msra.mxu0 0.0
    %1859 = vmatpush.msra.mxu0 0.0
    %1860 = vmatpush.msra.mxu0 0.0
    %1861 = vmatpush.msra.mxu0 0.0
    %1862 = vmatpush.msra.mxu0 0.0
    %v1863 = vand.u32 %v1781, 4294901760
    %v1864 = vsub.f32 %v1781, %v1863
    %v1865 = vand.u32 %v1864, 4294901760
    %v1866 = vsub.f32 %v1864, %v1865
    %v1867 = vand.u32 %v1866, 4294901760
    %1868 = vmatpush.msra.mxu0 %v1867
    %v1869 = vand.u32 %v1780, 4294901760
    %v1870 = vsub.f32 %v1780, %v1869
    %v1871 = vand.u32 %v1870, 4294901760
    %v1872 = vsub.f32 %v1870, %v1871
    %v1873 = vand.u32 %v1872, 4294901760
    %1874 = vmatpush.msra.mxu0 %v1873
    %v1875 = vand.u32 %v1779, 4294901760
    %v1876 = vsub.f32 %v1779, %v1875
    %v1877 = vand.u32 %v1876, 4294901760
    %v1878 = vsub.f32 %v1876, %v1877
    %v1879 = vand.u32 %v1878, 4294901760
    %1880 = vmatpush.msra.mxu0 %v1879
    %v1881 = vand.u32 %v1778, 4294901760
    %v1882 = vsub.f32 %v1778, %v1881
    %v1883 = vand.u32 %v1882, 4294901760
    %v1884 = vsub.f32 %v1882, %v1883
    %v1885 = vand.u32 %v1884, 4294901760
    %1886 = vmatpush.msra.mxu0 %v1885
    %v1887 = vand.u32 %v40, 4294901760
    %1888 = vmatmul.f32.gmra.mxu0 %v1887
    %v1889 = vpop.f32.mrf.mxu0
    %v1890 = vadd.f32 %v1809, %v1889
    %v1891 = vand.u32 %v43, 4294901760
    %1892 = vmatmul.f32.gmra.mxu0 %v1891
    %v1893 = vpop.f32.mrf.mxu0
    %v1894 = vadd.f32 %v1817, %v1893
    %v1895 = vand.u32 %v46, 4294901760
    %1896 = vmatmul.f32.gmra.mxu0 %v1895
    %v1897 = vpop.f32.mrf.mxu0
    %v1898 = vadd.f32 %v1825, %v1897
    %v1899 = vand.u32 %v49, 4294901760
    %1900 = vmatmul.f32.gmra.mxu0 %v1899
    %v1901 = vpop.f32.mrf.mxu0
    %v1902 = vadd.f32 %v1833, %v1901
    %v1903 = vand.u32 %v52, 4294901760
    %1904 = vmatmul.f32.gmra.mxu0 %v1903
    %v1905 = vpop.f32.mrf.mxu0
    %v1906 = vadd.f32 %v1841, %v1905
    %v1907 = vand.u32 %v55, 4294901760
    %1908 = vmatmul.f32.gmra.mxu0 %v1907
    %v1909 = vpop.f32.mrf.mxu0
    %v1910 = vadd.f32 %v1849, %v1909
    %1911 = vdwg.mxu0
    %1912 = vmatpush.msra.mxu0 0.0
    %1913 = vmatpush.msra.mxu0 0.0
    %1914 = vmatpush.msra.mxu0 0.0
    %1915 = vmatpush.msra.mxu0 0.0
    %1916 = vmatpush.msra.mxu0 0.0
    %1917 = vmatpush.msra.mxu0 0.0
    %1918 = vmatpush.msra.mxu0 0.0
    %1919 = vmatpush.msra.mxu0 0.0
    %1920 = vmatpush.msra.mxu0 0.0
    %1921 = vmatpush.msra.mxu0 0.0
    %1922 = vmatpush.msra.mxu0 0.0
    %1923 = vmatpush.msra.mxu0 0.0
    %v1924 = vand.u32 %v1781, 4294901760
    %v1925 = vsub.f32 %v1781, %v1924
    %1926 = vmatpush.msra.mxu0 %v1925
    %v1927 = vand.u32 %v1780, 4294901760
    %v1928 = vsub.f32 %v1780, %v1927
    %1929 = vmatpush.msra.mxu0 %v1928
    %v1930 = vand.u32 %v1779, 4294901760
    %v1931 = vsub.f32 %v1779, %v1930
    %1932 = vmatpush.msra.mxu0 %v1931
    %v1933 = vand.u32 %v1778, 4294901760
    %v1934 = vsub.f32 %v1778, %v1933
    %1935 = vmatpush.msra.mxu0 %v1934
    %v1936 = vand.u32 %v40, 4294901760
    %v1937 = vsub.f32 %v40, %v1936
    %1938 = vmatmul.f32.gmra.mxu0 %v1937
    %v1939 = vpop.f32.mrf.mxu0
    %v1940 = vadd.f32 %v1890, %v1939
    %v1941 = vand.u32 %v43, 4294901760
    %v1942 = vsub.f32 %v43, %v1941
    %1943 = vmatmul.f32.gmra.mxu0 %v1942
    %v1944 = vpop.f32.mrf.mxu0
    %v1945 = vadd.f32 %v1894, %v1944
    %v1946 = vand.u32 %v46, 4294901760
    %v1947 = vsub.f32 %v46, %v1946
    %1948 = vmatmul.f32.gmra.mxu0 %v1947
    %v1949 = vpop.f32.mrf.mxu0
    %v1950 = vadd.f32 %v1898, %v1949
    %v1951 = vand.u32 %v49, 4294901760
    %v1952 = vsub.f32 %v49, %v1951
    %1953 = vmatmul.f32.gmra.mxu0 %v1952
    %v1954 = vpop.f32.mrf.mxu0
    %v1955 = vadd.f32 %v1902, %v1954
    %v1956 = vand.u32 %v52, 4294901760
    %v1957 = vsub.f32 %v52, %v1956
    %1958 = vmatmul.f32.gmra.mxu0 %v1957
    %v1959 = vpop.f32.mrf.mxu0
    %v1960 = vadd.f32 %v1906, %v1959
    %v1961 = vand.u32 %v55, 4294901760
    %v1962 = vsub.f32 %v55, %v1961
    %1963 = vmatmul.f32.gmra.mxu0 %v1962
    %v1964 = vpop.f32.mrf.mxu0
    %v1965 = vadd.f32 %v1910, %v1964
    %1966 = vdwg.mxu0
    %1967 = vmatpush.msra.mxu0 0.0
    %1968 = vmatpush.msra.mxu0 0.0
    %1969 = vmatpush.msra.mxu0 0.0
    %1970 = vmatpush.msra.mxu0 0.0
    %1971 = vmatpush.msra.mxu0 0.0
    %1972 = vmatpush.msra.mxu0 0.0
    %1973 = vmatpush.msra.mxu0 0.0
    %1974 = vmatpush.msra.mxu0 0.0
    %1975 = vmatpush.msra.mxu0 0.0
    %1976 = vmatpush.msra.mxu0 0.0
    %1977 = vmatpush.msra.mxu0 0.0
    %1978 = vmatpush.msra.mxu0 0.0
    %v1979 = vand.u32 %v1781, 4294901760
    %1980 = vmatpush.msra.mxu0 %v1979
    %v1981 = vand.u32 %v1780, 4294901760
    %1982 = vmatpush.msra.mxu0 %v1981
    %v1983 = vand.u32 %v1779, 4294901760
    %1984 = vmatpush.msra.mxu0 %v1983
    %v1985 = vand.u32 %v1778, 4294901760
    %1986 = vmatpush.msra.mxu0 %v1985
    %v1987 = vand.u32 %v40, 4294901760
    %v1988 = vsub.f32 %v40, %v1987
    %v1989 = vand.u32 %v1988, 4294901760
    %1990 = vmatmul.f32.gmra.mxu0 %v1989
    %v1991 = vpop.f32.mrf.mxu0
    %v1992 = vadd.f32 %v1940, %v1991
    %v1993 = vand.u32 %v43, 4294901760
    %v1994 = vsub.f32 %v43, %v1993
    %v1995 = vand.u32 %v1994, 4294901760
    %1996 = vmatmul.f32.gmra.mxu0 %v1995
    %v1997 = vpop.f32.mrf.mxu0
    %v1998 = vadd.f32 %v1945, %v1997
    %v1999 = vand.u32 %v46, 4294901760
    %v2000 = vsub.f32 %v46, %v1999
    %v2001 = vand.u32 %v2000, 4294901760
    %2002 = vmatmul.f32.gmra.mxu0 %v2001
    %v2003 = vpop.f32.mrf.mxu0
    %v2004 = vadd.f32 %v1950, %v2003
    %v2005 = vand.u32 %v49, 4294901760
    %v2006 = vsub.f32 %v49, %v2005
    %v2007 = vand.u32 %v2006, 4294901760
    %2008 = vmatmul.f32.gmra.mxu0 %v2007
    %v2009 = vpop.f32.mrf.mxu0
    %v2010 = vadd.f32 %v1955, %v2009
    %v2011 = vand.u32 %v52, 4294901760
    %v2012 = vsub.f32 %v52, %v2011
    %v2013 = vand.u32 %v2012, 4294901760
    %2014 = vmatmul.f32.gmra.mxu0 %v2013
    %v2015 = vpop.f32.mrf.mxu0
    %v2016 = vadd.f32 %v1960, %v2015
    %v2017 = vand.u32 %v55, 4294901760
    %v2018 = vsub.f32 %v55, %v2017
    %v2019 = vand.u32 %v2018, 4294901760
    %2020 = vmatmul.f32.gmra.mxu0 %v2019
    %v2021 = vpop.f32.mrf.mxu0
    %v2022 = vadd.f32 %v1965, %v2021
    %2023 = vdwg.mxu0
    %2024 = vmatpush.msra.mxu0 0.0
    %2025 = vmatpush.msra.mxu0 0.0
    %2026 = vmatpush.msra.mxu0 0.0
    %2027 = vmatpush.msra.mxu0 0.0
    %2028 = vmatpush.msra.mxu0 0.0
    %2029 = vmatpush.msra.mxu0 0.0
    %2030 = vmatpush.msra.mxu0 0.0
    %2031 = vmatpush.msra.mxu0 0.0
    %2032 = vmatpush.msra.mxu0 0.0
    %2033 = vmatpush.msra.mxu0 0.0
    %2034 = vmatpush.msra.mxu0 0.0
    %2035 = vmatpush.msra.mxu0 0.0
    %v2036 = vand.u32 %v1781, 4294901760
    %v2037 = vsub.f32 %v1781, %v2036
    %v2038 = vand.u32 %v2037, 4294901760
    %2039 = vmatpush.msra.mxu0 %v2038
    %v2040 = vand.u32 %v1780, 4294901760
    %v2041 = vsub.f32 %v1780, %v2040
    %v2042 = vand.u32 %v2041, 4294901760
    %2043 = vmatpush.msra.mxu0 %v2042
    %v2044 = vand.u32 %v1779, 4294901760
    %v2045 = vsub.f32 %v1779, %v2044
    %v2046 = vand.u32 %v2045, 4294901760
    %2047 = vmatpush.msra.mxu0 %v2046
    %v2048 = vand.u32 %v1778, 4294901760
    %v2049 = vsub.f32 %v1778, %v2048
    %v2050 = vand.u32 %v2049, 4294901760
    %2051 = vmatpush.msra.mxu0 %v2050
    %v2052 = vand.u32 %v40, 4294901760
    %2053 = vmatmul.f32.gmra.mxu0 %v2052
    %v2054 = vpop.f32.mrf.mxu0
    %v2055 = vadd.f32 %v1992, %v2054
    %v2056 = vand.u32 %v43, 4294901760
    %2057 = vmatmul.f32.gmra.mxu0 %v2056
    %v2058 = vpop.f32.mrf.mxu0
    %v2059 = vadd.f32 %v1998, %v2058
    %v2060 = vand.u32 %v46, 4294901760
    %2061 = vmatmul.f32.gmra.mxu0 %v2060
    %v2062 = vpop.f32.mrf.mxu0
    %v2063 = vadd.f32 %v2004, %v2062
    %v2064 = vand.u32 %v49, 4294901760
    %2065 = vmatmul.f32.gmra.mxu0 %v2064
    %v2066 = vpop.f32.mrf.mxu0
    %v2067 = vadd.f32 %v2010, %v2066
    %v2068 = vand.u32 %v52, 4294901760
    %2069 = vmatmul.f32.gmra.mxu0 %v2068
    %v2070 = vpop.f32.mrf.mxu0
    %v2071 = vadd.f32 %v2016, %v2070
    %v2072 = vand.u32 %v55, 4294901760
    %2073 = vmatmul.f32.gmra.mxu0 %v2072
    %v2074 = vpop.f32.mrf.mxu0
    %v2075 = vadd.f32 %v2022, %v2074
    %2076 = vdwg.mxu0
    %2077 = vmatpush.msra.mxu0 0.0
    %2078 = vmatpush.msra.mxu0 0.0
    %2079 = vmatpush.msra.mxu0 0.0
    %2080 = vmatpush.msra.mxu0 0.0
    %2081 = vmatpush.msra.mxu0 0.0
    %2082 = vmatpush.msra.mxu0 0.0
    %2083 = vmatpush.msra.mxu0 0.0
    %2084 = vmatpush.msra.mxu0 0.0
    %2085 = vmatpush.msra.mxu0 0.0
    %2086 = vmatpush.msra.mxu0 0.0
    %2087 = vmatpush.msra.mxu0 0.0
    %2088 = vmatpush.msra.mxu0 0.0
    %v2089 = vand.u32 %v1781, 4294901760
    %2090 = vmatpush.msra.mxu0 %v2089
    %v2091 = vand.u32 %v1780, 4294901760
    %2092 = vmatpush.msra.mxu0 %v2091
    %v2093 = vand.u32 %v1779, 4294901760
    %2094 = vmatpush.msra.mxu0 %v2093
    %v2095 = vand.u32 %v1778, 4294901760
    %2096 = vmatpush.msra.mxu0 %v2095
    %v2097 = vand.u32 %v40, 4294901760
    %2098 = vmatmul.f32.gmra.mxu0 %v2097
    %v2099 = vpop.f32.mrf.mxu0
    %v2100 = vadd.f32 %v2055, %v2099
    %v2101 = vand.u32 %v43, 4294901760
    %2102 = vmatmul.f32.gmra.mxu0 %v2101
    %v2103 = vpop.f32.mrf.mxu0
    %v2104 = vadd.f32 %v2059, %v2103
    %v2105 = vand.u32 %v46, 4294901760
    %2106 = vmatmul.f32.gmra.mxu0 %v2105
    %v2107 = vpop.f32.mrf.mxu0
    %v2108 = vadd.f32 %v2063, %v2107
    %v2109 = vand.u32 %v49, 4294901760
    %2110 = vmatmul.f32.gmra.mxu0 %v2109
    %v2111 = vpop.f32.mrf.mxu0
    %v2112 = vadd.f32 %v2067, %v2111
    %v2113 = vand.u32 %v52, 4294901760
    %2114 = vmatmul.f32.gmra.mxu0 %v2113
    %v2115 = vpop.f32.mrf.mxu0
    %v2116 = vadd.f32 %v2071, %v2115
    %v2117 = vand.u32 %v55, 4294901760
    %2118 = vmatmul.f32.gmra.mxu0 %v2117
    %v2119 = vpop.f32.mrf.mxu0
    %v2120 = vadd.f32 %v2075, %v2119
    %2121 = vdwg.mxu0
    %s2122 = scalar_lea.vmem [#allocation2], 192
    %v2123 = vld [vmem:[%s2122] sm:$0xff]
    %v2124 = vld [vmem:[%s2122 + $0x8] sm:$0xff]
    %v2125 = vld [vmem:[%s2122 + $0x10] sm:$0xff]
    %v2126 = vld [vmem:[%s2122 + $0x18] sm:$0xff]
    %2127 = vmatpush.msra.mxu0 0.0
    %2128 = vmatpush.msra.mxu0 0.0
    %2129 = vmatpush.msra.mxu0 0.0
    %2130 = vmatpush.msra.mxu0 0.0
    %2131 = vmatpush.msra.mxu0 0.0
    %2132 = vmatpush.msra.mxu0 0.0
    %2133 = vmatpush.msra.mxu0 0.0
    %2134 = vmatpush.msra.mxu0 0.0
    %2135 = vmatpush.msra.mxu0 0.0
    %2136 = vmatpush.msra.mxu0 0.0
    %2137 = vmatpush.msra.mxu0 0.0
    %2138 = vmatpush.msra.mxu0 0.0
    %v2139 = vand.u32 %v2126, 4294901760
    %2140 = vmatpush.msra.mxu0 %v2139
    %v2141 = vand.u32 %v2125, 4294901760
    %2142 = vmatpush.msra.mxu0 %v2141
    %v2143 = vand.u32 %v2124, 4294901760
    %2144 = vmatpush.msra.mxu0 %v2143
    %v2145 = vand.u32 %v2123, 4294901760
    %2146 = vmatpush.msra.mxu0 %v2145
    %v2147 = vand.u32 %v40, 4294901760
    %v2148 = vsub.f32 %v40, %v2147
    %v2149 = vand.u32 %v2148, 4294901760
    %v2150 = vsub.f32 %v2148, %v2149
    %v2151 = vand.u32 %v2150, 4294901760
    %2152 = vmatmul.f32.gmra.mxu0 %v2151
    %v2153 = vpop.f32.mrf.mxu0
    %v2154 = vadd.f32 0.0, %v2153
    %v2155 = vand.u32 %v43, 4294901760
    %v2156 = vsub.f32 %v43, %v2155
    %v2157 = vand.u32 %v2156, 4294901760
    %v2158 = vsub.f32 %v2156, %v2157
    %v2159 = vand.u32 %v2158, 4294901760
    %2160 = vmatmul.f32.gmra.mxu0 %v2159
    %v2161 = vpop.f32.mrf.mxu0
    %v2162 = vadd.f32 0.0, %v2161
    %v2163 = vand.u32 %v46, 4294901760
    %v2164 = vsub.f32 %v46, %v2163
    %v2165 = vand.u32 %v2164, 4294901760
    %v2166 = vsub.f32 %v2164, %v2165
    %v2167 = vand.u32 %v2166, 4294901760
    %2168 = vmatmul.f32.gmra.mxu0 %v2167
    %v2169 = vpop.f32.mrf.mxu0
    %v2170 = vadd.f32 0.0, %v2169
    %v2171 = vand.u32 %v49, 4294901760
    %v2172 = vsub.f32 %v49, %v2171
    %v2173 = vand.u32 %v2172, 4294901760
    %v2174 = vsub.f32 %v2172, %v2173
    %v2175 = vand.u32 %v2174, 4294901760
    %2176 = vmatmul.f32.gmra.mxu0 %v2175
    %v2177 = vpop.f32.mrf.mxu0
    %v2178 = vadd.f32 0.0, %v2177
    %v2179 = vand.u32 %v52, 4294901760
    %v2180 = vsub.f32 %v52, %v2179
    %v2181 = vand.u32 %v2180, 4294901760
    %v2182 = vsub.f32 %v2180, %v2181
    %v2183 = vand.u32 %v2182, 4294901760
    %2184 = vmatmul.f32.gmra.mxu0 %v2183
    %v2185 = vpop.f32.mrf.mxu0
    %v2186 = vadd.f32 0.0, %v2185
    %v2187 = vand.u32 %v55, 4294901760
    %v2188 = vsub.f32 %v55, %v2187
    %v2189 = vand.u32 %v2188, 4294901760
    %v2190 = vsub.f32 %v2188, %v2189
    %v2191 = vand.u32 %v2190, 4294901760
    %2192 = vmatmul.f32.gmra.mxu0 %v2191
    %v2193 = vpop.f32.mrf.mxu0
    %v2194 = vadd.f32 0.0, %v2193
    %2195 = vdwg.mxu0
    %2196 = vmatpush.msra.mxu0 0.0
    %2197 = vmatpush.msra.mxu0 0.0
    %2198 = vmatpush.msra.mxu0 0.0
    %2199 = vmatpush.msra.mxu0 0.0
    %2200 = vmatpush.msra.mxu0 0.0
    %2201 = vmatpush.msra.mxu0 0.0
    %2202 = vmatpush.msra.mxu0 0.0
    %2203 = vmatpush.msra.mxu0 0.0
    %2204 = vmatpush.msra.mxu0 0.0
    %2205 = vmatpush.msra.mxu0 0.0
    %2206 = vmatpush.msra.mxu0 0.0
    %2207 = vmatpush.msra.mxu0 0.0
    %v2208 = vand.u32 %v2126, 4294901760
    %v2209 = vsub.f32 %v2126, %v2208
    %v2210 = vand.u32 %v2209, 4294901760
    %v2211 = vsub.f32 %v2209, %v2210
    %v2212 = vand.u32 %v2211, 4294901760
    %2213 = vmatpush.msra.mxu0 %v2212
    %v2214 = vand.u32 %v2125, 4294901760
    %v2215 = vsub.f32 %v2125, %v2214
    %v2216 = vand.u32 %v2215, 4294901760
    %v2217 = vsub.f32 %v2215, %v2216
    %v2218 = vand.u32 %v2217, 4294901760
    %2219 = vmatpush.msra.mxu0 %v2218
    %v2220 = vand.u32 %v2124, 4294901760
    %v2221 = vsub.f32 %v2124, %v2220
    %v2222 = vand.u32 %v2221, 4294901760
    %v2223 = vsub.f32 %v2221, %v2222
    %v2224 = vand.u32 %v2223, 4294901760
    %2225 = vmatpush.msra.mxu0 %v2224
    %v2226 = vand.u32 %v2123, 4294901760
    %v2227 = vsub.f32 %v2123, %v2226
    %v2228 = vand.u32 %v2227, 4294901760
    %v2229 = vsub.f32 %v2227, %v2228
    %v2230 = vand.u32 %v2229, 4294901760
    %2231 = vmatpush.msra.mxu0 %v2230
    %v2232 = vand.u32 %v40, 4294901760
    %2233 = vmatmul.f32.gmra.mxu0 %v2232
    %v2234 = vpop.f32.mrf.mxu0
    %v2235 = vadd.f32 %v2154, %v2234
    %v2236 = vand.u32 %v43, 4294901760
    %2237 = vmatmul.f32.gmra.mxu0 %v2236
    %v2238 = vpop.f32.mrf.mxu0
    %v2239 = vadd.f32 %v2162, %v2238
    %v2240 = vand.u32 %v46, 4294901760
    %2241 = vmatmul.f32.gmra.mxu0 %v2240
    %v2242 = vpop.f32.mrf.mxu0
    %v2243 = vadd.f32 %v2170, %v2242
    %v2244 = vand.u32 %v49, 4294901760
    %2245 = vmatmul.f32.gmra.mxu0 %v2244
    %v2246 = vpop.f32.mrf.mxu0
    %v2247 = vadd.f32 %v2178, %v2246
    %v2248 = vand.u32 %v52, 4294901760
    %2249 = vmatmul.f32.gmra.mxu0 %v2248
    %v2250 = vpop.f32.mrf.mxu0
    %v2251 = vadd.f32 %v2186, %v2250
    %v2252 = vand.u32 %v55, 4294901760
    %2253 = vmatmul.f32.gmra.mxu0 %v2252
    %v2254 = vpop.f32.mrf.mxu0
    %v2255 = vadd.f32 %v2194, %v2254
    %2256 = vdwg.mxu0
    %2257 = vmatpush.msra.mxu0 0.0
    %2258 = vmatpush.msra.mxu0 0.0
    %2259 = vmatpush.msra.mxu0 0.0
    %2260 = vmatpush.msra.mxu0 0.0
    %2261 = vmatpush.msra.mxu0 0.0
    %2262 = vmatpush.msra.mxu0 0.0
    %2263 = vmatpush.msra.mxu0 0.0
    %2264 = vmatpush.msra.mxu0 0.0
    %2265 = vmatpush.msra.mxu0 0.0
    %2266 = vmatpush.msra.mxu0 0.0
    %2267 = vmatpush.msra.mxu0 0.0
    %2268 = vmatpush.msra.mxu0 0.0
    %v2269 = vand.u32 %v2126, 4294901760
    %v2270 = vsub.f32 %v2126, %v2269
    %2271 = vmatpush.msra.mxu0 %v2270
    %v2272 = vand.u32 %v2125, 4294901760
    %v2273 = vsub.f32 %v2125, %v2272
    %2274 = vmatpush.msra.mxu0 %v2273
    %v2275 = vand.u32 %v2124, 4294901760
    %v2276 = vsub.f32 %v2124, %v2275
    %2277 = vmatpush.msra.mxu0 %v2276
    %v2278 = vand.u32 %v2123, 4294901760
    %v2279 = vsub.f32 %v2123, %v2278
    %2280 = vmatpush.msra.mxu0 %v2279
    %v2281 = vand.u32 %v40, 4294901760
    %v2282 = vsub.f32 %v40, %v2281
    %2283 = vmatmul.f32.gmra.mxu0 %v2282
    %v2284 = vpop.f32.mrf.mxu0
    %v2285 = vadd.f32 %v2235, %v2284
    %v2286 = vand.u32 %v43, 4294901760
    %v2287 = vsub.f32 %v43, %v2286
    %2288 = vmatmul.f32.gmra.mxu0 %v2287
    %v2289 = vpop.f32.mrf.mxu0
    %v2290 = vadd.f32 %v2239, %v2289
    %v2291 = vand.u32 %v46, 4294901760
    %v2292 = vsub.f32 %v46, %v2291
    %2293 = vmatmul.f32.gmra.mxu0 %v2292
    %v2294 = vpop.f32.mrf.mxu0
    %v2295 = vadd.f32 %v2243, %v2294
    %v2296 = vand.u32 %v49, 4294901760
    %v2297 = vsub.f32 %v49, %v2296
    %2298 = vmatmul.f32.gmra.mxu0 %v2297
    %v2299 = vpop.f32.mrf.mxu0
    %v2300 = vadd.f32 %v2247, %v2299
    %v2301 = vand.u32 %v52, 4294901760
    %v2302 = vsub.f32 %v52, %v2301
    %2303 = vmatmul.f32.gmra.mxu0 %v2302
    %v2304 = vpop.f32.mrf.mxu0
    %v2305 = vadd.f32 %v2251, %v2304
    %v2306 = vand.u32 %v55, 4294901760
    %v2307 = vsub.f32 %v55, %v2306
    %2308 = vmatmul.f32.gmra.mxu0 %v2307
    %v2309 = vpop.f32.mrf.mxu0
    %v2310 = vadd.f32 %v2255, %v2309
    %2311 = vdwg.mxu0
    %2312 = vmatpush.msra.mxu0 0.0
    %2313 = vmatpush.msra.mxu0 0.0
    %2314 = vmatpush.msra.mxu0 0.0
    %2315 = vmatpush.msra.mxu0 0.0
    %2316 = vmatpush.msra.mxu0 0.0
    %2317 = vmatpush.msra.mxu0 0.0
    %2318 = vmatpush.msra.mxu0 0.0
    %2319 = vmatpush.msra.mxu0 0.0
    %2320 = vmatpush.msra.mxu0 0.0
    %2321 = vmatpush.msra.mxu0 0.0
    %2322 = vmatpush.msra.mxu0 0.0
    %2323 = vmatpush.msra.mxu0 0.0
    %v2324 = vand.u32 %v2126, 4294901760
    %2325 = vmatpush.msra.mxu0 %v2324
    %v2326 = vand.u32 %v2125, 4294901760
    %2327 = vmatpush.msra.mxu0 %v2326
    %v2328 = vand.u32 %v2124, 4294901760
    %2329 = vmatpush.msra.mxu0 %v2328
    %v2330 = vand.u32 %v2123, 4294901760
    %2331 = vmatpush.msra.mxu0 %v2330
    %v2332 = vand.u32 %v40, 4294901760
    %v2333 = vsub.f32 %v40, %v2332
    %v2334 = vand.u32 %v2333, 4294901760
    %2335 = vmatmul.f32.gmra.mxu0 %v2334
    %v2336 = vpop.f32.mrf.mxu0
    %v2337 = vadd.f32 %v2285, %v2336
    %v2338 = vand.u32 %v43, 4294901760
    %v2339 = vsub.f32 %v43, %v2338
    %v2340 = vand.u32 %v2339, 4294901760
    %2341 = vmatmul.f32.gmra.mxu0 %v2340
    %v2342 = vpop.f32.mrf.mxu0
    %v2343 = vadd.f32 %v2290, %v2342
    %v2344 = vand.u32 %v46, 4294901760
    %v2345 = vsub.f32 %v46, %v2344
    %v2346 = vand.u32 %v2345, 4294901760
    %2347 = vmatmul.f32.gmra.mxu0 %v2346
    %v2348 = vpop.f32.mrf.mxu0
    %v2349 = vadd.f32 %v2295, %v2348
    %v2350 = vand.u32 %v49, 4294901760
    %v2351 = vsub.f32 %v49, %v2350
    %v2352 = vand.u32 %v2351, 4294901760
    %2353 = vmatmul.f32.gmra.mxu0 %v2352
    %v2354 = vpop.f32.mrf.mxu0
    %v2355 = vadd.f32 %v2300, %v2354
    %v2356 = vand.u32 %v52, 4294901760
    %v2357 = vsub.f32 %v52, %v2356
    %v2358 = vand.u32 %v2357, 4294901760
    %2359 = vmatmul.f32.gmra.mxu0 %v2358
    %v2360 = vpop.f32.mrf.mxu0
    %v2361 = vadd.f32 %v2305, %v2360
    %v2362 = vand.u32 %v55, 4294901760
    %v2363 = vsub.f32 %v55, %v2362
    %v2364 = vand.u32 %v2363, 4294901760
    %2365 = vmatmul.f32.gmra.mxu0 %v2364
    %v2366 = vpop.f32.mrf.mxu0
    %v2367 = vadd.f32 %v2310, %v2366
    %2368 = vdwg.mxu0
    %2369 = vmatpush.msra.mxu0 0.0
    %2370 = vmatpush.msra.mxu0 0.0
    %2371 = vmatpush.msra.mxu0 0.0
    %2372 = vmatpush.msra.mxu0 0.0
    %2373 = vmatpush.msra.mxu0 0.0
    %2374 = vmatpush.msra.mxu0 0.0
    %2375 = vmatpush.msra.mxu0 0.0
    %2376 = vmatpush.msra.mxu0 0.0
    %2377 = vmatpush.msra.mxu0 0.0
    %2378 = vmatpush.msra.mxu0 0.0
    %2379 = vmatpush.msra.mxu0 0.0
    %2380 = vmatpush.msra.mxu0 0.0
    %v2381 = vand.u32 %v2126, 4294901760
    %v2382 = vsub.f32 %v2126, %v2381
    %v2383 = vand.u32 %v2382, 4294901760
    %2384 = vmatpush.msra.mxu0 %v2383
    %v2385 = vand.u32 %v2125, 4294901760
    %v2386 = vsub.f32 %v2125, %v2385
    %v2387 = vand.u32 %v2386, 4294901760
    %2388 = vmatpush.msra.mxu0 %v2387
    %v2389 = vand.u32 %v2124, 4294901760
    %v2390 = vsub.f32 %v2124, %v2389
    %v2391 = vand.u32 %v2390, 4294901760
    %2392 = vmatpush.msra.mxu0 %v2391
    %v2393 = vand.u32 %v2123, 4294901760
    %v2394 = vsub.f32 %v2123, %v2393
    %v2395 = vand.u32 %v2394, 4294901760
    %2396 = vmatpush.msra.mxu0 %v2395
    %v2397 = vand.u32 %v40, 4294901760
    %2398 = vmatmul.f32.gmra.mxu0 %v2397
    %v2399 = vpop.f32.mrf.mxu0
    %v2400 = vadd.f32 %v2337, %v2399
    %v2401 = vand.u32 %v43, 4294901760
    %2402 = vmatmul.f32.gmra.mxu0 %v2401
    %v2403 = vpop.f32.mrf.mxu0
    %v2404 = vadd.f32 %v2343, %v2403
    %v2405 = vand.u32 %v46, 4294901760
    %2406 = vmatmul.f32.gmra.mxu0 %v2405
    %v2407 = vpop.f32.mrf.mxu0
    %v2408 = vadd.f32 %v2349, %v2407
    %v2409 = vand.u32 %v49, 4294901760
    %2410 = vmatmul.f32.gmra.mxu0 %v2409
    %v2411 = vpop.f32.mrf.mxu0
    %v2412 = vadd.f32 %v2355, %v2411
    %v2413 = vand.u32 %v52, 4294901760
    %2414 = vmatmul.f32.gmra.mxu0 %v2413
    %v2415 = vpop.f32.mrf.mxu0
    %v2416 = vadd.f32 %v2361, %v2415
    %v2417 = vand.u32 %v55, 4294901760
    %2418 = vmatmul.f32.gmra.mxu0 %v2417
    %v2419 = vpop.f32.mrf.mxu0
    %v2420 = vadd.f32 %v2367, %v2419
    %2421 = vdwg.mxu0
    %2422 = vmatpush.msra.mxu0 0.0
    %2423 = vmatpush.msra.mxu0 0.0
    %2424 = vmatpush.msra.mxu0 0.0
    %2425 = vmatpush.msra.mxu0 0.0
    %2426 = vmatpush.msra.mxu0 0.0
    %2427 = vmatpush.msra.mxu0 0.0
    %2428 = vmatpush.msra.mxu0 0.0
    %2429 = vmatpush.msra.mxu0 0.0
    %2430 = vmatpush.msra.mxu0 0.0
    %2431 = vmatpush.msra.mxu0 0.0
    %2432 = vmatpush.msra.mxu0 0.0
    %2433 = vmatpush.msra.mxu0 0.0
    %v2434 = vand.u32 %v2126, 4294901760
    %2435 = vmatpush.msra.mxu0 %v2434
    %v2436 = vand.u32 %v2125, 4294901760
    %2437 = vmatpush.msra.mxu0 %v2436
    %v2438 = vand.u32 %v2124, 4294901760
    %2439 = vmatpush.msra.mxu0 %v2438
    %v2440 = vand.u32 %v2123, 4294901760
    %2441 = vmatpush.msra.mxu0 %v2440
    %v2442 = vand.u32 %v40, 4294901760
    %2443 = vmatmul.f32.gmra.mxu0 %v2442
    %v2444 = vpop.f32.mrf.mxu0
    %v2445 = vadd.f32 %v2400, %v2444
    %v2446 = vand.u32 %v43, 4294901760
    %2447 = vmatmul.f32.gmra.mxu0 %v2446
    %v2448 = vpop.f32.mrf.mxu0
    %v2449 = vadd.f32 %v2404, %v2448
    %v2450 = vand.u32 %v46, 4294901760
    %2451 = vmatmul.f32.gmra.mxu0 %v2450
    %v2452 = vpop.f32.mrf.mxu0
    %v2453 = vadd.f32 %v2408, %v2452
    %v2454 = vand.u32 %v49, 4294901760
    %2455 = vmatmul.f32.gmra.mxu0 %v2454
    %v2456 = vpop.f32.mrf.mxu0
    %v2457 = vadd.f32 %v2412, %v2456
    %v2458 = vand.u32 %v52, 4294901760
    %2459 = vmatmul.f32.gmra.mxu0 %v2458
    %v2460 = vpop.f32.mrf.mxu0
    %v2461 = vadd.f32 %v2416, %v2460
    %v2462 = vand.u32 %v55, 4294901760
    %2463 = vmatmul.f32.gmra.mxu0 %v2462
    %v2464 = vpop.f32.mrf.mxu0
    %v2465 = vadd.f32 %v2420, %v2464
    %2466 = vdwg.mxu0
    %s2467 = scalar_lea.vmem [#allocation2], 224
    %v2468 = vld [vmem:[%s2467] sm:$0xff]
    %v2469 = vld [vmem:[%s2467 + $0x8] sm:$0xff]
    %v2470 = vld [vmem:[%s2467 + $0x10] sm:$0xff]
    %v2471 = vld [vmem:[%s2467 + $0x18] sm:$0xff]
    %2472 = vmatpush.msra.mxu0 0.0
    %2473 = vmatpush.msra.mxu0 0.0
    %2474 = vmatpush.msra.mxu0 0.0
    %2475 = vmatpush.msra.mxu0 0.0
    %2476 = vmatpush.msra.mxu0 0.0
    %2477 = vmatpush.msra.mxu0 0.0
    %2478 = vmatpush.msra.mxu0 0.0
    %2479 = vmatpush.msra.mxu0 0.0
    %2480 = vmatpush.msra.mxu0 0.0
    %2481 = vmatpush.msra.mxu0 0.0
    %2482 = vmatpush.msra.mxu0 0.0
    %2483 = vmatpush.msra.mxu0 0.0
    %v2484 = vand.u32 %v2471, 4294901760
    %2485 = vmatpush.msra.mxu0 %v2484
    %v2486 = vand.u32 %v2470, 4294901760
    %2487 = vmatpush.msra.mxu0 %v2486
    %v2488 = vand.u32 %v2469, 4294901760
    %2489 = vmatpush.msra.mxu0 %v2488
    %v2490 = vand.u32 %v2468, 4294901760
    %2491 = vmatpush.msra.mxu0 %v2490
    %v2492 = vand.u32 %v40, 4294901760
    %v2493 = vsub.f32 %v40, %v2492
    %v2494 = vand.u32 %v2493, 4294901760
    %v2495 = vsub.f32 %v2493, %v2494
    %v2496 = vand.u32 %v2495, 4294901760
    %2497 = vmatmul.f32.gmra.mxu0 %v2496
    %v2498 = vpop.f32.mrf.mxu0
    %v2499 = vadd.f32 0.0, %v2498
    %v2500 = vand.u32 %v43, 4294901760
    %v2501 = vsub.f32 %v43, %v2500
    %v2502 = vand.u32 %v2501, 4294901760
    %v2503 = vsub.f32 %v2501, %v2502
    %v2504 = vand.u32 %v2503, 4294901760
    %2505 = vmatmul.f32.gmra.mxu0 %v2504
    %v2506 = vpop.f32.mrf.mxu0
    %v2507 = vadd.f32 0.0, %v2506
    %v2508 = vand.u32 %v46, 4294901760
    %v2509 = vsub.f32 %v46, %v2508
    %v2510 = vand.u32 %v2509, 4294901760
    %v2511 = vsub.f32 %v2509, %v2510
    %v2512 = vand.u32 %v2511, 4294901760
    %2513 = vmatmul.f32.gmra.mxu0 %v2512
    %v2514 = vpop.f32.mrf.mxu0
    %v2515 = vadd.f32 0.0, %v2514
    %v2516 = vand.u32 %v49, 4294901760
    %v2517 = vsub.f32 %v49, %v2516
    %v2518 = vand.u32 %v2517, 4294901760
    %v2519 = vsub.f32 %v2517, %v2518
    %v2520 = vand.u32 %v2519, 4294901760
    %2521 = vmatmul.f32.gmra.mxu0 %v2520
    %v2522 = vpop.f32.mrf.mxu0
    %v2523 = vadd.f32 0.0, %v2522
    %v2524 = vand.u32 %v52, 4294901760
    %v2525 = vsub.f32 %v52, %v2524
    %v2526 = vand.u32 %v2525, 4294901760
    %v2527 = vsub.f32 %v2525, %v2526
    %v2528 = vand.u32 %v2527, 4294901760
    %2529 = vmatmul.f32.gmra.mxu0 %v2528
    %v2530 = vpop.f32.mrf.mxu0
    %v2531 = vadd.f32 0.0, %v2530
    %v2532 = vand.u32 %v55, 4294901760
    %v2533 = vsub.f32 %v55, %v2532
    %v2534 = vand.u32 %v2533, 4294901760
    %v2535 = vsub.f32 %v2533, %v2534
    %v2536 = vand.u32 %v2535, 4294901760
    %2537 = vmatmul.f32.gmra.mxu0 %v2536
    %v2538 = vpop.f32.mrf.mxu0
    %v2539 = vadd.f32 0.0, %v2538
    %2540 = vdwg.mxu0
    %2541 = vmatpush.msra.mxu0 0.0
    %2542 = vmatpush.msra.mxu0 0.0
    %2543 = vmatpush.msra.mxu0 0.0
    %2544 = vmatpush.msra.mxu0 0.0
    %2545 = vmatpush.msra.mxu0 0.0
    %2546 = vmatpush.msra.mxu0 0.0
    %2547 = vmatpush.msra.mxu0 0.0
    %2548 = vmatpush.msra.mxu0 0.0
    %2549 = vmatpush.msra.mxu0 0.0
    %2550 = vmatpush.msra.mxu0 0.0
    %2551 = vmatpush.msra.mxu0 0.0
    %2552 = vmatpush.msra.mxu0 0.0
    %v2553 = vand.u32 %v2471, 4294901760
    %v2554 = vsub.f32 %v2471, %v2553
    %v2555 = vand.u32 %v2554, 4294901760
    %v2556 = vsub.f32 %v2554, %v2555
    %v2557 = vand.u32 %v2556, 4294901760
    %2558 = vmatpush.msra.mxu0 %v2557
    %v2559 = vand.u32 %v2470, 4294901760
    %v2560 = vsub.f32 %v2470, %v2559
    %v2561 = vand.u32 %v2560, 4294901760
    %v2562 = vsub.f32 %v2560, %v2561
    %v2563 = vand.u32 %v2562, 4294901760
    %2564 = vmatpush.msra.mxu0 %v2563
    %v2565 = vand.u32 %v2469, 4294901760
    %v2566 = vsub.f32 %v2469, %v2565
    %v2567 = vand.u32 %v2566, 4294901760
    %v2568 = vsub.f32 %v2566, %v2567
    %v2569 = vand.u32 %v2568, 4294901760
    %2570 = vmatpush.msra.mxu0 %v2569
    %v2571 = vand.u32 %v2468, 4294901760
    %v2572 = vsub.f32 %v2468, %v2571
    %v2573 = vand.u32 %v2572, 4294901760
    %v2574 = vsub.f32 %v2572, %v2573
    %v2575 = vand.u32 %v2574, 4294901760
    %2576 = vmatpush.msra.mxu0 %v2575
    %v2577 = vand.u32 %v40, 4294901760
    %2578 = vmatmul.f32.gmra.mxu0 %v2577
    %v2579 = vpop.f32.mrf.mxu0
    %v2580 = vadd.f32 %v2499, %v2579
    %v2581 = vand.u32 %v43, 4294901760
    %2582 = vmatmul.f32.gmra.mxu0 %v2581
    %v2583 = vpop.f32.mrf.mxu0
    %v2584 = vadd.f32 %v2507, %v2583
    %v2585 = vand.u32 %v46, 4294901760
    %2586 = vmatmul.f32.gmra.mxu0 %v2585
    %v2587 = vpop.f32.mrf.mxu0
    %v2588 = vadd.f32 %v2515, %v2587
    %v2589 = vand.u32 %v49, 4294901760
    %2590 = vmatmul.f32.gmra.mxu0 %v2589
    %v2591 = vpop.f32.mrf.mxu0
    %v2592 = vadd.f32 %v2523, %v2591
    %v2593 = vand.u32 %v52, 4294901760
    %2594 = vmatmul.f32.gmra.mxu0 %v2593
    %v2595 = vpop.f32.mrf.mxu0
    %v2596 = vadd.f32 %v2531, %v2595
    %v2597 = vand.u32 %v55, 4294901760
    %2598 = vmatmul.f32.gmra.mxu0 %v2597
    %v2599 = vpop.f32.mrf.mxu0
    %v2600 = vadd.f32 %v2539, %v2599
    %2601 = vdwg.mxu0
    %2602 = vmatpush.msra.mxu0 0.0
    %2603 = vmatpush.msra.mxu0 0.0
    %2604 = vmatpush.msra.mxu0 0.0
    %2605 = vmatpush.msra.mxu0 0.0
    %2606 = vmatpush.msra.mxu0 0.0
    %2607 = vmatpush.msra.mxu0 0.0
    %2608 = vmatpush.msra.mxu0 0.0
    %2609 = vmatpush.msra.mxu0 0.0
    %2610 = vmatpush.msra.mxu0 0.0
    %2611 = vmatpush.msra.mxu0 0.0
    %2612 = vmatpush.msra.mxu0 0.0
    %2613 = vmatpush.msra.mxu0 0.0
    %v2614 = vand.u32 %v2471, 4294901760
    %v2615 = vsub.f32 %v2471, %v2614
    %2616 = vmatpush.msra.mxu0 %v2615
    %v2617 = vand.u32 %v2470, 4294901760
    %v2618 = vsub.f32 %v2470, %v2617
    %2619 = vmatpush.msra.mxu0 %v2618
    %v2620 = vand.u32 %v2469, 4294901760
    %v2621 = vsub.f32 %v2469, %v2620
    %2622 = vmatpush.msra.mxu0 %v2621
    %v2623 = vand.u32 %v2468, 4294901760
    %v2624 = vsub.f32 %v2468, %v2623
    %2625 = vmatpush.msra.mxu0 %v2624
    %v2626 = vand.u32 %v40, 4294901760
    %v2627 = vsub.f32 %v40, %v2626
    %2628 = vmatmul.f32.gmra.mxu0 %v2627
    %v2629 = vpop.f32.mrf.mxu0
    %v2630 = vadd.f32 %v2580, %v2629
    %v2631 = vand.u32 %v43, 4294901760
    %v2632 = vsub.f32 %v43, %v2631
    %2633 = vmatmul.f32.gmra.mxu0 %v2632
    %v2634 = vpop.f32.mrf.mxu0
    %v2635 = vadd.f32 %v2584, %v2634
    %v2636 = vand.u32 %v46, 4294901760
    %v2637 = vsub.f32 %v46, %v2636
    %2638 = vmatmul.f32.gmra.mxu0 %v2637
    %v2639 = vpop.f32.mrf.mxu0
    %v2640 = vadd.f32 %v2588, %v2639
    %v2641 = vand.u32 %v49, 4294901760
    %v2642 = vsub.f32 %v49, %v2641
    %2643 = vmatmul.f32.gmra.mxu0 %v2642
    %v2644 = vpop.f32.mrf.mxu0
    %v2645 = vadd.f32 %v2592, %v2644
    %v2646 = vand.u32 %v52, 4294901760
    %v2647 = vsub.f32 %v52, %v2646
    %2648 = vmatmul.f32.gmra.mxu0 %v2647
    %v2649 = vpop.f32.mrf.mxu0
    %v2650 = vadd.f32 %v2596, %v2649
    %v2651 = vand.u32 %v55, 4294901760
    %v2652 = vsub.f32 %v55, %v2651
    %2653 = vmatmul.f32.gmra.mxu0 %v2652
    %v2654 = vpop.f32.mrf.mxu0
    %v2655 = vadd.f32 %v2600, %v2654
    %2656 = vdwg.mxu0
    %2657 = vmatpush.msra.mxu0 0.0
    %2658 = vmatpush.msra.mxu0 0.0
    %2659 = vmatpush.msra.mxu0 0.0
    %2660 = vmatpush.msra.mxu0 0.0
    %2661 = vmatpush.msra.mxu0 0.0
    %2662 = vmatpush.msra.mxu0 0.0
    %2663 = vmatpush.msra.mxu0 0.0
    %2664 = vmatpush.msra.mxu0 0.0
    %2665 = vmatpush.msra.mxu0 0.0
    %2666 = vmatpush.msra.mxu0 0.0
    %2667 = vmatpush.msra.mxu0 0.0
    %2668 = vmatpush.msra.mxu0 0.0
    %v2669 = vand.u32 %v2471, 4294901760
    %2670 = vmatpush.msra.mxu0 %v2669
    %v2671 = vand.u32 %v2470, 4294901760
    %2672 = vmatpush.msra.mxu0 %v2671
    %v2673 = vand.u32 %v2469, 4294901760
    %2674 = vmatpush.msra.mxu0 %v2673
    %v2675 = vand.u32 %v2468, 4294901760
    %2676 = vmatpush.msra.mxu0 %v2675
    %v2677 = vand.u32 %v40, 4294901760
    %v2678 = vsub.f32 %v40, %v2677
    %v2679 = vand.u32 %v2678, 4294901760
    %2680 = vmatmul.f32.gmra.mxu0 %v2679
    %v2681 = vpop.f32.mrf.mxu0
    %v2682 = vadd.f32 %v2630, %v2681
    %v2683 = vand.u32 %v43, 4294901760
    %v2684 = vsub.f32 %v43, %v2683
    %v2685 = vand.u32 %v2684, 4294901760
    %2686 = vmatmul.f32.gmra.mxu0 %v2685
    %v2687 = vpop.f32.mrf.mxu0
    %v2688 = vadd.f32 %v2635, %v2687
    %v2689 = vand.u32 %v46, 4294901760
    %v2690 = vsub.f32 %v46, %v2689
    %v2691 = vand.u32 %v2690, 4294901760
    %2692 = vmatmul.f32.gmra.mxu0 %v2691
    %v2693 = vpop.f32.mrf.mxu0
    %v2694 = vadd.f32 %v2640, %v2693
    %v2695 = vand.u32 %v49, 4294901760
    %v2696 = vsub.f32 %v49, %v2695
    %v2697 = vand.u32 %v2696, 4294901760
    %2698 = vmatmul.f32.gmra.mxu0 %v2697
    %v2699 = vpop.f32.mrf.mxu0
    %v2700 = vadd.f32 %v2645, %v2699
    %v2701 = vand.u32 %v52, 4294901760
    %v2702 = vsub.f32 %v52, %v2701
    %v2703 = vand.u32 %v2702, 4294901760
    %2704 = vmatmul.f32.gmra.mxu0 %v2703
    %v2705 = vpop.f32.mrf.mxu0
    %v2706 = vadd.f32 %v2650, %v2705
    %v2707 = vand.u32 %v55, 4294901760
    %v2708 = vsub.f32 %v55, %v2707
    %v2709 = vand.u32 %v2708, 4294901760
    %2710 = vmatmul.f32.gmra.mxu0 %v2709
    %v2711 = vpop.f32.mrf.mxu0
    %v2712 = vadd.f32 %v2655, %v2711
    %2713 = vdwg.mxu0
    %2714 = vmatpush.msra.mxu0 0.0
    %2715 = vmatpush.msra.mxu0 0.0
    %2716 = vmatpush.msra.mxu0 0.0
    %2717 = vmatpush.msra.mxu0 0.0
    %2718 = vmatpush.msra.mxu0 0.0
    %2719 = vmatpush.msra.mxu0 0.0
    %2720 = vmatpush.msra.mxu0 0.0
    %2721 = vmatpush.msra.mxu0 0.0
    %2722 = vmatpush.msra.mxu0 0.0
    %2723 = vmatpush.msra.mxu0 0.0
    %2724 = vmatpush.msra.mxu0 0.0
    %2725 = vmatpush.msra.mxu0 0.0
    %v2726 = vand.u32 %v2471, 4294901760
    %v2727 = vsub.f32 %v2471, %v2726
    %v2728 = vand.u32 %v2727, 4294901760
    %2729 = vmatpush.msra.mxu0 %v2728
    %v2730 = vand.u32 %v2470, 4294901760
    %v2731 = vsub.f32 %v2470, %v2730
    %v2732 = vand.u32 %v2731, 4294901760
    %2733 = vmatpush.msra.mxu0 %v2732
    %v2734 = vand.u32 %v2469, 4294901760
    %v2735 = vsub.f32 %v2469, %v2734
    %v2736 = vand.u32 %v2735, 4294901760
    %2737 = vmatpush.msra.mxu0 %v2736
    %v2738 = vand.u32 %v2468, 4294901760
    %v2739 = vsub.f32 %v2468, %v2738
    %v2740 = vand.u32 %v2739, 4294901760
    %2741 = vmatpush.msra.mxu0 %v2740
    %v2742 = vand.u32 %v40, 4294901760
    %2743 = vmatmul.f32.gmra.mxu0 %v2742
    %v2744 = vpop.f32.mrf.mxu0
    %v2745 = vadd.f32 %v2682, %v2744
    %v2746 = vand.u32 %v43, 4294901760
    %2747 = vmatmul.f32.gmra.mxu0 %v2746
    %v2748 = vpop.f32.mrf.mxu0
    %v2749 = vadd.f32 %v2688, %v2748
    %v2750 = vand.u32 %v46, 4294901760
    %2751 = vmatmul.f32.gmra.mxu0 %v2750
    %v2752 = vpop.f32.mrf.mxu0
    %v2753 = vadd.f32 %v2694, %v2752
    %v2754 = vand.u32 %v49, 4294901760
    %2755 = vmatmul.f32.gmra.mxu0 %v2754
    %v2756 = vpop.f32.mrf.mxu0
    %v2757 = vadd.f32 %v2700, %v2756
    %v2758 = vand.u32 %v52, 4294901760
    %2759 = vmatmul.f32.gmra.mxu0 %v2758
    %v2760 = vpop.f32.mrf.mxu0
    %v2761 = vadd.f32 %v2706, %v2760
    %v2762 = vand.u32 %v55, 4294901760
    %2763 = vmatmul.f32.gmra.mxu0 %v2762
    %v2764 = vpop.f32.mrf.mxu0
    %v2765 = vadd.f32 %v2712, %v2764
    %2766 = vdwg.mxu0
    %2767 = vmatpush.msra.mxu0 0.0
    %2768 = vmatpush.msra.mxu0 0.0
    %2769 = vmatpush.msra.mxu0 0.0
    %2770 = vmatpush.msra.mxu0 0.0
    %2771 = vmatpush.msra.mxu0 0.0
    %2772 = vmatpush.msra.mxu0 0.0
    %2773 = vmatpush.msra.mxu0 0.0
    %2774 = vmatpush.msra.mxu0 0.0
    %2775 = vmatpush.msra.mxu0 0.0
    %2776 = vmatpush.msra.mxu0 0.0
    %2777 = vmatpush.msra.mxu0 0.0
    %2778 = vmatpush.msra.mxu0 0.0
    %v2779 = vand.u32 %v2471, 4294901760
    %2780 = vmatpush.msra.mxu0 %v2779
    %v2781 = vand.u32 %v2470, 4294901760
    %2782 = vmatpush.msra.mxu0 %v2781
    %v2783 = vand.u32 %v2469, 4294901760
    %2784 = vmatpush.msra.mxu0 %v2783
    %v2785 = vand.u32 %v2468, 4294901760
    %2786 = vmatpush.msra.mxu0 %v2785
    %v2787 = vand.u32 %v40, 4294901760
    %2788 = vmatmul.f32.gmra.mxu0 %v2787
    %v2789 = vpop.f32.mrf.mxu0
    %v2790 = vadd.f32 %v2745, %v2789
    %v2791 = vand.u32 %v43, 4294901760
    %2792 = vmatmul.f32.gmra.mxu0 %v2791
    %v2793 = vpop.f32.mrf.mxu0
    %v2794 = vadd.f32 %v2749, %v2793
    %v2795 = vand.u32 %v46, 4294901760
    %2796 = vmatmul.f32.gmra.mxu0 %v2795
    %v2797 = vpop.f32.mrf.mxu0
    %v2798 = vadd.f32 %v2753, %v2797
    %v2799 = vand.u32 %v49, 4294901760
    %2800 = vmatmul.f32.gmra.mxu0 %v2799
    %v2801 = vpop.f32.mrf.mxu0
    %v2802 = vadd.f32 %v2757, %v2801
    %v2803 = vand.u32 %v52, 4294901760
    %2804 = vmatmul.f32.gmra.mxu0 %v2803
    %v2805 = vpop.f32.mrf.mxu0
    %v2806 = vadd.f32 %v2761, %v2805
    %v2807 = vand.u32 %v55, 4294901760
    %2808 = vmatmul.f32.gmra.mxu0 %v2807
    %v2809 = vpop.f32.mrf.mxu0
    %v2810 = vadd.f32 %v2765, %v2809
    %2811 = vdwg.mxu0
    %v2812 = vmul.f32 %v383, %v375
    %v2813 = vmul.f32 %v387, %v379
    %vm2814 = vcmask 523264
    %v2815 = vsel %vm2814, %v2812, 0.0
    %v2816 = vsel %vm2814, %v2813, 0.0
    %v2817 = vadd.f32 %v2815, %v2816
    %v2818 = vrot.slane %v2817, 4
    %v2819 = vadd.f32 %v2817, %v2818
    %v2820 = vrot.slane %v2819, 2
    %v2821 = vadd.f32 %v2819, %v2820
    %v2822 = vrot.slane %v2821, 1
    %v2823 = vadd.f32 %v2821, %v2822
    %v2824 = vmul.f32 %v2823, 0.17677669
    %v2825 = vsub.f32 %v2824, %v2824
    %v2826 = vmul.f32 %v2825, 1.442695
    %v2827 = vpow.pop %v2826
    %v2828 = vmul.f32 %v2827, %v391
    %v2829 = vmul.f32 %v2827, %v395
    %v2830 = vrcp.pop %v2827
    %v2831 = vmul.f32 %v2827, %v2830
    %v2832 = vsub.f32 1.0, %v2831
    %v2833 = vmul.f32 %v2830, %v2832
    %v2834 = vadd.f32 %v2830, %v2833
    %vm2835 = vweird.f32 %v2827
    %vm2836 = vweird.f32 %v2830
    %vm2837 = vmor %vm2835, %vm2836
    %v2838 = vsel %vm2837, %v2830, %v2834
    %v2839 = vand.u32 2147483647, %v2827
    %vm2840 = vcmp.eq.f32.partialorder %v2839, 8.507059e+37
    %v2841 = vand.u32 %v2827, 2147483648
    %v2842 = vor.u32 1.1754944e-38, %v2841
    %v2843 = vsel %vm2840, %v2842, %v2838
    %v2844 = vmul.f32 1.0, %v2843
    %v2845 = vmul.f32 %v2828, %v2844
    %v2846 = vmul.f32 %v2829, %v2844
    %2847 = vst.msk [vmem:[#allocation5] sm:$0xff] %vm2814, %v2845
    %2848 = vst.msk [vmem:[#allocation5 + $0x8] sm:$0xff] %vm2814, %v2846
    %v2849 = vmul.f32 %v728, %v375
    %v2850 = vmul.f32 %v732, %v379
    %v2851 = vsel %vm2814, %v2849, 0.0
    %v2852 = vsel %vm2814, %v2850, 0.0
    %v2853 = vadd.f32 %v2851, %v2852
    %v2854 = vrot.slane %v2853, 4
    %v2855 = vadd.f32 %v2853, %v2854
    %v2856 = vrot.slane %v2855, 2
    %v2857 = vadd.f32 %v2855, %v2856
    %v2858 = vrot.slane %v2857, 1
    %v2859 = vadd.f32 %v2857, %v2858
    %v2860 = vmul.f32 %v2859, 0.17677669
    %v2861 = vmul.f32 %v728, %v720
    %v2862 = vmul.f32 %v732, %v724
    %v2863 = vsel %vm2814, %v2861, 0.0
    %v2864 = vsel %vm2814, %v2862, 0.0
    %v2865 = vadd.f32 %v2863, %v2864
    %v2866 = vrot.slane %v2865, 4
    %v2867 = vadd.f32 %v2865, %v2866
    %v2868 = vrot.slane %v2867, 2
    %v2869 = vadd.f32 %v2867, %v2868
    %v2870 = vrot.slane %v2869, 1
    %v2871 = vadd.f32 %v2869, %v2870
    %v2872 = vmul.f32 %v2871, 0.17677669
    %v2873 = vmax.f32 %v2860, %v2872
    %v2874 = vsub.f32 %v2860, %v2873
    %v2875 = vmul.f32 %v2874, 1.442695
    %v2876 = vpow.pop %v2875
    %v2877 = vsub.f32 %v2872, %v2873
    %v2878 = vmul.f32 %v2877, 1.442695
    %v2879 = vpow.pop %v2878
    %v2880 = vadd.f32 %v2876, %v2879
    %v2881 = vmul.f32 %v2876, %v391
    %v2882 = vmul.f32 %v2876, %v395
    %v2883 = vmul.f32 %v2879, %v736
    %v2884 = vmul.f32 %v2879, %v740
    %v2885 = vadd.f32 %v2881, %v2883
    %v2886 = vadd.f32 %v2882, %v2884
    %v2887 = vrcp.pop %v2880
    %v2888 = vmul.f32 %v2880, %v2887
    %v2889 = vsub.f32 1.0, %v2888
    %v2890 = vmul.f32 %v2887, %v2889
    %v2891 = vadd.f32 %v2887, %v2890
    %vm2892 = vweird.f32 %v2880
    %vm2893 = vweird.f32 %v2887
    %vm2894 = vmor %vm2892, %vm2893
    %v2895 = vsel %vm2894, %v2887, %v2891
    %v2896 = vand.u32 2147483647, %v2880
    %vm2897 = vcmp.eq.f32.partialorder %v2896, 8.507059e+37
    %v2898 = vand.u32 %v2880, 2147483648
    %v2899 = vor.u32 1.1754944e-38, %v2898
    %v2900 = vsel %vm2897, %v2899, %v2895
    %v2901 = vmul.f32 1.0, %v2900
    %v2902 = vmul.f32 %v2885, %v2901
    %v2903 = vmul.f32 %v2886, %v2901
    %s2904 = scalar_lea.vmem [#allocation5], 16
    %2905 = vst.msk [vmem:[%s2904] sm:$0xff] %vm2814, %v2902
    %2906 = vst.msk [vmem:[%s2904 + $0x8] sm:$0xff] %vm2814, %v2903
    %v2907 = vmul.f32 %v1073, %v375
    %v2908 = vmul.f32 %v1077, %v379
    %v2909 = vsel %vm2814, %v2907, 0.0
    %v2910 = vsel %vm2814, %v2908, 0.0
    %v2911 = vadd.f32 %v2909, %v2910
    %v2912 = vrot.slane %v2911, 4
    %v2913 = vadd.f32 %v2911, %v2912
    %v2914 = vrot.slane %v2913, 2
    %v2915 = vadd.f32 %v2913, %v2914
    %v2916 = vrot.slane %v2915, 1
    %v2917 = vadd.f32 %v2915, %v2916
    %v2918 = vmul.f32 %v2917, 0.17677669
    %v2919 = vmul.f32 %v1073, %v720
    %v2920 = vmul.f32 %v1077, %v724
    %v2921 = vsel %vm2814, %v2919, 0.0
    %v2922 = vsel %vm2814, %v2920, 0.0
    %v2923 = vadd.f32 %v2921, %v2922
    %v2924 = vrot.slane %v2923, 4
    %v2925 = vadd.f32 %v2923, %v2924
    %v2926 = vrot.slane %v2925, 2
    %v2927 = vadd.f32 %v2925, %v2926
    %v2928 = vrot.slane %v2927, 1
    %v2929 = vadd.f32 %v2927, %v2928
    %v2930 = vmul.f32 %v2929, 0.17677669
    %v2931 = vmul.f32 %v1073, %v1065
    %v2932 = vmul.f32 %v1077, %v1069
    %v2933 = vsel %vm2814, %v2931, 0.0
    %v2934 = vsel %vm2814, %v2932, 0.0
    %v2935 = vadd.f32 %v2933, %v2934
    %v2936 = vrot.slane %v2935, 4
    %v2937 = vadd.f32 %v2935, %v2936
    %v2938 = vrot.slane %v2937, 2
    %v2939 = vadd.f32 %v2937, %v2938
    %v2940 = vrot.slane %v2939, 1
    %v2941 = vadd.f32 %v2939, %v2940
    %v2942 = vmul.f32 %v2941, 0.17677669
    %v2943 = vmax.f32 %v2918, %v2930
    %v2944 = vmax.f32 %v2943, %v2942
    %v2945 = vsub.f32 %v2918, %v2944
    %v2946 = vmul.f32 %v2945, 1.442695
    %v2947 = vpow.pop %v2946
    %v2948 = vsub.f32 %v2930, %v2944
    %v2949 = vmul.f32 %v2948, 1.442695
    %v2950 = vpow.pop %v2949
    %v2951 = vsub.f32 %v2942, %v2944
    %v2952 = vmul.f32 %v2951, 1.442695
    %v2953 = vpow.pop %v2952
    %v2954 = vadd.f32 %v2947, %v2950
    %v2955 = vadd.f32 %v2954, %v2953
    %v2956 = vmul.f32 %v2947, %v391
    %v2957 = vmul.f32 %v2947, %v395
    %v2958 = vmul.f32 %v2950, %v736
    %v2959 = vmul.f32 %v2950, %v740
    %v2960 = vmul.f32 %v2953, %v1081
    %v2961 = vmul.f32 %v2953, %v1085
    %v2962 = vadd.f32 %v2956, %v2958
    %v2963 = vadd.f32 %v2957, %v2959
    %v2964 = vadd.f32 %v2962, %v2960
    %v2965 = vadd.f32 %v2963, %v2961
    %v2966 = vrcp.pop %v2955
    %v2967 = vmul.f32 %v2955, %v2966
    %v2968 = vsub.f32 1.0, %v2967
    %v2969 = vmul.f32 %v2966, %v2968
    %v2970 = vadd.f32 %v2966, %v2969
    %vm2971 = vweird.f32 %v2955
    %vm2972 = vweird.f32 %v2966
    %vm2973 = vmor %vm2971, %vm2972
    %v2974 = vsel %vm2973, %v2966, %v2970
    %v2975 = vand.u32 2147483647, %v2955
    %vm2976 = vcmp.eq.f32.partialorder %v2975, 8.507059e+37
    %v2977 = vand.u32 %v2955, 2147483648
    %v2978 = vor.u32 1.1754944e-38, %v2977
    %v2979 = vsel %vm2976, %v2978, %v2974
    %v2980 = vmul.f32 1.0, %v2979
    %v2981 = vmul.f32 %v2964, %v2980
    %v2982 = vmul.f32 %v2965, %v2980
    %s2983 = scalar_lea.vmem [#allocation5], 32
    %2984 = vst.msk [vmem:[%s2983] sm:$0xff] %vm2814, %v2981
    %2985 = vst.msk [vmem:[%s2983 + $0x8] sm:$0xff] %vm2814, %v2982
    %v2986 = vmul.f32 %v1418, %v375
    %v2987 = vmul.f32 %v1422, %v379
    %v2988 = vsel %vm2814, %v2986, 0.0
    %v2989 = vsel %vm2814, %v2987, 0.0
    %v2990 = vadd.f32 %v2988, %v2989
    %v2991 = vrot.slane %v2990, 4
    %v2992 = vadd.f32 %v2990, %v2991
    %v2993 = vrot.slane %v2992, 2
    %v2994 = vadd.f32 %v2992, %v2993
    %v2995 = vrot.slane %v2994, 1
    %v2996 = vadd.f32 %v2994, %v2995
    %v2997 = vmul.f32 %v2996, 0.17677669
    %v2998 = vmul.f32 %v1418, %v720
    %v2999 = vmul.f32 %v1422, %v724
    %v3000 = vsel %vm2814, %v2998, 0.0
    %v3001 = vsel %vm2814, %v2999, 0.0
    %v3002 = vadd.f32 %v3000, %v3001
    %v3003 = vrot.slane %v3002, 4
    %v3004 = vadd.f32 %v3002, %v3003
    %v3005 = vrot.slane %v3004, 2
    %v3006 = vadd.f32 %v3004, %v3005
    %v3007 = vrot.slane %v3006, 1
    %v3008 = vadd.f32 %v3006, %v3007
    %v3009 = vmul.f32 %v3008, 0.17677669
    %v3010 = vmul.f32 %v1418, %v1065
    %v3011 = vmul.f32 %v1422, %v1069
    %v3012 = vsel %vm2814, %v3010, 0.0
    %v3013 = vsel %vm2814, %v3011, 0.0
    %v3014 = vadd.f32 %v3012, %v3013
    %v3015 = vrot.slane %v3014, 4
    %v3016 = vadd.f32 %v3014, %v3015
    %v3017 = vrot.slane %v3016, 2
    %v3018 = vadd.f32 %v3016, %v3017
    %v3019 = vrot.slane %v3018, 1
    %v3020 = vadd.f32 %v3018, %v3019
    %v3021 = vmul.f32 %v3020, 0.17677669
    %v3022 = vmul.f32 %v1418, %v1410
    %v3023 = vmul.f32 %v1422, %v1414
    %v3024 = vsel %vm2814, %v3022, 0.0
    %v3025 = vsel %vm2814, %v3023, 0.0
    %v3026 = vadd.f32 %v3024, %v3025
    %v3027 = vrot.slane %v3026, 4
    %v3028 = vadd.f32 %v3026, %v3027
    %v3029 = vrot.slane %v3028, 2
    %v3030 = vadd.f32 %v3028, %v3029
    %v3031 = vrot.slane %v3030, 1
    %v3032 = vadd.f32 %v3030, %v3031
    %v3033 = vmul.f32 %v3032, 0.17677669
    %v3034 = vmax.f32 %v2997, %v3009
    %v3035 = vmax.f32 %v3034, %v3021
    %v3036 = vmax.f32 %v3035, %v3033
    %v3037 = vsub.f32 %v2997, %v3036
    %v3038 = vmul.f32 %v3037, 1.442695
    %v3039 = vpow.pop %v3038
    %v3040 = vsub.f32 %v3009, %v3036
    %v3041 = vmul.f32 %v3040, 1.442695
    %v3042 = vpow.pop %v3041
    %v3043 = vsub.f32 %v3021, %v3036
    %v3044 = vmul.f32 %v3043, 1.442695
    %v3045 = vpow.pop %v3044
    %v3046 = vsub.f32 %v3033, %v3036
    %v3047 = vmul.f32 %v3046, 1.442695
    %v3048 = vpow.pop %v3047
    %v3049 = vadd.f32 %v3039, %v3042
    %v3050 = vadd.f32 %v3049, %v3045
    %v3051 = vadd.f32 %v3050, %v3048
    %v3052 = vmul.f32 %v3039, %v391
    %v3053 = vmul.f32 %v3039, %v395
    %v3054 = vmul.f32 %v3042, %v736
    %v3055 = vmul.f32 %v3042, %v740
    %v3056 = vmul.f32 %v3045, %v1081
    %v3057 = vmul.f32 %v3045, %v1085
    %v3058 = vmul.f32 %v3048, %v1426
    %v3059 = vmul.f32 %v3048, %v1430
    %v3060 = vadd.f32 %v3052, %v3054
    %v3061 = vadd.f32 %v3053, %v3055
    %v3062 = vadd.f32 %v3060, %v3056
    %v3063 = vadd.f32 %v3061, %v3057
    %v3064 = vadd.f32 %v3062, %v3058
    %v3065 = vadd.f32 %v3063, %v3059
    %v3066 = vrcp.pop %v3051
    %v3067 = vmul.f32 %v3051, %v3066
    %v3068 = vsub.f32 1.0, %v3067
    %v3069 = vmul.f32 %v3066, %v3068
    %v3070 = vadd.f32 %v3066, %v3069
    %vm3071 = vweird.f32 %v3051
    %vm3072 = vweird.f32 %v3066
    %vm3073 = vmor %vm3071, %vm3072
    %v3074 = vsel %vm3073, %v3066, %v3070
    %v3075 = vand.u32 2147483647, %v3051
    %vm3076 = vcmp.eq.f32.partialorder %v3075, 8.507059e+37
    %v3077 = vand.u32 %v3051, 2147483648
    %v3078 = vor.u32 1.1754944e-38, %v3077
    %v3079 = vsel %vm3076, %v3078, %v3074
    %v3080 = vmul.f32 1.0, %v3079
    %v3081 = vmul.f32 %v3064, %v3080
    %v3082 = vmul.f32 %v3065, %v3080
    %s3083 = scalar_lea.vmem [#allocation5], 48
    %3084 = vst.msk [vmem:[%s3083] sm:$0xff] %vm2814, %v3081
    %3085 = vst.msk [vmem:[%s3083 + $0x8] sm:$0xff] %vm2814, %v3082
    %v3086 = vmul.f32 %v1763, %v375
    %v3087 = vmul.f32 %v1767, %v379
    %v3088 = vsel %vm2814, %v3086, 0.0
    %v3089 = vsel %vm2814, %v3087, 0.0
    %v3090 = vadd.f32 %v3088, %v3089
    %v3091 = vrot.slane %v3090, 4
    %v3092 = vadd.f32 %v3090, %v3091
    %v3093 = vrot.slane %v3092, 2
    %v3094 = vadd.f32 %v3092, %v3093
    %v3095 = vrot.slane %v3094, 1
    %v3096 = vadd.f32 %v3094, %v3095
    %v3097 = vmul.f32 %v3096, 0.17677669
    %v3098 = vmul.f32 %v1763, %v720
    %v3099 = vmul.f32 %v1767, %v724
    %v3100 = vsel %vm2814, %v3098, 0.0
    %v3101 = vsel %vm2814, %v3099, 0.0
    %v3102 = vadd.f32 %v3100, %v3101
    %v3103 = vrot.slane %v3102, 4
    %v3104 = vadd.f32 %v3102, %v3103
    %v3105 = vrot.slane %v3104, 2
    %v3106 = vadd.f32 %v3104, %v3105
    %v3107 = vrot.slane %v3106, 1
    %v3108 = vadd.f32 %v3106, %v3107
    %v3109 = vmul.f32 %v3108, 0.17677669
    %v3110 = vmul.f32 %v1763, %v1065
    %v3111 = vmul.f32 %v1767, %v1069
    %v3112 = vsel %vm2814, %v3110, 0.0
    %v3113 = vsel %vm2814, %v3111, 0.0
    %v3114 = vadd.f32 %v3112, %v3113
    %v3115 = vrot.slane %v3114, 4
    %v3116 = vadd.f32 %v3114, %v3115
    %v3117 = vrot.slane %v3116, 2
    %v3118 = vadd.f32 %v3116, %v3117
    %v3119 = vrot.slane %v3118, 1
    %v3120 = vadd.f32 %v3118, %v3119
    %v3121 = vmul.f32 %v3120, 0.17677669
    %v3122 = vmul.f32 %v1763, %v1410
    %v3123 = vmul.f32 %v1767, %v1414
    %v3124 = vsel %vm2814, %v3122, 0.0
    %v3125 = vsel %vm2814, %v3123, 0.0
    %v3126 = vadd.f32 %v3124, %v3125
    %v3127 = vrot.slane %v3126, 4
    %v3128 = vadd.f32 %v3126, %v3127
    %v3129 = vrot.slane %v3128, 2
    %v3130 = vadd.f32 %v3128, %v3129
    %v3131 = vrot.slane %v3130, 1
    %v3132 = vadd.f32 %v3130, %v3131
    %v3133 = vmul.f32 %v3132, 0.17677669
    %v3134 = vmul.f32 %v1763, %v1755
    %v3135 = vmul.f32 %v1767, %v1759
    %v3136 = vsel %vm2814, %v3134, 0.0
    %v3137 = vsel %vm2814, %v3135, 0.0
    %v3138 = vadd.f32 %v3136, %v3137
    %v3139 = vrot.slane %v3138, 4
    %v3140 = vadd.f32 %v3138, %v3139
    %v3141 = vrot.slane %v3140, 2
    %v3142 = vadd.f32 %v3140, %v3141
    %v3143 = vrot.slane %v3142, 1
    %v3144 = vadd.f32 %v3142, %v3143
    %v3145 = vmul.f32 %v3144, 0.17677669
    %v3146 = vmax.f32 %v3097, %v3109
    %v3147 = vmax.f32 %v3146, %v3121
    %v3148 = vmax.f32 %v3147, %v3133
    %v3149 = vmax.f32 %v3148, %v3145
    %v3150 = vsub.f32 %v3097, %v3149
    %v3151 = vmul.f32 %v3150, 1.442695
    %v3152 = vpow.pop %v3151
    %v3153 = vsub.f32 %v3109, %v3149
    %v3154 = vmul.f32 %v3153, 1.442695
    %v3155 = vpow.pop %v3154
    %v3156 = vsub.f32 %v3121, %v3149
    %v3157 = vmul.f32 %v3156, 1.442695
    %v3158 = vpow.pop %v3157
    %v3159 = vsub.f32 %v3133, %v3149
    %v3160 = vmul.f32 %v3159, 1.442695
    %v3161 = vpow.pop %v3160
    %v3162 = vsub.f32 %v3145, %v3149
    %v3163 = vmul.f32 %v3162, 1.442695
    %v3164 = vpow.pop %v3163
    %v3165 = vadd.f32 %v3152, %v3155
    %v3166 = vadd.f32 %v3165, %v3158
    %v3167 = vadd.f32 %v3166, %v3161
    %v3168 = vadd.f32 %v3167, %v3164
    %v3169 = vmul.f32 %v3152, %v391
    %v3170 = vmul.f32 %v3152, %v395
    %v3171 = vmul.f32 %v3155, %v736
    %v3172 = vmul.f32 %v3155, %v740
    %v3173 = vmul.f32 %v3158, %v1081
    %v3174 = vmul.f32 %v3158, %v1085
    %v3175 = vmul.f32 %v3161, %v1426
    %v3176 = vmul.f32 %v3161, %v1430
    %v3177 = vmul.f32 %v3164, %v1771
    %v3178 = vmul.f32 %v3164, %v1775
    %v3179 = vadd.f32 %v3169, %v3171
    %v3180 = vadd.f32 %v3170, %v3172
    %v3181 = vadd.f32 %v3179, %v3173
    %v3182 = vadd.f32 %v3180, %v3174
    %v3183 = vadd.f32 %v3181, %v3175
    %v3184 = vadd.f32 %v3182, %v3176
    %v3185 = vadd.f32 %v3183, %v3177
    %v3186 = vadd.f32 %v3184, %v3178
    %v3187 = vrcp.pop %v3168
    %v3188 = vmul.f32 %v3168, %v3187
    %v3189 = vsub.f32 1.0, %v3188
    %v3190 = vmul.f32 %v3187, %v3189
    %v3191 = vadd.f32 %v3187, %v3190
    %vm3192 = vweird.f32 %v3168
    %vm3193 = vweird.f32 %v3187
    %vm3194 = vmor %vm3192, %vm3193
    %v3195 = vsel %vm3194, %v3187, %v3191
    %v3196 = vand.u32 2147483647, %v3168
    %vm3197 = vcmp.eq.f32.partialorder %v3196, 8.507059e+37
    %v3198 = vand.u32 %v3168, 2147483648
    %v3199 = vor.u32 1.1754944e-38, %v3198
    %v3200 = vsel %vm3197, %v3199, %v3195
    %v3201 = vmul.f32 1.0, %v3200
    %v3202 = vmul.f32 %v3185, %v3201
    %v3203 = vmul.f32 %v3186, %v3201
    %s3204 = scalar_lea.vmem [#allocation5], 64
    %3205 = vst.msk [vmem:[%s3204] sm:$0xff] %vm2814, %v3202
    %3206 = vst.msk [vmem:[%s3204 + $0x8] sm:$0xff] %vm2814, %v3203
    %v3207 = vmul.f32 %v2108, %v375
    %v3208 = vmul.f32 %v2112, %v379
    %v3209 = vsel %vm2814, %v3207, 0.0
    %v3210 = vsel %vm2814, %v3208, 0.0
    %v3211 = vadd.f32 %v3209, %v3210
    %v3212 = vrot.slane %v3211, 4
    %v3213 = vadd.f32 %v3211, %v3212
    %v3214 = vrot.slane %v3213, 2
    %v3215 = vadd.f32 %v3213, %v3214
    %v3216 = vrot.slane %v3215, 1
    %v3217 = vadd.f32 %v3215, %v3216
    %v3218 = vmul.f32 %v3217, 0.17677669
    %v3219 = vmul.f32 %v2108, %v720
    %v3220 = vmul.f32 %v2112, %v724
    %v3221 = vsel %vm2814, %v3219, 0.0
    %v3222 = vsel %vm2814, %v3220, 0.0
    %v3223 = vadd.f32 %v3221, %v3222
    %v3224 = vrot.slane %v3223, 4
    %v3225 = vadd.f32 %v3223, %v3224
    %v3226 = vrot.slane %v3225, 2
    %v3227 = vadd.f32 %v3225, %v3226
    %v3228 = vrot.slane %v3227, 1
    %v3229 = vadd.f32 %v3227, %v3228
    %v3230 = vmul.f32 %v3229, 0.17677669
    %v3231 = vmul.f32 %v2108, %v1065
    %v3232 = vmul.f32 %v2112, %v1069
    %v3233 = vsel %vm2814, %v3231, 0.0
    %v3234 = vsel %vm2814, %v3232, 0.0
    %v3235 = vadd.f32 %v3233, %v3234
    %v3236 = vrot.slane %v3235, 4
    %v3237 = vadd.f32 %v3235, %v3236
    %v3238 = vrot.slane %v3237, 2
    %v3239 = vadd.f32 %v3237, %v3238
    %v3240 = vrot.slane %v3239, 1
    %v3241 = vadd.f32 %v3239, %v3240
    %v3242 = vmul.f32 %v3241, 0.17677669
    %v3243 = vmul.f32 %v2108, %v1410
    %v3244 = vmul.f32 %v2112, %v1414
    %v3245 = vsel %vm2814, %v3243, 0.0
    %v3246 = vsel %vm2814, %v3244, 0.0
    %v3247 = vadd.f32 %v3245, %v3246
    %v3248 = vrot.slane %v3247, 4
    %v3249 = vadd.f32 %v3247, %v3248
    %v3250 = vrot.slane %v3249, 2
    %v3251 = vadd.f32 %v3249, %v3250
    %v3252 = vrot.slane %v3251, 1
    %v3253 = vadd.f32 %v3251, %v3252
    %v3254 = vmul.f32 %v3253, 0.17677669
    %v3255 = vmul.f32 %v2108, %v1755
    %v3256 = vmul.f32 %v2112, %v1759
    %v3257 = vsel %vm2814, %v3255, 0.0
    %v3258 = vsel %vm2814, %v3256, 0.0
    %v3259 = vadd.f32 %v3257, %v3258
    %v3260 = vrot.slane %v3259, 4
    %v3261 = vadd.f32 %v3259, %v3260
    %v3262 = vrot.slane %v3261, 2
    %v3263 = vadd.f32 %v3261, %v3262
    %v3264 = vrot.slane %v3263, 1
    %v3265 = vadd.f32 %v3263, %v3264
    %v3266 = vmul.f32 %v3265, 0.17677669
    %v3267 = vmul.f32 %v2108, %v2100
    %v3268 = vmul.f32 %v2112, %v2104
    %v3269 = vsel %vm2814, %v3267, 0.0
    %v3270 = vsel %vm2814, %v3268, 0.0
    %v3271 = vadd.f32 %v3269, %v3270
    %v3272 = vrot.slane %v3271, 4
    %v3273 = vadd.f32 %v3271, %v3272
    %v3274 = vrot.slane %v3273, 2
    %v3275 = vadd.f32 %v3273, %v3274
    %v3276 = vrot.slane %v3275, 1
    %v3277 = vadd.f32 %v3275, %v3276
    %v3278 = vmul.f32 %v3277, 0.17677669
    %v3279 = vmax.f32 %v3218, %v3230
    %v3280 = vmax.f32 %v3279, %v3242
    %v3281 = vmax.f32 %v3280, %v3254
    %v3282 = vmax.f32 %v3281, %v3266
    %v3283 = vmax.f32 %v3282, %v3278
    %v3284 = vsub.f32 %v3218, %v3283
    %v3285 = vmul.f32 %v3284, 1.442695
    %v3286 = vpow.pop %v3285
    %v3287 = vsub.f32 %v3230, %v3283
    %v3288 = vmul.f32 %v3287, 1.442695
    %v3289 = vpow.pop %v3288
    %v3290 = vsub.f32 %v3242, %v3283
    %v3291 = vmul.f32 %v3290, 1.442695
    %v3292 = vpow.pop %v3291
    %v3293 = vsub.f32 %v3254, %v3283
    %v3294 = vmul.f32 %v3293, 1.442695
    %v3295 = vpow.pop %v3294
    %v3296 = vsub.f32 %v3266, %v3283
    %v3297 = vmul.f32 %v3296, 1.442695
    %v3298 = vpow.pop %v3297
    %v3299 = vsub.f32 %v3278, %v3283
    %v3300 = vmul.f32 %v3299, 1.442695
    %v3301 = vpow.pop %v3300
    %v3302 = vadd.f32 %v3286, %v3289
    %v3303 = vadd.f32 %v3302, %v3292
    %v3304 = vadd.f32 %v3303, %v3295
    %v3305 = vadd.f32 %v3304, %v3298
    %v3306 = vadd.f32 %v3305, %v3301
    %v3307 = vmul.f32 %v3286, %v391
    %v3308 = vmul.f32 %v3286, %v395
    %v3309 = vmul.f32 %v3289, %v736
    %v3310 = vmul.f32 %v3289, %v740
    %v3311 = vmul.f32 %v3292, %v1081
    %v3312 = vmul.f32 %v3292, %v1085
    %v3313 = vmul.f32 %v3295, %v1426
    %v3314 = vmul.f32 %v3295, %v1430
    %v3315 = vmul.f32 %v3298, %v1771
    %v3316 = vmul.f32 %v3298, %v1775
    %v3317 = vmul.f32 %v3301, %v2116
    %v3318 = vmul.f32 %v3301, %v2120
    %v3319 = vadd.f32 %v3307, %v3309
    %v3320 = vadd.f32 %v3308, %v3310
    %v3321 = vadd.f32 %v3319, %v3311
    %v3322 = vadd.f32 %v3320, %v3312
    %v3323 = vadd.f32 %v3321, %v3313
    %v3324 = vadd.f32 %v3322, %v3314
    %v3325 = vadd.f32 %v3323, %v3315
    %v3326 = vadd.f32 %v3324, %v3316
    %v3327 = vadd.f32 %v3325, %v3317
    %v3328 = vadd.f32 %v3326, %v3318
    %v3329 = vrcp.pop %v3306
    %v3330 = vmul.f32 %v3306, %v3329
    %v3331 = vsub.f32 1.0, %v3330
    %v3332 = vmul.f32 %v3329, %v3331
    %v3333 = vadd.f32 %v3329, %v3332
    %vm3334 = vweird.f32 %v3306
    %vm3335 = vweird.f32 %v3329
    %vm3336 = vmor %vm3334, %vm3335
    %v3337 = vsel %vm3336, %v3329, %v3333
    %v3338 = vand.u32 2147483647, %v3306
    %vm3339 = vcmp.eq.f32.partialorder %v3338, 8.507059e+37
    %v3340 = vand.u32 %v3306, 2147483648
    %v3341 = vor.u32 1.1754944e-38, %v3340
    %v3342 = vsel %vm3339, %v3341, %v3337
    %v3343 = vmul.f32 1.0, %v3342
    %v3344 = vmul.f32 %v3327, %v3343
    %v3345 = vmul.f32 %v3328, %v3343
    %s3346 = scalar_lea.vmem [#allocation5], 80
    %3347 = vst.msk [vmem:[%s3346] sm:$0xff] %vm2814, %v3344
    %3348 = vst.msk [vmem:[%s3346 + $0x8] sm:$0xff] %vm2814, %v3345
    %v3349 = vmul.f32 %v2453, %v375
    %v3350 = vmul.f32 %v2457, %v379
    %v3351 = vsel %vm2814, %v3349, 0.0
    %v3352 = vsel %vm2814, %v3350, 0.0
    %v3353 = vadd.f32 %v3351, %v3352
    %v3354 = vrot.slane %v3353, 4
    %v3355 = vadd.f32 %v3353, %v3354
    %v3356 = vrot.slane %v3355, 2
    %v3357 = vadd.f32 %v3355, %v3356
    %v3358 = vrot.slane %v3357, 1
    %v3359 = vadd.f32 %v3357, %v3358
    %v3360 = vmul.f32 %v3359, 0.17677669
    %v3361 = vmul.f32 %v2453, %v720
    %v3362 = vmul.f32 %v2457, %v724
    %v3363 = vsel %vm2814, %v3361, 0.0
    %v3364 = vsel %vm2814, %v3362, 0.0
    %v3365 = vadd.f32 %v3363, %v3364
    %v3366 = vrot.slane %v3365, 4
    %v3367 = vadd.f32 %v3365, %v3366
    %v3368 = vrot.slane %v3367, 2
    %v3369 = vadd.f32 %v3367, %v3368
    %v3370 = vrot.slane %v3369, 1
    %v3371 = vadd.f32 %v3369, %v3370
    %v3372 = vmul.f32 %v3371, 0.17677669
    %v3373 = vmul.f32 %v2453, %v1065
    %v3374 = vmul.f32 %v2457, %v1069
    %v3375 = vsel %vm2814, %v3373, 0.0
    %v3376 = vsel %vm2814, %v3374, 0.0
    %v3377 = vadd.f32 %v3375, %v3376
    %v3378 = vrot.slane %v3377, 4
    %v3379 = vadd.f32 %v3377, %v3378
    %v3380 = vrot.slane %v3379, 2
    %v3381 = vadd.f32 %v3379, %v3380
    %v3382 = vrot.slane %v3381, 1
    %v3383 = vadd.f32 %v3381, %v3382
    %v3384 = vmul.f32 %v3383, 0.17677669
    %v3385 = vmul.f32 %v2453, %v1410
    %v3386 = vmul.f32 %v2457, %v1414
    %v3387 = vsel %vm2814, %v3385, 0.0
    %v3388 = vsel %vm2814, %v3386, 0.0
    %v3389 = vadd.f32 %v3387, %v3388
    %v3390 = vrot.slane %v3389, 4
    %v3391 = vadd.f32 %v3389, %v3390
    %v3392 = vrot.slane %v3391, 2
    %v3393 = vadd.f32 %v3391, %v3392
    %v3394 = vrot.slane %v3393, 1
    %v3395 = vadd.f32 %v3393, %v3394
    %v3396 = vmul.f32 %v3395, 0.17677669
    %v3397 = vmul.f32 %v2453, %v1755
    %v3398 = vmul.f32 %v2457, %v1759
    %v3399 = vsel %vm2814, %v3397, 0.0
    %v3400 = vsel %vm2814, %v3398, 0.0
    %v3401 = vadd.f32 %v3399, %v3400
    %v3402 = vrot.slane %v3401, 4
    %v3403 = vadd.f32 %v3401, %v3402
    %v3404 = vrot.slane %v3403, 2
    %v3405 = vadd.f32 %v3403, %v3404
    %v3406 = vrot.slane %v3405, 1
    %v3407 = vadd.f32 %v3405, %v3406
    %v3408 = vmul.f32 %v3407, 0.17677669
    %v3409 = vmul.f32 %v2453, %v2100
    %v3410 = vmul.f32 %v2457, %v2104
    %v3411 = vsel %vm2814, %v3409, 0.0
    %v3412 = vsel %vm2814, %v3410, 0.0
    %v3413 = vadd.f32 %v3411, %v3412
    %v3414 = vrot.slane %v3413, 4
    %v3415 = vadd.f32 %v3413, %v3414
    %v3416 = vrot.slane %v3415, 2
    %v3417 = vadd.f32 %v3415, %v3416
    %v3418 = vrot.slane %v3417, 1
    %v3419 = vadd.f32 %v3417, %v3418
    %v3420 = vmul.f32 %v3419, 0.17677669
    %v3421 = vmul.f32 %v2453, %v2445
    %v3422 = vmul.f32 %v2457, %v2449
    %v3423 = vsel %vm2814, %v3421, 0.0
    %v3424 = vsel %vm2814, %v3422, 0.0
    %v3425 = vadd.f32 %v3423, %v3424
    %v3426 = vrot.slane %v3425, 4
    %v3427 = vadd.f32 %v3425, %v3426
    %v3428 = vrot.slane %v3427, 2
    %v3429 = vadd.f32 %v3427, %v3428
    %v3430 = vrot.slane %v3429, 1
    %v3431 = vadd.f32 %v3429, %v3430
    %v3432 = vmul.f32 %v3431, 0.17677669
    %v3433 = vmax.f32 %v3360, %v3372
    %v3434 = vmax.f32 %v3433, %v3384
    %v3435 = vmax.f32 %v3434, %v3396
    %v3436 = vmax.f32 %v3435, %v3408
    %v3437 = vmax.f32 %v3436, %v3420
    %v3438 = vmax.f32 %v3437, %v3432
    %v3439 = vsub.f32 %v3360, %v3438
    %v3440 = vmul.f32 %v3439, 1.442695
    %v3441 = vpow.pop %v3440
    %v3442 = vsub.f32 %v3372, %v3438
    %v3443 = vmul.f32 %v3442, 1.442695
    %v3444 = vpow.pop %v3443
    %v3445 = vsub.f32 %v3384, %v3438
    %v3446 = vmul.f32 %v3445, 1.442695
    %v3447 = vpow.pop %v3446
    %v3448 = vsub.f32 %v3396, %v3438
    %v3449 = vmul.f32 %v3448, 1.442695
    %v3450 = vpow.pop %v3449
    %v3451 = vsub.f32 %v3408, %v3438
    %v3452 = vmul.f32 %v3451, 1.442695
    %v3453 = vpow.pop %v3452
    %v3454 = vsub.f32 %v3420, %v3438
    %v3455 = vmul.f32 %v3454, 1.442695
    %v3456 = vpow.pop %v3455
    %v3457 = vsub.f32 %v3432, %v3438
    %v3458 = vmul.f32 %v3457, 1.442695
    %v3459 = vpow.pop %v3458
    %v3460 = vadd.f32 %v3441, %v3444
    %v3461 = vadd.f32 %v3460, %v3447
    %v3462 = vadd.f32 %v3461, %v3450
    %v3463 = vadd.f32 %v3462, %v3453
    %v3464 = vadd.f32 %v3463, %v3456
    %v3465 = vadd.f32 %v3464, %v3459
    %v3466 = vmul.f32 %v3441, %v391
    %v3467 = vmul.f32 %v3441, %v395
    %v3468 = vmul.f32 %v3444, %v736
    %v3469 = vmul.f32 %v3444, %v740
    %v3470 = vmul.f32 %v3447, %v1081
    %v3471 = vmul.f32 %v3447, %v1085
    %v3472 = vmul.f32 %v3450, %v1426
    %v3473 = vmul.f32 %v3450, %v1430
    %v3474 = vmul.f32 %v3453, %v1771
    %v3475 = vmul.f32 %v3453, %v1775
    %v3476 = vmul.f32 %v3456, %v2116
    %v3477 = vmul.f32 %v3456, %v2120
    %v3478 = vmul.f32 %v3459, %v2461
    %v3479 = vmul.f32 %v3459, %v2465
    %v3480 = vadd.f32 %v3466, %v3468
    %v3481 = vadd.f32 %v3467, %v3469
    %v3482 = vadd.f32 %v3480, %v3470
    %v3483 = vadd.f32 %v3481, %v3471
    %v3484 = vadd.f32 %v3482, %v3472
    %v3485 = vadd.f32 %v3483, %v3473
    %v3486 = vadd.f32 %v3484, %v3474
    %v3487 = vadd.f32 %v3485, %v3475
    %v3488 = vadd.f32 %v3486, %v3476
    %v3489 = vadd.f32 %v3487, %v3477
    %v3490 = vadd.f32 %v3488, %v3478
    %v3491 = vadd.f32 %v3489, %v3479
    %v3492 = vrcp.pop %v3465
    %v3493 = vmul.f32 %v3465, %v3492
    %v3494 = vsub.f32 1.0, %v3493
    %v3495 = vmul.f32 %v3492, %v3494
    %v3496 = vadd.f32 %v3492, %v3495
    %vm3497 = vweird.f32 %v3465
    %vm3498 = vweird.f32 %v3492
    %vm3499 = vmor %vm3497, %vm3498
    %v3500 = vsel %vm3499, %v3492, %v3496
    %v3501 = vand.u32 2147483647, %v3465
    %vm3502 = vcmp.eq.f32.partialorder %v3501, 8.507059e+37
    %v3503 = vand.u32 %v3465, 2147483648
    %v3504 = vor.u32 1.1754944e-38, %v3503
    %v3505 = vsel %vm3502, %v3504, %v3500
    %v3506 = vmul.f32 1.0, %v3505
    %v3507 = vmul.f32 %v3490, %v3506
    %v3508 = vmul.f32 %v3491, %v3506
    %s3509 = scalar_lea.vmem [#allocation5], 96
    %3510 = vst.msk [vmem:[%s3509] sm:$0xff] %vm2814, %v3507
    %3511 = vst.msk [vmem:[%s3509 + $0x8] sm:$0xff] %vm2814, %v3508
    %v3512 = vmul.f32 %v2798, %v375
    %v3513 = vmul.f32 %v2802, %v379
    %v3514 = vsel %vm2814, %v3512, 0.0
    %v3515 = vsel %vm2814, %v3513, 0.0
    %v3516 = vadd.f32 %v3514, %v3515
    %v3517 = vrot.slane %v3516, 4
    %v3518 = vadd.f32 %v3516, %v3517
    %v3519 = vrot.slane %v3518, 2
    %v3520 = vadd.f32 %v3518, %v3519
    %v3521 = vrot.slane %v3520, 1
    %v3522 = vadd.f32 %v3520, %v3521
    %v3523 = vmul.f32 %v3522, 0.17677669
    %v3524 = vmul.f32 %v2798, %v720
    %v3525 = vmul.f32 %v2802, %v724
    %v3526 = vsel %vm2814, %v3524, 0.0
    %v3527 = vsel %vm2814, %v3525, 0.0
    %v3528 = vadd.f32 %v3526, %v3527
    %v3529 = vrot.slane %v3528, 4
    %v3530 = vadd.f32 %v3528, %v3529
    %v3531 = vrot.slane %v3530, 2
    %v3532 = vadd.f32 %v3530, %v3531
    %v3533 = vrot.slane %v3532, 1
    %v3534 = vadd.f32 %v3532, %v3533
    %v3535 = vmul.f32 %v3534, 0.17677669
    %v3536 = vmul.f32 %v2798, %v1065
    %v3537 = vmul.f32 %v2802, %v1069
    %v3538 = vsel %vm2814, %v3536, 0.0
    %v3539 = vsel %vm2814, %v3537, 0.0
    %v3540 = vadd.f32 %v3538, %v3539
    %v3541 = vrot.slane %v3540, 4
    %v3542 = vadd.f32 %v3540, %v3541
    %v3543 = vrot.slane %v3542, 2
    %v3544 = vadd.f32 %v3542, %v3543
    %v3545 = vrot.slane %v3544, 1
    %v3546 = vadd.f32 %v3544, %v3545
    %v3547 = vmul.f32 %v3546, 0.17677669
    %v3548 = vmul.f32 %v2798, %v1410
    %v3549 = vmul.f32 %v2802, %v1414
    %v3550 = vsel %vm2814, %v3548, 0.0
    %v3551 = vsel %vm2814, %v3549, 0.0
    %v3552 = vadd.f32 %v3550, %v3551
    %v3553 = vrot.slane %v3552, 4
    %v3554 = vadd.f32 %v3552, %v3553
    %v3555 = vrot.slane %v3554, 2
    %v3556 = vadd.f32 %v3554, %v3555
    %v3557 = vrot.slane %v3556, 1
    %v3558 = vadd.f32 %v3556, %v3557
    %v3559 = vmul.f32 %v3558, 0.17677669
    %v3560 = vmul.f32 %v2798, %v1755
    %v3561 = vmul.f32 %v2802, %v1759
    %v3562 = vsel %vm2814, %v3560, 0.0
    %v3563 = vsel %vm2814, %v3561, 0.0
    %v3564 = vadd.f32 %v3562, %v3563
    %v3565 = vrot.slane %v3564, 4
    %v3566 = vadd.f32 %v3564, %v3565
    %v3567 = vrot.slane %v3566, 2
    %v3568 = vadd.f32 %v3566, %v3567
    %v3569 = vrot.slane %v3568, 1
    %v3570 = vadd.f32 %v3568, %v3569
    %v3571 = vmul.f32 %v3570, 0.17677669
    %v3572 = vmul.f32 %v2798, %v2100
    %v3573 = vmul.f32 %v2802, %v2104
    %v3574 = vsel %vm2814, %v3572, 0.0
    %v3575 = vsel %vm2814, %v3573, 0.0
    %v3576 = vadd.f32 %v3574, %v3575
    %v3577 = vrot.slane %v3576, 4
    %v3578 = vadd.f32 %v3576, %v3577
    %v3579 = vrot.slane %v3578, 2
    %v3580 = vadd.f32 %v3578, %v3579
    %v3581 = vrot.slane %v3580, 1
    %v3582 = vadd.f32 %v3580, %v3581
    %v3583 = vmul.f32 %v3582, 0.17677669
    %v3584 = vmul.f32 %v2798, %v2445
    %v3585 = vmul.f32 %v2802, %v2449
    %v3586 = vsel %vm2814, %v3584, 0.0
    %v3587 = vsel %vm2814, %v3585, 0.0
    %v3588 = vadd.f32 %v3586, %v3587
    %v3589 = vrot.slane %v3588, 4
    %v3590 = vadd.f32 %v3588, %v3589
    %v3591 = vrot.slane %v3590, 2
    %v3592 = vadd.f32 %v3590, %v3591
    %v3593 = vrot.slane %v3592, 1
    %v3594 = vadd.f32 %v3592, %v3593
    %v3595 = vmul.f32 %v3594, 0.17677669
    %v3596 = vmul.f32 %v2798, %v2790
    %v3597 = vmul.f32 %v2802, %v2794
    %v3598 = vsel %vm2814, %v3596, 0.0
    %v3599 = vsel %vm2814, %v3597, 0.0
    %v3600 = vadd.f32 %v3598, %v3599
    %v3601 = vrot.slane %v3600, 4
    %v3602 = vadd.f32 %v3600, %v3601
    %v3603 = vrot.slane %v3602, 2
    %v3604 = vadd.f32 %v3602, %v3603
    %v3605 = vrot.slane %v3604, 1
    %v3606 = vadd.f32 %v3604, %v3605
    %v3607 = vmul.f32 %v3606, 0.17677669
    %v3608 = vmax.f32 %v3523, %v3535
    %v3609 = vmax.f32 %v3608, %v3547
    %v3610 = vmax.f32 %v3609, %v3559
    %v3611 = vmax.f32 %v3610, %v3571
    %v3612 = vmax.f32 %v3611, %v3583
    %v3613 = vmax.f32 %v3612, %v3595
    %v3614 = vmax.f32 %v3613, %v3607
    %v3615 = vsub.f32 %v3523, %v3614
    %v3616 = vmul.f32 %v3615, 1.442695
    %v3617 = vpow.pop %v3616
    %v3618 = vsub.f32 %v3535, %v3614
    %v3619 = vmul.f32 %v3618, 1.442695
    %v3620 = vpow.pop %v3619
    %v3621 = vsub.f32 %v3547, %v3614
    %v3622 = vmul.f32 %v3621, 1.442695
    %v3623 = vpow.pop %v3622
    %v3624 = vsub.f32 %v3559, %v3614
    %v3625 = vmul.f32 %v3624, 1.442695
    %v3626 = vpow.pop %v3625
    %v3627 = vsub.f32 %v3571, %v3614
    %v3628 = vmul.f32 %v3627, 1.442695
    %v3629 = vpow.pop %v3628
    %v3630 = vsub.f32 %v3583, %v3614
    %v3631 = vmul.f32 %v3630, 1.442695
    %v3632 = vpow.pop %v3631
    %v3633 = vsub.f32 %v3595, %v3614
    %v3634 = vmul.f32 %v3633, 1.442695
    %v3635 = vpow.pop %v3634
    %v3636 = vsub.f32 %v3607, %v3614
    %v3637 = vmul.f32 %v3636, 1.442695
    %v3638 = vpow.pop %v3637
    %v3639 = vadd.f32 %v3617, %v3620
    %v3640 = vadd.f32 %v3639, %v3623
    %v3641 = vadd.f32 %v3640, %v3626
    %v3642 = vadd.f32 %v3641, %v3629
    %v3643 = vadd.f32 %v3642, %v3632
    %v3644 = vadd.f32 %v3643, %v3635
    %v3645 = vadd.f32 %v3644, %v3638
    %v3646 = vmul.f32 %v3617, %v391
    %v3647 = vmul.f32 %v3617, %v395
    %v3648 = vmul.f32 %v3620, %v736
    %v3649 = vmul.f32 %v3620, %v740
    %v3650 = vmul.f32 %v3623, %v1081
    %v3651 = vmul.f32 %v3623, %v1085
    %v3652 = vmul.f32 %v3626, %v1426
    %v3653 = vmul.f32 %v3626, %v1430
    %v3654 = vmul.f32 %v3629, %v1771
    %v3655 = vmul.f32 %v3629, %v1775
    %v3656 = vmul.f32 %v3632, %v2116
    %v3657 = vmul.f32 %v3632, %v2120
    %v3658 = vmul.f32 %v3635, %v2461
    %v3659 = vmul.f32 %v3635, %v2465
    %v3660 = vmul.f32 %v3638, %v2806
    %v3661 = vmul.f32 %v3638, %v2810
    %v3662 = vadd.f32 %v3646, %v3648
    %v3663 = vadd.f32 %v3647, %v3649
    %v3664 = vadd.f32 %v3662, %v3650
    %v3665 = vadd.f32 %v3663, %v3651
    %v3666 = vadd.f32 %v3664, %v3652
    %v3667 = vadd.f32 %v3665, %v3653
    %v3668 = vadd.f32 %v3666, %v3654
    %v3669 = vadd.f32 %v3667, %v3655
    %v3670 = vadd.f32 %v3668, %v3656
    %v3671 = vadd.f32 %v3669, %v3657
    %v3672 = vadd.f32 %v3670, %v3658
    %v3673 = vadd.f32 %v3671, %v3659
    %v3674 = vadd.f32 %v3672, %v3660
    %v3675 = vadd.f32 %v3673, %v3661
    %v3676 = vrcp.pop %v3645
    %v3677 = vmul.f32 %v3645, %v3676
    %v3678 = vsub.f32 1.0, %v3677
    %v3679 = vmul.f32 %v3676, %v3678
    %v3680 = vadd.f32 %v3676, %v3679
    %vm3681 = vweird.f32 %v3645
    %vm3682 = vweird.f32 %v3676
    %vm3683 = vmor %vm3681, %vm3682
    %v3684 = vsel %vm3683, %v3676, %v3680
    %v3685 = vand.u32 2147483647, %v3645
    %vm3686 = vcmp.eq.f32.partialorder %v3685, 8.507059e+37
    %v3687 = vand.u32 %v3645, 2147483648
    %v3688 = vor.u32 1.1754944e-38, %v3687
    %v3689 = vsel %vm3686, %v3688, %v3684
    %v3690 = vmul.f32 1.0, %v3689
    %v3691 = vmul.f32 %v3674, %v3690
    %v3692 = vmul.f32 %v3675, %v3690
    %s3693 = scalar_lea.vmem [#allocation5], 112
    %3694 = vst.msk [vmem:[%s3693] sm:$0xff] %vm2814, %v3691
    %3695 = vst.msk [vmem:[%s3693 + $0x8] sm:$0xff] %vm2814, %v3692
    // Predicated region
    $region14: #{tpu_custom_call.1} parent=1 // pred_check
      _
    $region15: #{tpu_custom_call.1} parent=1 // pred_check_branch
      %3697 = sbr.rel (0) target = $region17
    $region16: #{tpu_custom_call.1} parent=1 // pred_region
      %3699 = vsyncadd [#allocation4], 0
      %s3700 = sshll.u32 [#allocation5], 4
      %s3701 = int_to_ptr.vmem [resolvable:$true] %s3700
      %s3702 = sshll.u32 %s2, 4
      %s3703 = int_to_ptr.hbm [resolvable:$true] %s3702
      %3708 = dma.vmem_to_hbm [thread:$0]  %s3701, 2048, %s3703, [#allocation4], 128, 128, 8
    $region17: #{tpu_custom_call.1} parent=1 // pred_fallthru
      _
    // Predicated region
    $region18: #{tpu_custom_call.1} parent=1 // pred_check
      _
    $region19: #{tpu_custom_call.1} parent=1 // pred_check_branch
      %3710 = sbr.rel (0) target = $region21
    $region20: #{tpu_custom_call.1} parent=1 // pred_region
      %3712 = dma.done [#allocation4], 2048
    $region21: #{tpu_custom_call.1} parent=1 // pred_fallthru
      _
    %3713 = vsyncpa [#allocation3], 1
    %3714 = vsyncpa [#allocation4], 1

</llo_original>
